<compile_context>
chip_gen: v7x
topology: tpu7x:2x2x1
jax: 0.10.0
libtpu: 0.0.40
codegen_flags: <defaults>
</compile_context>

<pallas_src>
import functools

import jax
import jax.numpy as jnp
from jax.experimental import pallas as pl
from jax.experimental.pallas import tpu as pltpu

BN_EPS = 1e-5

_WEIGHT_ORDER = (
    "feat_wT", "feat_b",
    "d_w1fT", "d_w1nT", "d_b1", "d_w2a", "d_sa", "d_ta", "d_w2b", "d_tb",
    "c_woT", "c_wnT", "c_b1", "c_w2T", "c_b2",
    "u_w1T", "u_b1", "u_w2a", "u_sa", "u_ta", "u_w2b", "u_tb",
    "t_wT", "t_b",
)


# ----------------------------------------------------------------------------
# Fused DFN kernel
# ----------------------------------------------------------------------------
def _make_dfn_kernel(H, W, n_cert):
    HW = H * W

    def kernel(feats_ref, new_ref, old_ref, masks_ref,
               fwT, fb,
               dw1f, dw1n, db1, dw2a, dsa, dta, dw2b, dtb,
               cwo, cwn, cb1, cw2, cb2,
               uw1, ub1, uw2a, usa, uta, uw2b, utb,
               twT, tb,
               coord_ref, cert_ref, newold_ref):
        f32, bf16 = jnp.float32, jnp.bfloat16
        masks = masks_ref[...]                                   # (9, HW) f32, 0/1

        def mm(wT_ref, x):                                       # bf16 MXU matmul, f32 accum
            return jnp.dot(wT_ref[...], x.astype(bf16), preferred_element_type=f32)

        def conv3x3(x, w9T_ref):
            # x: (Cin, HW) f32 -> raw (bias-free) conv output (Cout, HW) f32
            pieces = []
            for k in range(9):
                dy, dx = k // 3 - 1, k % 3 - 1
                if dy == 0 and dx == 0:
                    p = x
                else:
                    shift = (-(dy * W + dx)) % HW                # roll so out[p] = x[p + dy*W + dx]
                    p = pltpu.roll(x, shift, axis=1) * masks[k:k + 1, :]
                pieces.append(p.astype(bf16))
            patches = jnp.concatenate(pieces, axis=0)            # (9*Cin, HW) bf16
            return jnp.dot(w9T_ref[...], patches, preferred_element_type=f32)

        def rrb(x1, w2a, sa, ta, w2b, tbv):
            # x1 = output of the RRB 1x1 conv, (Ci, HW) f32
            y = jnp.maximum(conv3x3(x1, w2a) * sa[...] + ta[...], 0.0)   # conv + folded BN + ReLU
            z = conv3x3(y, w2b) + tbv[...]
            return jnp.maximum(x1 + z, 0.0)                              # residual + ReLU

        feats = feats_ref[0].astype(f32)                         # (Cf, HW)
        new = new_ref[0].astype(f32)                             # (Cn, HW)
        old = old_ref[0].astype(f32)                             # (Ci, HW)

        # feat_input_modules[key]: 1x1 conv
        fp = mm(fwT, feats) + fb[...]                            # (Cp, HW)

        # rrb_d: conv1x1 on cat([feats_proj, new]) via split weights
        x1 = mm(dw1f, fp) + mm(dw1n, new) + db1[...]             # (Ci, HW)
        nd = rrb(x1, dw2a, dsa, dta, dw2b, dtb)

        # CAB: cat([old, new]) -> GAP -> 1x1 ReLU -> 1x1 sigmoid -> gate*new + old
        pool_old = jnp.mean(old, axis=1, keepdims=True)          # (Ci, 1)
        pool_new = jnp.mean(nd, axis=1, keepdims=True)           # (Ci, 1)
        hid = jnp.maximum(
            jnp.dot(cwo[...], pool_old, preferred_element_type=f32)
            + jnp.dot(cwn[...], pool_new, preferred_element_type=f32)
            + cb1[...], 0.0)
        gate = jax.nn.sigmoid(
            jnp.dot(cw2[...], hid, preferred_element_type=f32) + cb2[...])
        fused = old + gate * nd                                  # (Ci, HW)

        # rrb_u
        x1u = mm(uw1, fused) + ub1[...]
        new_old = rrb(x1u, uw2a, usa, uta, uw2b, utb)            # (Ci, HW)

        # terminal 1x1 conv
        preds = mm(twT, new_old) + tb[...]                       # (term_out, HW)

        newold_ref[0] = new_old.astype(newold_ref.dtype)
        cert_ref[0] = preds[:n_cert].astype(cert_ref.dtype)
        coord_ref[0] = preds[n_cert:].astype(coord_ref.dtype)

    return kernel


def _tap_masks(H, W):
    """(9, H*W) 0/1 masks marking in-image source pixels for each 3x3 tap (dy,dx)."""
    idx = jnp.arange(H * W, dtype=jnp.int32)
    i = idx // W
    j = idx % W
    rows = []
    for dy in (-1, 0, 1):
        for dx in (-1, 0, 1):
            ok = (i + dy >= 0) & (i + dy < H) & (j + dx >= 0) & (j + dx < W)
            rows.append(ok)
    return jnp.stack(rows, axis=0).astype(jnp.float32)


@functools.partial(jax.jit, static_argnames=("key",))
def dfn_forward(params, new_stuff, feats, old_stuff, key):
    """Inputs in PyTorch NCHW; returns (pred_coord, pred_certainty, new_old_stuff) in NCHW."""
    p = params[str(key)]
    B, Cn, H, W = new_stuff.shape
    Cf = feats.shape[1]
    Ci = old_stuff.shape[1]
    HW = H * W
    term_out = p["t_b"].shape[0]
    n_cert = term_out - 2

    feats2 = feats.reshape(B, Cf, HW)
    new2 = new_stuff.reshape(B, Cn, HW)
    old2 = old_stuff.reshape(B, Ci, HW)
    masks = _tap_masks(H, W)
    weights = [p[name] for name in _WEIGHT_ORDER]

    def act_spec(c):
        return pl.BlockSpec((1, c, HW), lambda b: (b, 0, 0))

    def const_spec(arr):
        nd = arr.ndim
        return pl.BlockSpec(arr.shape, lambda b: (0,) * nd)

    in_specs = ([act_spec(Cf), act_spec(Cn), act_spec(Ci), const_spec(masks)]
                + [const_spec(w) for w in weights])
    out_specs = (pl.BlockSpec((1, 2, HW), lambda b: (b, 0, 0)),
                 pl.BlockSpec((1, n_cert, HW), lambda b: (b, 0, 0)),
                 pl.BlockSpec((1, Ci, HW), lambda b: (b, 0, 0)))
    out_shape = (jax.ShapeDtypeStruct((B, 2, HW), jnp.float32),
                 jax.ShapeDtypeStruct((B, n_cert, HW), jnp.float32),
                 jax.ShapeDtypeStruct((B, Ci, HW), jnp.float32))

    coord, cert, new_old = pl.pallas_call(
        _make_dfn_kernel(H, W, n_cert),
        grid=(B,),
        in_specs=in_specs,
        out_specs=out_specs,
        out_shape=out_shape,
        compiler_params=pltpu.CompilerParams(
            dimension_semantics=("parallel",),
            vmem_limit_bytes=32 * 1024 * 1024),
    )(feats2, new2, old2, masks, *weights)

    return (coord.reshape(B, 2, H, W),
            cert.reshape(B, n_cert, H, W),
            new_old.reshape(B, Ci, H, W))


# ----------------------------------------------------------------------------
# Parameter init (torch-like layout, f32) + packing into kernel layout
# ----------------------------------------------------------------------------
def _init_conv(key, cin, cout, k=1, scale=0.05):
    kw, kb = jax.random.split(key)
    shape = (cin, cout) if k == 1 else (k, k, cin, cout)          # 1x1: (Cin,Cout); 3x3: HWIO
    return (scale * jax.random.normal(kw, shape, jnp.float32),
            scale * jax.random.normal(kb, (cout,), jnp.float32))


def _init_bn(key, c):
    kg, kb, km, kv = jax.random.split(key, 4)
    return dict(gamma=1.0 + 0.1 * jax.random.normal(kg, (c,), jnp.float32),
                beta=0.1 * jax.random.normal(kb, (c,), jnp.float32),
                mean=0.1 * jax.random.normal(km, (c,), jnp.float32),
                var=1.0 + 0.1 * jax.random.uniform(kv, (c,), jnp.float32))


def _init_rrb(key, cin, cout):
    k1, k2, k3, k4 = jax.random.split(key, 4)
    w1, b1 = _init_conv(k1, cin, cout, 1)
    w2a, b2a = _init_conv(k2, cout, cout, 3)
    w2b, b2b = _init_conv(k3, cout, cout, 3)
    return dict(w1=w1, b1=b1, w2a=w2a, b2a=b2a, bn=_init_bn(k4, cout), w2b=w2b, b2b=b2b)


def init_raw_params(key, feat_dim, new_dim, feat_proj_dim, internal_dim, term_out, scale_key):
    ks = jax.random.split(key, 6)
    feat_w, feat_b = _init_conv(ks[0], feat_dim, feat_proj_dim, 1)
    rrb_d = _init_rrb(ks[1], feat_proj_dim + new_dim, internal_dim)
    wc1, bc1 = _init_conv(ks[2], 2 * internal_dim, internal_dim, 1)
    wc2, bc2 = _init_conv(ks[3], internal_dim, internal_dim, 1)
    rrb_u = _init_rrb(ks[4], internal_dim, internal_dim)
    term_w, term_b = _init_conv(ks[5], internal_dim, term_out, 1)
    return {str(scale_key): dict(feat_w=feat_w, feat_b=feat_b, rrb_d=rrb_d,
                                 cab=dict(wc1=wc1, bc1=bc1, wc2=wc2, bc2=bc2),
                                 rrb_u=rrb_u, term_w=term_w, term_b=term_b)}


def pack_params(raw):
    """Transpose to channel-major, fold eval-mode BN (arbitrary running stats), cast MXU
    weights to bf16, keep per-channel affine/bias vectors in f32 as (C, 1) columns."""
    bf16, f32 = jnp.bfloat16, jnp.float32

    def col(v):
        return v.reshape(-1, 1).astype(f32)

    def w3(w):  # (3,3,Cin,Cout) HWIO -> (Cout, 9*Cin) matching tap-major im2col rows
        return jnp.transpose(w, (3, 0, 1, 2)).reshape(w.shape[3], -1).astype(bf16)

    def fold(rrb):
        s = rrb["bn"]["gamma"] / jnp.sqrt(rrb["bn"]["var"] + BN_EPS)
        shift = rrb["bn"]["beta"] + (rrb["b2a"] - rrb["bn"]["mean"]) * s
        return col(s), col(shift)

    packed = {}
    for key, p in raw.items():
        cp = p["feat_w"].shape[1]
        d, u, c = p["rrb_d"], p["rrb_u"], p["cab"]
        ci = d["w1"].shape[1]
        d_sa, d_ta = fold(d)
        u_sa, u_ta = fold(u)
        packed[key] = dict(
            feat_wT=p["feat_w"].T.astype(bf16), feat_b=col(p["feat_b"]),
            d_w1fT=d["w1"][:cp].T.astype(bf16), d_w1nT=d["w1"][cp:].T.astype(bf16),
            d_b1=col(d["b1"]), d_w2a=w3(d["w2a"]), d_sa=d_sa, d_ta=d_ta,
            d_w2b=w3(d["w2b"]), d_tb=col(d["b2b"]),
            c_woT=c["wc1"][:ci].T.astype(f32), c_wnT=c["wc1"][ci:].T.astype(f32),
            c_b1=col(c["bc1"]), c_w2T=c["wc2"].T.astype(f32), c_b2=col(c["bc2"]),
            u_w1T=u["w1"].T.astype(bf16), u_b1=col(u["b1"]),
            u_w2a=w3(u["w2a"]), u_sa=u_sa, u_ta=u_ta,
            u_w2b=w3(u["w2b"]), u_tb=col(u["b2b"]),
            t_wT=p["term_w"].T.astype(bf16), t_b=col(p["term_b"]),
        )
    return packed


# ----------------------------------------------------------------------------
# Pure-JAX f32 reference (mirrors the PyTorch module) for correctness checking
# ----------------------------------------------------------------------------
def _conv1x1_ref(x, w, b):
    return jnp.einsum("io,bihw->bohw", w, x) + b[None, :, None, None]


def _conv3x3_ref(x, w, b):
    y = jax.lax.conv_general_dilated(x, w, (1, 1), ((1, 1), (1, 1)),
                                     dimension_numbers=("NCHW", "HWIO", "NCHW"))
    return y + b[None, :, None, None]


def _rrb_ref(x, p):
    x1 = _conv1x1_ref(x, p["w1"], p["b1"])
    r = _conv3x3_ref(x1, p["w2a"], p["b2a"])
    bn = p["bn"]
    s = bn["gamma"] / jnp.sqrt(bn["var"] + BN_EPS)
    r = (r - bn["mean"][None, :, None, None]) * s[None, :, None, None] + bn["beta"][None, :, None, None]
    r = jax.nn.relu(r)
    r = _conv3x3_ref(r, p["w2b"], p["b2b"])
    return jax.nn.relu(x1 + r)


def _cab_ref(old, new, p):
    x = jnp.concatenate([old, new], axis=1)
    g = jnp.mean(x, axis=(2, 3), keepdims=True)
    g = jax.nn.relu(_conv1x1_ref(g, p["wc1"], p["bc1"]))
    g = jax.nn.sigmoid(_conv1x1_ref(g, p["wc2"], p["bc2"]))
    return g * new + old


def dfn_forward_ref(raw, new_stuff, feats, old_stuff, key):
    p = raw[str(key)]
    f = _conv1x1_ref(feats, p["feat_w"], p["feat_b"])
    x = jnp.concatenate([f, new_stuff], axis=1)
    x = _rrb_ref(x, p["rrb_d"])
    x = _cab_ref(old_stuff, x, p["cab"])
    new_old = _rrb_ref(x, p["rrb_u"])
    preds = _conv1x1_ref(new_old, p["term_w"], p["term_b"])
    return preds[:, -2:], preds[:, :-2], new_old


# ----------------------------------------------------------------------------
if __name__ == "__main__":
    B, H, W = 2, 16, 16
    feat_dim, new_dim = 8, 4
    feat_proj_dim, internal_dim = 16, 32
    term_out = 3            # 1 certainty channel + 2 coord channels
    scale_key = 1

    root = jax.random.PRNGKey(0)
    k_par, k_new, k_feat, k_old = jax.random.split(root, 4)
    raw = init_raw_params(k_par, feat_dim, new_dim, feat_proj_dim,
                          internal_dim, term_out, scale_key)
    params = pack_params(raw)

    new_stuff = jax.random.normal(k_new, (B, new_dim, H, W), jnp.float32)
    feats = jax.random.normal(k_feat, (B, feat_dim, H, W), jnp.float32)
    old_stuff = jax.random.normal(k_old, (B, internal_dim, H, W), jnp.float32)

    pred_coord, pred_certainty, new_old_stuff = dfn_forward(
        params, new_stuff, feats, old_stuff, key=scale_key)
    jax.block_until_ready((pred_coord, pred_certainty, new_old_stuff))

    assert pred_coord.shape == (B, 2, H, W)
    assert pred_certainty.shape == (B, term_out - 2, H, W)
    assert new_old_stuff.shape == (B, internal_dim, H, W)

    # Correctness vs pure-JAX f32 reference (kernel uses bf16 MXU operands -> loose tolerance).
    coord_r, cert_r, new_old_r = dfn_forward_ref(raw, new_stuff, feats, old_stuff, key=scale_key)
    for got, ref in ((pred_coord, coord_r), (pred_certainty, cert_r), (new_old_stuff, new_old_r)):
        assert jnp.all(jnp.isfinite(got))
        err = float(jnp.max(jnp.abs(got - ref)))
        tol = 0.1 * float(jnp.max(jnp.abs(ref))) + 1e-3
        assert err <= tol, (err, tol)

    print("KERNEL_OK")
</pallas_src>

<mosaic_0001>
module attributes {stable_mosaic.version = 11 : i64} {
  func.func @kernel(%arg0: i32, %arg1: memref<1x8x256xf32, #tpu.memory_space<vmem>>, %arg2: memref<1x4x256xf32, #tpu.memory_space<vmem>>, %arg3: memref<1x32x256xf32, #tpu.memory_space<vmem>>, %arg4: memref<9x256xf32, #tpu.memory_space<vmem>>, %arg5: memref<16x8xbf16, #tpu.memory_space<vmem>>, %arg6: memref<16x1xf32, #tpu.memory_space<vmem>>, %arg7: memref<32x16xbf16, #tpu.memory_space<vmem>>, %arg8: memref<32x4xbf16, #tpu.memory_space<vmem>>, %arg9: memref<32x1xf32, #tpu.memory_space<vmem>>, %arg10: memref<32x288xbf16, #tpu.memory_space<vmem>>, %arg11: memref<32x1xf32, #tpu.memory_space<vmem>>, %arg12: memref<32x1xf32, #tpu.memory_space<vmem>>, %arg13: memref<32x288xbf16, #tpu.memory_space<vmem>>, %arg14: memref<32x1xf32, #tpu.memory_space<vmem>>, %arg15: memref<32x32xf32, #tpu.memory_space<vmem>>, %arg16: memref<32x32xf32, #tpu.memory_space<vmem>>, %arg17: memref<32x1xf32, #tpu.memory_space<vmem>>, %arg18: memref<32x32xf32, #tpu.memory_space<vmem>>, %arg19: memref<32x1xf32, #tpu.memory_space<vmem>>, %arg20: memref<32x32xbf16, #tpu.memory_space<vmem>>, %arg21: memref<32x1xf32, #tpu.memory_space<vmem>>, %arg22: memref<32x288xbf16, #tpu.memory_space<vmem>>, %arg23: memref<32x1xf32, #tpu.memory_space<vmem>>, %arg24: memref<32x1xf32, #tpu.memory_space<vmem>>, %arg25: memref<32x288xbf16, #tpu.memory_space<vmem>>, %arg26: memref<32x1xf32, #tpu.memory_space<vmem>>, %arg27: memref<3x32xbf16, #tpu.memory_space<vmem>>, %arg28: memref<3x1xf32, #tpu.memory_space<vmem>>, %arg29: memref<1x2x256xf32, #tpu.memory_space<vmem>>, %arg30: memref<1x1x256xf32, #tpu.memory_space<vmem>>, %arg31: memref<1x32x256xf32, #tpu.memory_space<vmem>>) attributes {dimension_semantics = [#tpu.dimension_semantics<parallel>], iteration_bounds = array<i64: 2>, scalar_prefetch = 0 : i64, scratch_operands = 0 : i64, tpu.core_type = #tpu.core_type<tc>, window_params = [{transform_indices = @transform_0, window_bounds = array<i64: 1, 8, 256>}, {transform_indices = @transform_1, window_bounds = array<i64: 1, 4, 256>}, {transform_indices = @transform_2, window_bounds = array<i64: 1, 32, 256>}, {pipeline_mode = #tpu.pipeline_mode<synchronous>, transform_indices = @transform_3, window_bounds = array<i64: 9, 256>}, {pipeline_mode = #tpu.pipeline_mode<synchronous>, transform_indices = @transform_4, window_bounds = array<i64: 16, 8>}, {pipeline_mode = #tpu.pipeline_mode<synchronous>, transform_indices = @transform_5, window_bounds = array<i64: 16, 1>}, {pipeline_mode = #tpu.pipeline_mode<synchronous>, transform_indices = @transform_6, window_bounds = array<i64: 32, 16>}, {pipeline_mode = #tpu.pipeline_mode<synchronous>, transform_indices = @transform_7, window_bounds = array<i64: 32, 4>}, {pipeline_mode = #tpu.pipeline_mode<synchronous>, transform_indices = @transform_8, window_bounds = array<i64: 32, 1>}, {pipeline_mode = #tpu.pipeline_mode<synchronous>, transform_indices = @transform_9, window_bounds = array<i64: 32, 288>}, {pipeline_mode = #tpu.pipeline_mode<synchronous>, transform_indices = @transform_10, window_bounds = array<i64: 32, 1>}, {pipeline_mode = #tpu.pipeline_mode<synchronous>, transform_indices = @transform_11, window_bounds = array<i64: 32, 1>}, {pipeline_mode = #tpu.pipeline_mode<synchronous>, transform_indices = @transform_12, window_bounds = array<i64: 32, 288>}, {pipeline_mode = #tpu.pipeline_mode<synchronous>, transform_indices = @transform_13, window_bounds = array<i64: 32, 1>}, {pipeline_mode = #tpu.pipeline_mode<synchronous>, transform_indices = @transform_14, window_bounds = array<i64: 32, 32>}, {pipeline_mode = #tpu.pipeline_mode<synchronous>, transform_indices = @transform_15, window_bounds = array<i64: 32, 32>}, {pipeline_mode = #tpu.pipeline_mode<synchronous>, transform_indices = @transform_16, window_bounds = array<i64: 32, 1>}, {pipeline_mode = #tpu.pipeline_mode<synchronous>, transform_indices = @transform_17, window_bounds = array<i64: 32, 32>}, {pipeline_mode = #tpu.pipeline_mode<synchronous>, transform_indices = @transform_18, window_bounds = array<i64: 32, 1>}, {pipeline_mode = #tpu.pipeline_mode<synchronous>, transform_indices = @transform_19, window_bounds = array<i64: 32, 32>}, {pipeline_mode = #tpu.pipeline_mode<synchronous>, transform_indices = @transform_20, window_bounds = array<i64: 32, 1>}, {pipeline_mode = #tpu.pipeline_mode<synchronous>, transform_indices = @transform_21, window_bounds = array<i64: 32, 288>}, {pipeline_mode = #tpu.pipeline_mode<synchronous>, transform_indices = @transform_22, window_bounds = array<i64: 32, 1>}, {pipeline_mode = #tpu.pipeline_mode<synchronous>, transform_indices = @transform_23, window_bounds = array<i64: 32, 1>}, {pipeline_mode = #tpu.pipeline_mode<synchronous>, transform_indices = @transform_24, window_bounds = array<i64: 32, 288>}, {pipeline_mode = #tpu.pipeline_mode<synchronous>, transform_indices = @transform_25, window_bounds = array<i64: 32, 1>}, {pipeline_mode = #tpu.pipeline_mode<synchronous>, transform_indices = @transform_26, window_bounds = array<i64: 3, 32>}, {pipeline_mode = #tpu.pipeline_mode<synchronous>, transform_indices = @transform_27, window_bounds = array<i64: 3, 1>}, {transform_indices = @transform_28, window_bounds = array<i64: 1, 2, 256>}, {transform_indices = @transform_29, window_bounds = array<i64: 1, 1, 256>}, {transform_indices = @transform_30, window_bounds = array<i64: 1, 32, 256>}]} {
    %c0 = arith.constant 0 : index
    %c0_0 = arith.constant 0 : index
    %0 = vector.load %arg4[%c0, %c0_0] : memref<9x256xf32, #tpu.memory_space<vmem>>, vector<9x256xf32>
    %c0_1 = arith.constant 0 : index
    %c0_2 = arith.constant 0 : index
    %c0_3 = arith.constant 0 : index
    %1 = vector.load %arg1[%c0_1, %c0_2, %c0_3] : memref<1x8x256xf32, #tpu.memory_space<vmem>>, vector<1x8x256xf32>
    %2 = vector.shape_cast %1 : vector<1x8x256xf32> to vector<8x256xf32>
    %c0_4 = arith.constant 0 : index
    %c0_5 = arith.constant 0 : index
    %c0_6 = arith.constant 0 : index
    %3 = vector.load %arg2[%c0_4, %c0_5, %c0_6] : memref<1x4x256xf32, #tpu.memory_space<vmem>>, vector<1x4x256xf32>
    %4 = vector.shape_cast %3 : vector<1x4x256xf32> to vector<4x256xf32>
    %c0_7 = arith.constant 0 : index
    %c0_8 = arith.constant 0 : index
    %c0_9 = arith.constant 0 : index
    %5 = vector.load %arg3[%c0_7, %c0_8, %c0_9] : memref<1x32x256xf32, #tpu.memory_space<vmem>>, vector<1x32x256xf32>
    %6 = vector.shape_cast %5 : vector<1x32x256xf32> to vector<32x256xf32>
    %c0_10 = arith.constant 0 : index
    %c0_11 = arith.constant 0 : index
    %7 = vector.load %arg5[%c0_10, %c0_11] : memref<16x8xbf16, #tpu.memory_space<vmem>>, vector<16x8xbf16>
    %8 = arith.truncf %2 : vector<8x256xf32> to vector<8x256xbf16>
    %cst = arith.constant dense<0.000000e+00> : vector<16x256xf32>
    %9 = tpu.matmul %7, %8, %cst {dimension_numbers = #tpu.dot_dimension_numbers<[1], [0], [0], [1], [0, 0, 1, 1], [], []>} : vector<16x8xbf16>, vector<8x256xbf16>, vector<16x256xf32> -> vector<16x256xf32>
    %c0_12 = arith.constant 0 : index
    %c0_13 = arith.constant 0 : index
    %10 = vector.load %arg6[%c0_12, %c0_13] : memref<16x1xf32, #tpu.memory_space<vmem>>, vector<16x1xf32>
    %11 = vector.broadcast %10 : vector<16x1xf32> to vector<16x256xf32>
    %12 = arith.addf %9, %11 : vector<16x256xf32>
    %c0_14 = arith.constant 0 : index
    %c0_15 = arith.constant 0 : index
    %13 = vector.load %arg7[%c0_14, %c0_15] : memref<32x16xbf16, #tpu.memory_space<vmem>>, vector<32x16xbf16>
    %14 = arith.truncf %12 : vector<16x256xf32> to vector<16x256xbf16>
    %cst_16 = arith.constant dense<0.000000e+00> : vector<32x256xf32>
    %15 = tpu.matmul %13, %14, %cst_16 {dimension_numbers = #tpu.dot_dimension_numbers<[1], [0], [0], [1], [0, 0, 1, 1], [], []>} : vector<32x16xbf16>, vector<16x256xbf16>, vector<32x256xf32> -> vector<32x256xf32>
    %c0_17 = arith.constant 0 : index
    %c0_18 = arith.constant 0 : index
    %16 = vector.load %arg8[%c0_17, %c0_18] : memref<32x4xbf16, #tpu.memory_space<vmem>>, vector<32x4xbf16>
    %17 = arith.truncf %4 : vector<4x256xf32> to vector<4x256xbf16>
    %cst_19 = arith.constant dense<0.000000e+00> : vector<32x256xf32>
    %18 = tpu.matmul %16, %17, %cst_19 {dimension_numbers = #tpu.dot_dimension_numbers<[1], [0], [0], [1], [0, 0, 1, 1], [], []>} : vector<32x4xbf16>, vector<4x256xbf16>, vector<32x256xf32> -> vector<32x256xf32>
    %19 = arith.addf %15, %18 : vector<32x256xf32>
    %c0_20 = arith.constant 0 : index
    %c0_21 = arith.constant 0 : index
    %20 = vector.load %arg9[%c0_20, %c0_21] : memref<32x1xf32, #tpu.memory_space<vmem>>, vector<32x1xf32>
    %21 = vector.broadcast %20 : vector<32x1xf32> to vector<32x256xf32>
    %22 = arith.addf %19, %21 : vector<32x256xf32>
    %c17_i32 = arith.constant 17 : i32
    %23 = tpu.dynamic_rotate %22 by %c17_i32 dim 1 : vector<32x256xf32>, i32 -> vector<32x256xf32>
    %24 = vector.extract_strided_slice %0 {offsets = [0, 0], sizes = [1, 256], strides = [1, 1]} : vector<9x256xf32> to vector<1x256xf32>
    %25 = vector.broadcast %24 : vector<1x256xf32> to vector<32x256xf32>
    %26 = arith.mulf %23, %25 : vector<32x256xf32>
    %27 = arith.truncf %26 : vector<32x256xf32> to vector<32x256xbf16>
    %c16_i32 = arith.constant 16 : i32
    %28 = tpu.dynamic_rotate %22 by %c16_i32 dim 1 : vector<32x256xf32>, i32 -> vector<32x256xf32>
    %29 = vector.extract_strided_slice %0 {offsets = [1, 0], sizes = [1, 256], strides = [1, 1]} : vector<9x256xf32> to vector<1x256xf32>
    %30 = vector.broadcast %29 : vector<1x256xf32> to vector<32x256xf32>
    %31 = arith.mulf %28, %30 : vector<32x256xf32>
    %32 = arith.truncf %31 : vector<32x256xf32> to vector<32x256xbf16>
    %c15_i32 = arith.constant 15 : i32
    %33 = tpu.dynamic_rotate %22 by %c15_i32 dim 1 : vector<32x256xf32>, i32 -> vector<32x256xf32>
    %34 = vector.extract_strided_slice %0 {offsets = [2, 0], sizes = [1, 256], strides = [1, 1]} : vector<9x256xf32> to vector<1x256xf32>
    %35 = vector.broadcast %34 : vector<1x256xf32> to vector<32x256xf32>
    %36 = arith.mulf %33, %35 : vector<32x256xf32>
    %37 = arith.truncf %36 : vector<32x256xf32> to vector<32x256xbf16>
    %c1_i32 = arith.constant 1 : i32
    %38 = tpu.dynamic_rotate %22 by %c1_i32 dim 1 : vector<32x256xf32>, i32 -> vector<32x256xf32>
    %39 = vector.extract_strided_slice %0 {offsets = [3, 0], sizes = [1, 256], strides = [1, 1]} : vector<9x256xf32> to vector<1x256xf32>
    %40 = vector.broadcast %39 : vector<1x256xf32> to vector<32x256xf32>
    %41 = arith.mulf %38, %40 : vector<32x256xf32>
    %42 = arith.truncf %41 : vector<32x256xf32> to vector<32x256xbf16>
    %43 = arith.truncf %22 : vector<32x256xf32> to vector<32x256xbf16>
    %c255_i32 = arith.constant 255 : i32
    %44 = tpu.dynamic_rotate %22 by %c255_i32 dim 1 : vector<32x256xf32>, i32 -> vector<32x256xf32>
    %45 = vector.extract_strided_slice %0 {offsets = [5, 0], sizes = [1, 256], strides = [1, 1]} : vector<9x256xf32> to vector<1x256xf32>
    %46 = vector.broadcast %45 : vector<1x256xf32> to vector<32x256xf32>
    %47 = arith.mulf %44, %46 : vector<32x256xf32>
    %48 = arith.truncf %47 : vector<32x256xf32> to vector<32x256xbf16>
    %c241_i32 = arith.constant 241 : i32
    %49 = tpu.dynamic_rotate %22 by %c241_i32 dim 1 : vector<32x256xf32>, i32 -> vector<32x256xf32>
    %50 = vector.extract_strided_slice %0 {offsets = [6, 0], sizes = [1, 256], strides = [1, 1]} : vector<9x256xf32> to vector<1x256xf32>
    %51 = vector.broadcast %50 : vector<1x256xf32> to vector<32x256xf32>
    %52 = arith.mulf %49, %51 : vector<32x256xf32>
    %53 = arith.truncf %52 : vector<32x256xf32> to vector<32x256xbf16>
    %c240_i32 = arith.constant 240 : i32
    %54 = tpu.dynamic_rotate %22 by %c240_i32 dim 1 : vector<32x256xf32>, i32 -> vector<32x256xf32>
    %55 = vector.extract_strided_slice %0 {offsets = [7, 0], sizes = [1, 256], strides = [1, 1]} : vector<9x256xf32> to vector<1x256xf32>
    %56 = vector.broadcast %55 : vector<1x256xf32> to vector<32x256xf32>
    %57 = arith.mulf %54, %56 : vector<32x256xf32>
    %58 = arith.truncf %57 : vector<32x256xf32> to vector<32x256xbf16>
    %c239_i32 = arith.constant 239 : i32
    %59 = tpu.dynamic_rotate %22 by %c239_i32 dim 1 : vector<32x256xf32>, i32 -> vector<32x256xf32>
    %60 = vector.extract_strided_slice %0 {offsets = [8, 0], sizes = [1, 256], strides = [1, 1]} : vector<9x256xf32> to vector<1x256xf32>
    %61 = vector.broadcast %60 : vector<1x256xf32> to vector<32x256xf32>
    %62 = arith.mulf %59, %61 : vector<32x256xf32>
    %63 = arith.truncf %62 : vector<32x256xf32> to vector<32x256xbf16>
    %64 = tpu.concatenate %27, %32, %37, %42, %43, %48, %53, %58, %63 in 0 : vector<32x256xbf16>, vector<32x256xbf16>, vector<32x256xbf16>, vector<32x256xbf16>, vector<32x256xbf16>, vector<32x256xbf16>, vector<32x256xbf16>, vector<32x256xbf16>, vector<32x256xbf16> -> vector<288x256xbf16>
    %c0_22 = arith.constant 0 : index
    %c0_23 = arith.constant 0 : index
    %65 = vector.load %arg10[%c0_22, %c0_23] : memref<32x288xbf16, #tpu.memory_space<vmem>>, vector<32x288xbf16>
    %cst_24 = arith.constant dense<0.000000e+00> : vector<32x256xf32>
    %66 = tpu.matmul %65, %64, %cst_24 {dimension_numbers = #tpu.dot_dimension_numbers<[1], [0], [0], [1], [0, 0, 1, 1], [], []>} : vector<32x288xbf16>, vector<288x256xbf16>, vector<32x256xf32> -> vector<32x256xf32>
    %c0_25 = arith.constant 0 : index
    %c0_26 = arith.constant 0 : index
    %67 = vector.load %arg11[%c0_25, %c0_26] : memref<32x1xf32, #tpu.memory_space<vmem>>, vector<32x1xf32>
    %68 = vector.broadcast %67 : vector<32x1xf32> to vector<32x256xf32>
    %69 = arith.mulf %66, %68 : vector<32x256xf32>
    %c0_27 = arith.constant 0 : index
    %c0_28 = arith.constant 0 : index
    %70 = vector.load %arg12[%c0_27, %c0_28] : memref<32x1xf32, #tpu.memory_space<vmem>>, vector<32x1xf32>
    %71 = vector.broadcast %70 : vector<32x1xf32> to vector<32x256xf32>
    %72 = arith.addf %69, %71 : vector<32x256xf32>
    %cst_29 = arith.constant 0.000000e+00 : f32
    %73 = vector.broadcast %cst_29 : f32 to vector<32x256xf32>
    %74 = arith.maximumf %72, %73 : vector<32x256xf32>
    %c17_i32_30 = arith.constant 17 : i32
    %75 = tpu.dynamic_rotate %74 by %c17_i32_30 dim 1 : vector<32x256xf32>, i32 -> vector<32x256xf32>
    %76 = vector.extract_strided_slice %0 {offsets = [0, 0], sizes = [1, 256], strides = [1, 1]} : vector<9x256xf32> to vector<1x256xf32>
    %77 = vector.broadcast %76 : vector<1x256xf32> to vector<32x256xf32>
    %78 = arith.mulf %75, %77 : vector<32x256xf32>
    %79 = arith.truncf %78 : vector<32x256xf32> to vector<32x256xbf16>
    %c16_i32_31 = arith.constant 16 : i32
    %80 = tpu.dynamic_rotate %74 by %c16_i32_31 dim 1 : vector<32x256xf32>, i32 -> vector<32x256xf32>
    %81 = vector.extract_strided_slice %0 {offsets = [1, 0], sizes = [1, 256], strides = [1, 1]} : vector<9x256xf32> to vector<1x256xf32>
    %82 = vector.broadcast %81 : vector<1x256xf32> to vector<32x256xf32>
    %83 = arith.mulf %80, %82 : vector<32x256xf32>
    %84 = arith.truncf %83 : vector<32x256xf32> to vector<32x256xbf16>
    %c15_i32_32 = arith.constant 15 : i32
    %85 = tpu.dynamic_rotate %74 by %c15_i32_32 dim 1 : vector<32x256xf32>, i32 -> vector<32x256xf32>
    %86 = vector.extract_strided_slice %0 {offsets = [2, 0], sizes = [1, 256], strides = [1, 1]} : vector<9x256xf32> to vector<1x256xf32>
    %87 = vector.broadcast %86 : vector<1x256xf32> to vector<32x256xf32>
    %88 = arith.mulf %85, %87 : vector<32x256xf32>
    %89 = arith.truncf %88 : vector<32x256xf32> to vector<32x256xbf16>
    %c1_i32_33 = arith.constant 1 : i32
    %90 = tpu.dynamic_rotate %74 by %c1_i32_33 dim 1 : vector<32x256xf32>, i32 -> vector<32x256xf32>
    %91 = vector.extract_strided_slice %0 {offsets = [3, 0], sizes = [1, 256], strides = [1, 1]} : vector<9x256xf32> to vector<1x256xf32>
    %92 = vector.broadcast %91 : vector<1x256xf32> to vector<32x256xf32>
    %93 = arith.mulf %90, %92 : vector<32x256xf32>
    %94 = arith.truncf %93 : vector<32x256xf32> to vector<32x256xbf16>
    %95 = arith.truncf %74 : vector<32x256xf32> to vector<32x256xbf16>
    %c255_i32_34 = arith.constant 255 : i32
    %96 = tpu.dynamic_rotate %74 by %c255_i32_34 dim 1 : vector<32x256xf32>, i32 -> vector<32x256xf32>
    %97 = vector.extract_strided_slice %0 {offsets = [5, 0], sizes = [1, 256], strides = [1, 1]} : vector<9x256xf32> to vector<1x256xf32>
    %98 = vector.broadcast %97 : vector<1x256xf32> to vector<32x256xf32>
    %99 = arith.mulf %96, %98 : vector<32x256xf32>
    %100 = arith.truncf %99 : vector<32x256xf32> to vector<32x256xbf16>
    %c241_i32_35 = arith.constant 241 : i32
    %101 = tpu.dynamic_rotate %74 by %c241_i32_35 dim 1 : vector<32x256xf32>, i32 -> vector<32x256xf32>
    %102 = vector.extract_strided_slice %0 {offsets = [6, 0], sizes = [1, 256], strides = [1, 1]} : vector<9x256xf32> to vector<1x256xf32>
    %103 = vector.broadcast %102 : vector<1x256xf32> to vector<32x256xf32>
    %104 = arith.mulf %101, %103 : vector<32x256xf32>
    %105 = arith.truncf %104 : vector<32x256xf32> to vector<32x256xbf16>
    %c240_i32_36 = arith.constant 240 : i32
    %106 = tpu.dynamic_rotate %74 by %c240_i32_36 dim 1 : vector<32x256xf32>, i32 -> vector<32x256xf32>
    %107 = vector.extract_strided_slice %0 {offsets = [7, 0], sizes = [1, 256], strides = [1, 1]} : vector<9x256xf32> to vector<1x256xf32>
    %108 = vector.broadcast %107 : vector<1x256xf32> to vector<32x256xf32>
    %109 = arith.mulf %106, %108 : vector<32x256xf32>
    %110 = arith.truncf %109 : vector<32x256xf32> to vector<32x256xbf16>
    %c239_i32_37 = arith.constant 239 : i32
    %111 = tpu.dynamic_rotate %74 by %c239_i32_37 dim 1 : vector<32x256xf32>, i32 -> vector<32x256xf32>
    %112 = vector.extract_strided_slice %0 {offsets = [8, 0], sizes = [1, 256], strides = [1, 1]} : vector<9x256xf32> to vector<1x256xf32>
    %113 = vector.broadcast %112 : vector<1x256xf32> to vector<32x256xf32>
    %114 = arith.mulf %111, %113 : vector<32x256xf32>
    %115 = arith.truncf %114 : vector<32x256xf32> to vector<32x256xbf16>
    %116 = tpu.concatenate %79, %84, %89, %94, %95, %100, %105, %110, %115 in 0 : vector<32x256xbf16>, vector<32x256xbf16>, vector<32x256xbf16>, vector<32x256xbf16>, vector<32x256xbf16>, vector<32x256xbf16>, vector<32x256xbf16>, vector<32x256xbf16>, vector<32x256xbf16> -> vector<288x256xbf16>
    %c0_38 = arith.constant 0 : index
    %c0_39 = arith.constant 0 : index
    %117 = vector.load %arg13[%c0_38, %c0_39] : memref<32x288xbf16, #tpu.memory_space<vmem>>, vector<32x288xbf16>
    %cst_40 = arith.constant dense<0.000000e+00> : vector<32x256xf32>
    %118 = tpu.matmul %117, %116, %cst_40 {dimension_numbers = #tpu.dot_dimension_numbers<[1], [0], [0], [1], [0, 0, 1, 1], [], []>} : vector<32x288xbf16>, vector<288x256xbf16>, vector<32x256xf32> -> vector<32x256xf32>
    %c0_41 = arith.constant 0 : index
    %c0_42 = arith.constant 0 : index
    %119 = vector.load %arg14[%c0_41, %c0_42] : memref<32x1xf32, #tpu.memory_space<vmem>>, vector<32x1xf32>
    %120 = vector.broadcast %119 : vector<32x1xf32> to vector<32x256xf32>
    %121 = arith.addf %118, %120 : vector<32x256xf32>
    %122 = arith.addf %22, %121 : vector<32x256xf32>
    %cst_43 = arith.constant 0.000000e+00 : f32
    %123 = vector.broadcast %cst_43 : f32 to vector<32x256xf32>
    %124 = arith.maximumf %122, %123 : vector<32x256xf32>
    %cst_44 = arith.constant dense<0.000000e+00> : vector<32xf32>
    %125 = vector.multi_reduction <add>, %6, %cst_44 [1] : vector<32x256xf32> to vector<32xf32>
    %126 = vector.shape_cast %125 : vector<32xf32> to vector<32x1xf32>
    %cst_45 = arith.constant 2.560000e+02 : f32
    %127 = vector.broadcast %cst_45 : f32 to vector<32x1xf32>
    %128 = arith.divf %126, %127 : vector<32x1xf32>
    %cst_46 = arith.constant dense<0.000000e+00> : vector<32xf32>
    %129 = vector.multi_reduction <add>, %124, %cst_46 [1] : vector<32x256xf32> to vector<32xf32>
    %130 = vector.shape_cast %129 : vector<32xf32> to vector<32x1xf32>
    %cst_47 = arith.constant 2.560000e+02 : f32
    %131 = vector.broadcast %cst_47 : f32 to vector<32x1xf32>
    %132 = arith.divf %130, %131 : vector<32x1xf32>
    %c0_48 = arith.constant 0 : index
    %c0_49 = arith.constant 0 : index
    %133 = vector.load %arg15[%c0_48, %c0_49] : memref<32x32xf32, #tpu.memory_space<vmem>>, vector<32x32xf32>
    %cst_50 = arith.constant dense<0.000000e+00> : vector<32x1xf32>
    %134 = tpu.matmul %133, %128, %cst_50 {dimension_numbers = #tpu.dot_dimension_numbers<[1], [0], [0], [1], [0, 0, 1, 1], [], []>} : vector<32x32xf32>, vector<32x1xf32>, vector<32x1xf32> -> vector<32x1xf32>
    %c0_51 = arith.constant 0 : index
    %c0_52 = arith.constant 0 : index
    %135 = vector.load %arg16[%c0_51, %c0_52] : memref<32x32xf32, #tpu.memory_space<vmem>>, vector<32x32xf32>
    %cst_53 = arith.constant dense<0.000000e+00> : vector<32x1xf32>
    %136 = tpu.matmul %135, %132, %cst_53 {dimension_numbers = #tpu.dot_dimension_numbers<[1], [0], [0], [1], [0, 0, 1, 1], [], []>} : vector<32x32xf32>, vector<32x1xf32>, vector<32x1xf32> -> vector<32x1xf32>
    %137 = arith.addf %134, %136 : vector<32x1xf32>
    %c0_54 = arith.constant 0 : index
    %c0_55 = arith.constant 0 : index
    %138 = vector.load %arg17[%c0_54, %c0_55] : memref<32x1xf32, #tpu.memory_space<vmem>>, vector<32x1xf32>
    %139 = arith.addf %137, %138 : vector<32x1xf32>
    %cst_56 = arith.constant 0.000000e+00 : f32
    %140 = vector.broadcast %cst_56 : f32 to vector<32x1xf32>
    %141 = arith.maximumf %139, %140 : vector<32x1xf32>
    %c0_57 = arith.constant 0 : index
    %c0_58 = arith.constant 0 : index
    %142 = vector.load %arg18[%c0_57, %c0_58] : memref<32x32xf32, #tpu.memory_space<vmem>>, vector<32x32xf32>
    %cst_59 = arith.constant dense<0.000000e+00> : vector<32x1xf32>
    %143 = tpu.matmul %142, %141, %cst_59 {dimension_numbers = #tpu.dot_dimension_numbers<[1], [0], [0], [1], [0, 0, 1, 1], [], []>} : vector<32x32xf32>, vector<32x1xf32>, vector<32x1xf32> -> vector<32x1xf32>
    %c0_60 = arith.constant 0 : index
    %c0_61 = arith.constant 0 : index
    %144 = vector.load %arg19[%c0_60, %c0_61] : memref<32x1xf32, #tpu.memory_space<vmem>>, vector<32x1xf32>
    %145 = arith.addf %143, %144 : vector<32x1xf32>
    %146 = arith.negf %145 : vector<32x1xf32>
    %147 = math.exp %146 : vector<32x1xf32>
    %cst_62 = arith.constant 1.000000e+00 : f32
    %148 = vector.broadcast %cst_62 : f32 to vector<32x1xf32>
    %149 = arith.addf %148, %147 : vector<32x1xf32>
    %150 = arith.divf %148, %149 : vector<32x1xf32>
    %151 = vector.broadcast %150 : vector<32x1xf32> to vector<32x256xf32>
    %152 = arith.mulf %151, %124 : vector<32x256xf32>
    %153 = arith.addf %6, %152 : vector<32x256xf32>
    %c0_63 = arith.constant 0 : index
    %c0_64 = arith.constant 0 : index
    %154 = vector.load %arg20[%c0_63, %c0_64] : memref<32x32xbf16, #tpu.memory_space<vmem>>, vector<32x32xbf16>
    %155 = arith.truncf %153 : vector<32x256xf32> to vector<32x256xbf16>
    %cst_65 = arith.constant dense<0.000000e+00> : vector<32x256xf32>
    %156 = tpu.matmul %154, %155, %cst_65 {dimension_numbers = #tpu.dot_dimension_numbers<[1], [0], [0], [1], [0, 0, 1, 1], [], []>} : vector<32x32xbf16>, vector<32x256xbf16>, vector<32x256xf32> -> vector<32x256xf32>
    %c0_66 = arith.constant 0 : index
    %c0_67 = arith.constant 0 : index
    %157 = vector.load %arg21[%c0_66, %c0_67] : memref<32x1xf32, #tpu.memory_space<vmem>>, vector<32x1xf32>
    %158 = vector.broadcast %157 : vector<32x1xf32> to vector<32x256xf32>
    %159 = arith.addf %156, %158 : vector<32x256xf32>
    %c17_i32_68 = arith.constant 17 : i32
    %160 = tpu.dynamic_rotate %159 by %c17_i32_68 dim 1 : vector<32x256xf32>, i32 -> vector<32x256xf32>
    %161 = vector.extract_strided_slice %0 {offsets = [0, 0], sizes = [1, 256], strides = [1, 1]} : vector<9x256xf32> to vector<1x256xf32>
    %162 = vector.broadcast %161 : vector<1x256xf32> to vector<32x256xf32>
    %163 = arith.mulf %160, %162 : vector<32x256xf32>
    %164 = arith.truncf %163 : vector<32x256xf32> to vector<32x256xbf16>
    %c16_i32_69 = arith.constant 16 : i32
    %165 = tpu.dynamic_rotate %159 by %c16_i32_69 dim 1 : vector<32x256xf32>, i32 -> vector<32x256xf32>
    %166 = vector.extract_strided_slice %0 {offsets = [1, 0], sizes = [1, 256], strides = [1, 1]} : vector<9x256xf32> to vector<1x256xf32>
    %167 = vector.broadcast %166 : vector<1x256xf32> to vector<32x256xf32>
    %168 = arith.mulf %165, %167 : vector<32x256xf32>
    %169 = arith.truncf %168 : vector<32x256xf32> to vector<32x256xbf16>
    %c15_i32_70 = arith.constant 15 : i32
    %170 = tpu.dynamic_rotate %159 by %c15_i32_70 dim 1 : vector<32x256xf32>, i32 -> vector<32x256xf32>
    %171 = vector.extract_strided_slice %0 {offsets = [2, 0], sizes = [1, 256], strides = [1, 1]} : vector<9x256xf32> to vector<1x256xf32>
    %172 = vector.broadcast %171 : vector<1x256xf32> to vector<32x256xf32>
    %173 = arith.mulf %170, %172 : vector<32x256xf32>
    %174 = arith.truncf %173 : vector<32x256xf32> to vector<32x256xbf16>
    %c1_i32_71 = arith.constant 1 : i32
    %175 = tpu.dynamic_rotate %159 by %c1_i32_71 dim 1 : vector<32x256xf32>, i32 -> vector<32x256xf32>
    %176 = vector.extract_strided_slice %0 {offsets = [3, 0], sizes = [1, 256], strides = [1, 1]} : vector<9x256xf32> to vector<1x256xf32>
    %177 = vector.broadcast %176 : vector<1x256xf32> to vector<32x256xf32>
    %178 = arith.mulf %175, %177 : vector<32x256xf32>
    %179 = arith.truncf %178 : vector<32x256xf32> to vector<32x256xbf16>
    %180 = arith.truncf %159 : vector<32x256xf32> to vector<32x256xbf16>
    %c255_i32_72 = arith.constant 255 : i32
    %181 = tpu.dynamic_rotate %159 by %c255_i32_72 dim 1 : vector<32x256xf32>, i32 -> vector<32x256xf32>
    %182 = vector.extract_strided_slice %0 {offsets = [5, 0], sizes = [1, 256], strides = [1, 1]} : vector<9x256xf32> to vector<1x256xf32>
    %183 = vector.broadcast %182 : vector<1x256xf32> to vector<32x256xf32>
    %184 = arith.mulf %181, %183 : vector<32x256xf32>
    %185 = arith.truncf %184 : vector<32x256xf32> to vector<32x256xbf16>
    %c241_i32_73 = arith.constant 241 : i32
    %186 = tpu.dynamic_rotate %159 by %c241_i32_73 dim 1 : vector<32x256xf32>, i32 -> vector<32x256xf32>
    %187 = vector.extract_strided_slice %0 {offsets = [6, 0], sizes = [1, 256], strides = [1, 1]} : vector<9x256xf32> to vector<1x256xf32>
    %188 = vector.broadcast %187 : vector<1x256xf32> to vector<32x256xf32>
    %189 = arith.mulf %186, %188 : vector<32x256xf32>
    %190 = arith.truncf %189 : vector<32x256xf32> to vector<32x256xbf16>
    %c240_i32_74 = arith.constant 240 : i32
    %191 = tpu.dynamic_rotate %159 by %c240_i32_74 dim 1 : vector<32x256xf32>, i32 -> vector<32x256xf32>
    %192 = vector.extract_strided_slice %0 {offsets = [7, 0], sizes = [1, 256], strides = [1, 1]} : vector<9x256xf32> to vector<1x256xf32>
    %193 = vector.broadcast %192 : vector<1x256xf32> to vector<32x256xf32>
    %194 = arith.mulf %191, %193 : vector<32x256xf32>
    %195 = arith.truncf %194 : vector<32x256xf32> to vector<32x256xbf16>
    %c239_i32_75 = arith.constant 239 : i32
    %196 = tpu.dynamic_rotate %159 by %c239_i32_75 dim 1 : vector<32x256xf32>, i32 -> vector<32x256xf32>
    %197 = vector.extract_strided_slice %0 {offsets = [8, 0], sizes = [1, 256], strides = [1, 1]} : vector<9x256xf32> to vector<1x256xf32>
    %198 = vector.broadcast %197 : vector<1x256xf32> to vector<32x256xf32>
    %199 = arith.mulf %196, %198 : vector<32x256xf32>
    %200 = arith.truncf %199 : vector<32x256xf32> to vector<32x256xbf16>
    %201 = tpu.concatenate %164, %169, %174, %179, %180, %185, %190, %195, %200 in 0 : vector<32x256xbf16>, vector<32x256xbf16>, vector<32x256xbf16>, vector<32x256xbf16>, vector<32x256xbf16>, vector<32x256xbf16>, vector<32x256xbf16>, vector<32x256xbf16>, vector<32x256xbf16> -> vector<288x256xbf16>
    %c0_76 = arith.constant 0 : index
    %c0_77 = arith.constant 0 : index
    %202 = vector.load %arg22[%c0_76, %c0_77] : memref<32x288xbf16, #tpu.memory_space<vmem>>, vector<32x288xbf16>
    %cst_78 = arith.constant dense<0.000000e+00> : vector<32x256xf32>
    %203 = tpu.matmul %202, %201, %cst_78 {dimension_numbers = #tpu.dot_dimension_numbers<[1], [0], [0], [1], [0, 0, 1, 1], [], []>} : vector<32x288xbf16>, vector<288x256xbf16>, vector<32x256xf32> -> vector<32x256xf32>
    %c0_79 = arith.constant 0 : index
    %c0_80 = arith.constant 0 : index
    %204 = vector.load %arg23[%c0_79, %c0_80] : memref<32x1xf32, #tpu.memory_space<vmem>>, vector<32x1xf32>
    %205 = vector.broadcast %204 : vector<32x1xf32> to vector<32x256xf32>
    %206 = arith.mulf %203, %205 : vector<32x256xf32>
    %c0_81 = arith.constant 0 : index
    %c0_82 = arith.constant 0 : index
    %207 = vector.load %arg24[%c0_81, %c0_82] : memref<32x1xf32, #tpu.memory_space<vmem>>, vector<32x1xf32>
    %208 = vector.broadcast %207 : vector<32x1xf32> to vector<32x256xf32>
    %209 = arith.addf %206, %208 : vector<32x256xf32>
    %cst_83 = arith.constant 0.000000e+00 : f32
    %210 = vector.broadcast %cst_83 : f32 to vector<32x256xf32>
    %211 = arith.maximumf %209, %210 : vector<32x256xf32>
    %c17_i32_84 = arith.constant 17 : i32
    %212 = tpu.dynamic_rotate %211 by %c17_i32_84 dim 1 : vector<32x256xf32>, i32 -> vector<32x256xf32>
    %213 = vector.extract_strided_slice %0 {offsets = [0, 0], sizes = [1, 256], strides = [1, 1]} : vector<9x256xf32> to vector<1x256xf32>
    %214 = vector.broadcast %213 : vector<1x256xf32> to vector<32x256xf32>
    %215 = arith.mulf %212, %214 : vector<32x256xf32>
    %216 = arith.truncf %215 : vector<32x256xf32> to vector<32x256xbf16>
    %c16_i32_85 = arith.constant 16 : i32
    %217 = tpu.dynamic_rotate %211 by %c16_i32_85 dim 1 : vector<32x256xf32>, i32 -> vector<32x256xf32>
    %218 = vector.extract_strided_slice %0 {offsets = [1, 0], sizes = [1, 256], strides = [1, 1]} : vector<9x256xf32> to vector<1x256xf32>
    %219 = vector.broadcast %218 : vector<1x256xf32> to vector<32x256xf32>
    %220 = arith.mulf %217, %219 : vector<32x256xf32>
    %221 = arith.truncf %220 : vector<32x256xf32> to vector<32x256xbf16>
    %c15_i32_86 = arith.constant 15 : i32
    %222 = tpu.dynamic_rotate %211 by %c15_i32_86 dim 1 : vector<32x256xf32>, i32 -> vector<32x256xf32>
    %223 = vector.extract_strided_slice %0 {offsets = [2, 0], sizes = [1, 256], strides = [1, 1]} : vector<9x256xf32> to vector<1x256xf32>
    %224 = vector.broadcast %223 : vector<1x256xf32> to vector<32x256xf32>
    %225 = arith.mulf %222, %224 : vector<32x256xf32>
    %226 = arith.truncf %225 : vector<32x256xf32> to vector<32x256xbf16>
    %c1_i32_87 = arith.constant 1 : i32
    %227 = tpu.dynamic_rotate %211 by %c1_i32_87 dim 1 : vector<32x256xf32>, i32 -> vector<32x256xf32>
    %228 = vector.extract_strided_slice %0 {offsets = [3, 0], sizes = [1, 256], strides = [1, 1]} : vector<9x256xf32> to vector<1x256xf32>
    %229 = vector.broadcast %228 : vector<1x256xf32> to vector<32x256xf32>
    %230 = arith.mulf %227, %229 : vector<32x256xf32>
    %231 = arith.truncf %230 : vector<32x256xf32> to vector<32x256xbf16>
    %232 = arith.truncf %211 : vector<32x256xf32> to vector<32x256xbf16>
    %c255_i32_88 = arith.constant 255 : i32
    %233 = tpu.dynamic_rotate %211 by %c255_i32_88 dim 1 : vector<32x256xf32>, i32 -> vector<32x256xf32>
    %234 = vector.extract_strided_slice %0 {offsets = [5, 0], sizes = [1, 256], strides = [1, 1]} : vector<9x256xf32> to vector<1x256xf32>
    %235 = vector.broadcast %234 : vector<1x256xf32> to vector<32x256xf32>
    %236 = arith.mulf %233, %235 : vector<32x256xf32>
    %237 = arith.truncf %236 : vector<32x256xf32> to vector<32x256xbf16>
    %c241_i32_89 = arith.constant 241 : i32
    %238 = tpu.dynamic_rotate %211 by %c241_i32_89 dim 1 : vector<32x256xf32>, i32 -> vector<32x256xf32>
    %239 = vector.extract_strided_slice %0 {offsets = [6, 0], sizes = [1, 256], strides = [1, 1]} : vector<9x256xf32> to vector<1x256xf32>
    %240 = vector.broadcast %239 : vector<1x256xf32> to vector<32x256xf32>
    %241 = arith.mulf %238, %240 : vector<32x256xf32>
    %242 = arith.truncf %241 : vector<32x256xf32> to vector<32x256xbf16>
    %c240_i32_90 = arith.constant 240 : i32
    %243 = tpu.dynamic_rotate %211 by %c240_i32_90 dim 1 : vector<32x256xf32>, i32 -> vector<32x256xf32>
    %244 = vector.extract_strided_slice %0 {offsets = [7, 0], sizes = [1, 256], strides = [1, 1]} : vector<9x256xf32> to vector<1x256xf32>
    %245 = vector.broadcast %244 : vector<1x256xf32> to vector<32x256xf32>
    %246 = arith.mulf %243, %245 : vector<32x256xf32>
    %247 = arith.truncf %246 : vector<32x256xf32> to vector<32x256xbf16>
    %c239_i32_91 = arith.constant 239 : i32
    %248 = tpu.dynamic_rotate %211 by %c239_i32_91 dim 1 : vector<32x256xf32>, i32 -> vector<32x256xf32>
    %249 = vector.extract_strided_slice %0 {offsets = [8, 0], sizes = [1, 256], strides = [1, 1]} : vector<9x256xf32> to vector<1x256xf32>
    %250 = vector.broadcast %249 : vector<1x256xf32> to vector<32x256xf32>
    %251 = arith.mulf %248, %250 : vector<32x256xf32>
    %252 = arith.truncf %251 : vector<32x256xf32> to vector<32x256xbf16>
    %253 = tpu.concatenate %216, %221, %226, %231, %232, %237, %242, %247, %252 in 0 : vector<32x256xbf16>, vector<32x256xbf16>, vector<32x256xbf16>, vector<32x256xbf16>, vector<32x256xbf16>, vector<32x256xbf16>, vector<32x256xbf16>, vector<32x256xbf16>, vector<32x256xbf16> -> vector<288x256xbf16>
    %c0_92 = arith.constant 0 : index
    %c0_93 = arith.constant 0 : index
    %254 = vector.load %arg25[%c0_92, %c0_93] : memref<32x288xbf16, #tpu.memory_space<vmem>>, vector<32x288xbf16>
    %cst_94 = arith.constant dense<0.000000e+00> : vector<32x256xf32>
    %255 = tpu.matmul %254, %253, %cst_94 {dimension_numbers = #tpu.dot_dimension_numbers<[1], [0], [0], [1], [0, 0, 1, 1], [], []>} : vector<32x288xbf16>, vector<288x256xbf16>, vector<32x256xf32> -> vector<32x256xf32>
    %c0_95 = arith.constant 0 : index
    %c0_96 = arith.constant 0 : index
    %256 = vector.load %arg26[%c0_95, %c0_96] : memref<32x1xf32, #tpu.memory_space<vmem>>, vector<32x1xf32>
    %257 = vector.broadcast %256 : vector<32x1xf32> to vector<32x256xf32>
    %258 = arith.addf %255, %257 : vector<32x256xf32>
    %259 = arith.addf %159, %258 : vector<32x256xf32>
    %cst_97 = arith.constant 0.000000e+00 : f32
    %260 = vector.broadcast %cst_97 : f32 to vector<32x256xf32>
    %261 = arith.maximumf %259, %260 : vector<32x256xf32>
    %c0_98 = arith.constant 0 : index
    %c0_99 = arith.constant 0 : index
    %262 = vector.load %arg27[%c0_98, %c0_99] : memref<3x32xbf16, #tpu.memory_space<vmem>>, vector<3x32xbf16>
    %263 = arith.truncf %261 : vector<32x256xf32> to vector<32x256xbf16>
    %cst_100 = arith.constant dense<0.000000e+00> : vector<3x256xf32>
    %264 = tpu.matmul %262, %263, %cst_100 {dimension_numbers = #tpu.dot_dimension_numbers<[1], [0], [0], [1], [0, 0, 1, 1], [], []>} : vector<3x32xbf16>, vector<32x256xbf16>, vector<3x256xf32> -> vector<3x256xf32>
    %c0_101 = arith.constant 0 : index
    %c0_102 = arith.constant 0 : index
    %265 = vector.load %arg28[%c0_101, %c0_102] : memref<3x1xf32, #tpu.memory_space<vmem>>, vector<3x1xf32>
    %266 = vector.broadcast %265 : vector<3x1xf32> to vector<3x256xf32>
    %267 = arith.addf %264, %266 : vector<3x256xf32>
    %c0_103 = arith.constant 0 : index
    %c0_104 = arith.constant 0 : index
    %c0_105 = arith.constant 0 : index
    %268 = vector.load %arg31[%c0_103, %c0_104, %c0_105] : memref<1x32x256xf32, #tpu.memory_space<vmem>>, vector<1x32x256xf32>
    %269 = vector.shape_cast %268 : vector<1x32x256xf32> to vector<32x256xf32>
    %270 = vector.shape_cast %261 : vector<32x256xf32> to vector<1x32x256xf32>
    tpu.vector_store %arg31[%c0_103, %c0_104, %c0_105], %270 {strides = array<i32>} : memref<1x32x256xf32, #tpu.memory_space<vmem>>, vector<1x32x256xf32>,
    %271 = vector.extract_strided_slice %267 {offsets = [0, 0], sizes = [1, 256], strides = [1, 1]} : vector<3x256xf32> to vector<1x256xf32>
    %c0_106 = arith.constant 0 : index
    %c0_107 = arith.constant 0 : index
    %c0_108 = arith.constant 0 : index
    %272 = vector.load %arg30[%c0_106, %c0_107, %c0_108] : memref<1x1x256xf32, #tpu.memory_space<vmem>>, vector<1x1x256xf32>
    %273 = vector.shape_cast %272 : vector<1x1x256xf32> to vector<1x256xf32>
    %274 = vector.shape_cast %271 : vector<1x256xf32> to vector<1x1x256xf32>
    tpu.vector_store %arg30[%c0_106, %c0_107, %c0_108], %274 {strides = array<i32>} : memref<1x1x256xf32, #tpu.memory_space<vmem>>, vector<1x1x256xf32>,
    %275 = vector.extract_strided_slice %267 {offsets = [1, 0], sizes = [2, 256], strides = [1, 1]} : vector<3x256xf32> to vector<2x256xf32>
    %c0_109 = arith.constant 0 : index
    %c0_110 = arith.constant 0 : index
    %c0_111 = arith.constant 0 : index
    %276 = vector.load %arg29[%c0_109, %c0_110, %c0_111] : memref<1x2x256xf32, #tpu.memory_space<vmem>>, vector<1x2x256xf32>
    %277 = vector.shape_cast %276 : vector<1x2x256xf32> to vector<2x256xf32>
    %278 = vector.shape_cast %275 : vector<2x256xf32> to vector<1x2x256xf32>
    tpu.vector_store %arg29[%c0_109, %c0_110, %c0_111], %278 {strides = array<i32>} : memref<1x2x256xf32, #tpu.memory_space<vmem>>, vector<1x2x256xf32>,
    return
  }
  func.func @transform_0(%arg0: i32) -> (i32, i32, i32) {
    %c0_i32 = arith.constant 0 : i32
    %c0_i32_0 = arith.constant 0 : i32
    %c0_i32_1 = arith.constant 0 : i32
    return %arg0, %c0_i32, %c0_i32_0 : i32, i32, i32
  }
  func.func @transform_1(%arg0: i32) -> (i32, i32, i32) {
    %c0_i32 = arith.constant 0 : i32
    %c0_i32_0 = arith.constant 0 : i32
    %c0_i32_1 = arith.constant 0 : i32
    return %arg0, %c0_i32, %c0_i32_0 : i32, i32, i32
  }
  func.func @transform_2(%arg0: i32) -> (i32, i32, i32) {
    %c0_i32 = arith.constant 0 : i32
    %c0_i32_0 = arith.constant 0 : i32
    %c0_i32_1 = arith.constant 0 : i32
    return %arg0, %c0_i32, %c0_i32_0 : i32, i32, i32
  }
  func.func @transform_3(%arg0: i32) -> (i32, i32) {
    %c0_i32 = arith.constant 0 : i32
    %c0_i32_0 = arith.constant 0 : i32
    %c0_i32_1 = arith.constant 0 : i32
    return %c0_i32, %c0_i32_0 : i32, i32
  }
  func.func @transform_4(%arg0: i32) -> (i32, i32) {
    %c0_i32 = arith.constant 0 : i32
    %c0_i32_0 = arith.constant 0 : i32
    %c0_i32_1 = arith.constant 0 : i32
    return %c0_i32, %c0_i32_0 : i32, i32
  }
  func.func @transform_5(%arg0: i32) -> (i32, i32) {
    %c0_i32 = arith.constant 0 : i32
    %c0_i32_0 = arith.constant 0 : i32
    %c0_i32_1 = arith.constant 0 : i32
    return %c0_i32, %c0_i32_0 : i32, i32
  }
  func.func @transform_6(%arg0: i32) -> (i32, i32) {
    %c0_i32 = arith.constant 0 : i32
    %c0_i32_0 = arith.constant 0 : i32
    %c0_i32_1 = arith.constant 0 : i32
    return %c0_i32, %c0_i32_0 : i32, i32
  }
  func.func @transform_7(%arg0: i32) -> (i32, i32) {
    %c0_i32 = arith.constant 0 : i32
    %c0_i32_0 = arith.constant 0 : i32
    %c0_i32_1 = arith.constant 0 : i32
    return %c0_i32, %c0_i32_0 : i32, i32
  }
  func.func @transform_8(%arg0: i32) -> (i32, i32) {
    %c0_i32 = arith.constant 0 : i32
    %c0_i32_0 = arith.constant 0 : i32
    %c0_i32_1 = arith.constant 0 : i32
    return %c0_i32, %c0_i32_0 : i32, i32
  }
  func.func @transform_9(%arg0: i32) -> (i32, i32) {
    %c0_i32 = arith.constant 0 : i32
    %c0_i32_0 = arith.constant 0 : i32
    %c0_i32_1 = arith.constant 0 : i32
    return %c0_i32, %c0_i32_0 : i32, i32
  }
  func.func @transform_10(%arg0: i32) -> (i32, i32) {
    %c0_i32 = arith.constant 0 : i32
    %c0_i32_0 = arith.constant 0 : i32
    %c0_i32_1 = arith.constant 0 : i32
    return %c0_i32, %c0_i32_0 : i32, i32
  }
  func.func @transform_11(%arg0: i32) -> (i32, i32) {
    %c0_i32 = arith.constant 0 : i32
    %c0_i32_0 = arith.constant 0 : i32
    %c0_i32_1 = arith.constant 0 : i32
    return %c0_i32, %c0_i32_0 : i32, i32
  }
  func.func @transform_12(%arg0: i32) -> (i32, i32) {
    %c0_i32 = arith.constant 0 : i32
    %c0_i32_0 = arith.constant 0 : i32
    %c0_i32_1 = arith.constant 0 : i32
    return %c0_i32, %c0_i32_0 : i32, i32
  }
  func.func @transform_13(%arg0: i32) -> (i32, i32) {
    %c0_i32 = arith.constant 0 : i32
    %c0_i32_0 = arith.constant 0 : i32
    %c0_i32_1 = arith.constant 0 : i32
    return %c0_i32, %c0_i32_0 : i32, i32
  }
  func.func @transform_14(%arg0: i32) -> (i32, i32) {
    %c0_i32 = arith.constant 0 : i32
    %c0_i32_0 = arith.constant 0 : i32
    %c0_i32_1 = arith.constant 0 : i32
    return %c0_i32, %c0_i32_0 : i32, i32
  }
  func.func @transform_15(%arg0: i32) -> (i32, i32) {
    %c0_i32 = arith.constant 0 : i32
    %c0_i32_0 = arith.constant 0 : i32
    %c0_i32_1 = arith.constant 0 : i32
    return %c0_i32, %c0_i32_0 : i32, i32
  }
  func.func @transform_16(%arg0: i32) -> (i32, i32) {
    %c0_i32 = arith.constant 0 : i32
    %c0_i32_0 = arith.constant 0 : i32
    %c0_i32_1 = arith.constant 0 : i32
    return %c0_i32, %c0_i32_0 : i32, i32
  }
  func.func @transform_17(%arg0: i32) -> (i32, i32) {
    %c0_i32 = arith.constant 0 : i32
    %c0_i32_0 = arith.constant 0 : i32
    %c0_i32_1 = arith.constant 0 : i32
    return %c0_i32, %c0_i32_0 : i32, i32
  }
  func.func @transform_18(%arg0: i32) -> (i32, i32) {
    %c0_i32 = arith.constant 0 : i32
    %c0_i32_0 = arith.constant 0 : i32
    %c0_i32_1 = arith.constant 0 : i32
    return %c0_i32, %c0_i32_0 : i32, i32
  }
  func.func @transform_19(%arg0: i32) -> (i32, i32) {
    %c0_i32 = arith.constant 0 : i32
    %c0_i32_0 = arith.constant 0 : i32
    %c0_i32_1 = arith.constant 0 : i32
    return %c0_i32, %c0_i32_0 : i32, i32
  }
  func.func @transform_20(%arg0: i32) -> (i32, i32) {
    %c0_i32 = arith.constant 0 : i32
    %c0_i32_0 = arith.constant 0 : i32
    %c0_i32_1 = arith.constant 0 : i32
    return %c0_i32, %c0_i32_0 : i32, i32
  }
  func.func @transform_21(%arg0: i32) -> (i32, i32) {
    %c0_i32 = arith.constant 0 : i32
    %c0_i32_0 = arith.constant 0 : i32
    %c0_i32_1 = arith.constant 0 : i32
    return %c0_i32, %c0_i32_0 : i32, i32
  }
  func.func @transform_22(%arg0: i32) -> (i32, i32) {
    %c0_i32 = arith.constant 0 : i32
    %c0_i32_0 = arith.constant 0 : i32
    %c0_i32_1 = arith.constant 0 : i32
    return %c0_i32, %c0_i32_0 : i32, i32
  }
  func.func @transform_23(%arg0: i32) -> (i32, i32) {
    %c0_i32 = arith.constant 0 : i32
    %c0_i32_0 = arith.constant 0 : i32
    %c0_i32_1 = arith.constant 0 : i32
    return %c0_i32, %c0_i32_0 : i32, i32
  }
  func.func @transform_24(%arg0: i32) -> (i32, i32) {
    %c0_i32 = arith.constant 0 : i32
    %c0_i32_0 = arith.constant 0 : i32
    %c0_i32_1 = arith.constant 0 : i32
    return %c0_i32, %c0_i32_0 : i32, i32
  }
  func.func @transform_25(%arg0: i32) -> (i32, i32) {
    %c0_i32 = arith.constant 0 : i32
    %c0_i32_0 = arith.constant 0 : i32
    %c0_i32_1 = arith.constant 0 : i32
    return %c0_i32, %c0_i32_0 : i32, i32
  }
  func.func @transform_26(%arg0: i32) -> (i32, i32) {
    %c0_i32 = arith.constant 0 : i32
    %c0_i32_0 = arith.constant 0 : i32
    %c0_i32_1 = arith.constant 0 : i32
    return %c0_i32, %c0_i32_0 : i32, i32
  }
  func.func @transform_27(%arg0: i32) -> (i32, i32) {
    %c0_i32 = arith.constant 0 : i32
    %c0_i32_0 = arith.constant 0 : i32
    %c0_i32_1 = arith.constant 0 : i32
    return %c0_i32, %c0_i32_0 : i32, i32
  }
  func.func @transform_28(%arg0: i32) -> (i32, i32, i32) {
    %c0_i32 = arith.constant 0 : i32
    %c0_i32_0 = arith.constant 0 : i32
    %c0_i32_1 = arith.constant 0 : i32
    return %arg0, %c0_i32, %c0_i32_0 : i32, i32, i32
  }
  func.func @transform_29(%arg0: i32) -> (i32, i32, i32) {
    %c0_i32 = arith.constant 0 : i32
    %c0_i32_0 = arith.constant 0 : i32
    %c0_i32_1 = arith.constant 0 : i32
    return %arg0, %c0_i32, %c0_i32_0 : i32, i32, i32
  }
  func.func @transform_30(%arg0: i32) -> (i32, i32, i32) {
    %c0_i32 = arith.constant 0 : i32
    %c0_i32_0 = arith.constant 0 : i32
    %c0_i32_1 = arith.constant 0 : i32
    return %arg0, %c0_i32, %c0_i32_0 : i32, i32, i32
  }
}

</mosaic_0001>

<llo_original>
// kernel: dfn_forward.1
$region0: #{dfn_forward.1}
  #allocation0 [shape = 'u32[]', space=smem, size = 0x4, offset = 0x4, fixed_abs, tag = 'smem constant byte address 0x4 - core index']
  #allocation1 [shape = 'u32[144,128]{1,0:T(1,128)}', space=vmem, size = 0x12000, scoped, tag = 'internal scratch']
  %s0 = inlined_call_operand.smem [shape: u32[31], index: -1, kind: input, shape index: {}]
  %s1 = sld [smem:[%s0]]
  %s2 = scalar_lea.smem %s0, 1
  %s3 = sld [smem:[%s2]]
  %s4 = scalar_lea.smem %s0, 2
  %s5 = sld [smem:[%s4]]
  %s6 = scalar_lea.smem %s0, 3
  %s7 = sld [smem:[%s6]]
  %s8 = scalar_lea.smem %s0, 4
  %s9 = sld [smem:[%s8]]
  %s10 = scalar_lea.smem %s0, 5
  %s11 = sld [smem:[%s10]]
  %s12 = scalar_lea.smem %s0, 6
  %s13 = sld [smem:[%s12]]
  %s14 = scalar_lea.smem %s0, 7
  %s15 = sld [smem:[%s14]]
  %s16 = scalar_lea.smem %s0, 8
  %s17 = sld [smem:[%s16]]
  %s18 = scalar_lea.smem %s0, 9
  %s19 = sld [smem:[%s18]]
  %s20 = scalar_lea.smem %s0, 10
  %s21 = sld [smem:[%s20]]
  %s22 = scalar_lea.smem %s0, 11
  %s23 = sld [smem:[%s22]]
  %s24 = scalar_lea.smem %s0, 12
  %s25 = sld [smem:[%s24]]
  %s26 = scalar_lea.smem %s0, 13
  %s27 = sld [smem:[%s26]]
  %s28 = scalar_lea.smem %s0, 14
  %s29 = sld [smem:[%s28]]
  %s30 = scalar_lea.smem %s0, 15
  %s31 = sld [smem:[%s30]]
  %s32 = scalar_lea.smem %s0, 16
  %s33 = sld [smem:[%s32]]
  %s34 = scalar_lea.smem %s0, 17
  %s35 = sld [smem:[%s34]]
  %s36 = scalar_lea.smem %s0, 18
  %s37 = sld [smem:[%s36]]
  %s38 = scalar_lea.smem %s0, 19
  %s39 = sld [smem:[%s38]]
  %s40 = scalar_lea.smem %s0, 20
  %s41 = sld [smem:[%s40]]
  %s42 = scalar_lea.smem %s0, 21
  %s43 = sld [smem:[%s42]]
  %s44 = scalar_lea.smem %s0, 22
  %s45 = sld [smem:[%s44]]
  %s46 = scalar_lea.smem %s0, 23
  %s47 = sld [smem:[%s46]]
  %s48 = scalar_lea.smem %s0, 24
  %s49 = sld [smem:[%s48]]
  %s50 = scalar_lea.smem %s0, 25
  %s51 = sld [smem:[%s50]]
  %s52 = scalar_lea.smem %s0, 26
  %s53 = sld [smem:[%s52]]
  %s54 = scalar_lea.smem %s0, 27
  %s55 = sld [smem:[%s54]]
  %s56 = scalar_lea.smem %s0, 28
  %s57 = sld [smem:[%s56]]
  %s58 = scalar_lea.smem %s0, 29
  %s59 = sld [smem:[%s58]]
  %s60 = scalar_lea.smem %s0, 30
  %s61 = sld [smem:[%s60]]
  %62 = xla_tuple %s57, %s59, %s61
  %s63 = sld [smem:[#allocation0]]
  $region161: #{dfn_forward.1} parent=0
    _
  %s65 = ssub.s32 1, %s63
  %s66 = scalar_select 0, %s65, %s63
  loop: start=0, step=1, limit=4
  $region2: #{dfn_forward.1} parent=0 // loop_pre_header
    _
  $region3: #{dfn_forward.1} parent=0 // loop_header
    %s68 = sphi 0, %s72
    %p69 = scmp.ge.s32.totalorder %s68, 4
    %s78 = sphi 0, %s80
    %s81 = sphi 0, %s78
    %s82 = sphi 0, %s81
    %s98 = sphi 0, %s82
    %s104 = sphi 0, %s106
    %s107 = sphi 0, %s104
    %s108 = sphi 0, %s107
    %s124 = sphi 0, %s108
    %s130 = sphi 0, %s132
    %s133 = sphi 0, %s130
    %s134 = sphi 0, %s133
    %s150 = sphi 0, %s134
    %s154 = sphi 0, %s154
    %s156 = sphi 0, %s154
    %s157 = sphi 0, %s156
    %s171 = sphi 0, %s157
    %s175 = sphi 0, %s175
    %s177 = sphi 0, %s175
    %s178 = sphi 0, %s177
    %s192 = sphi 0, %s178
    %s196 = sphi 0, %s196
    %s198 = sphi 0, %s196
    %s199 = sphi 0, %s198
    %s213 = sphi 0, %s199
    %s217 = sphi 0, %s217
    %s219 = sphi 0, %s217
    %s220 = sphi 0, %s219
    %s234 = sphi 0, %s220
    %s238 = sphi 0, %s238
    %s240 = sphi 0, %s238
    %s241 = sphi 0, %s240
    %s255 = sphi 0, %s241
    %s259 = sphi 0, %s259
    %s261 = sphi 0, %s259
    %s262 = sphi 0, %s261
    %s276 = sphi 0, %s262
    %s280 = sphi 0, %s280
    %s282 = sphi 0, %s280
    %s283 = sphi 0, %s282
    %s297 = sphi 0, %s283
    %s301 = sphi 0, %s301
    %s303 = sphi 0, %s301
    %s304 = sphi 0, %s303
    %s318 = sphi 0, %s304
    %s322 = sphi 0, %s322
    %s324 = sphi 0, %s322
    %s325 = sphi 0, %s324
    %s339 = sphi 0, %s325
    %s343 = sphi 0, %s343
    %s345 = sphi 0, %s343
    %s346 = sphi 0, %s345
    %s360 = sphi 0, %s346
    %s364 = sphi 0, %s364
    %s366 = sphi 0, %s364
    %s367 = sphi 0, %s366
    %s381 = sphi 0, %s367
    %s385 = sphi 0, %s385
    %s387 = sphi 0, %s385
    %s388 = sphi 0, %s387
    %s402 = sphi 0, %s388
    %s406 = sphi 0, %s406
    %s408 = sphi 0, %s406
    %s409 = sphi 0, %s408
    %s423 = sphi 0, %s409
    %s427 = sphi 0, %s427
    %s429 = sphi 0, %s427
    %s430 = sphi 0, %s429
    %s444 = sphi 0, %s430
    %s448 = sphi 0, %s448
    %s450 = sphi 0, %s448
    %s451 = sphi 0, %s450
    %s465 = sphi 0, %s451
    %s469 = sphi 0, %s469
    %s471 = sphi 0, %s469
    %s472 = sphi 0, %s471
    %s486 = sphi 0, %s472
    %s490 = sphi 0, %s490
    %s492 = sphi 0, %s490
    %s493 = sphi 0, %s492
    %s507 = sphi 0, %s493
    %s511 = sphi 0, %s511
    %s513 = sphi 0, %s511
    %s514 = sphi 0, %s513
    %s528 = sphi 0, %s514
    %s532 = sphi 0, %s532
    %s534 = sphi 0, %s532
    %s535 = sphi 0, %s534
    %s549 = sphi 0, %s535
    %s553 = sphi 0, %s553
    %s555 = sphi 0, %s553
    %s556 = sphi 0, %s555
    %s570 = sphi 0, %s556
    %s574 = sphi 0, %s574
    %s576 = sphi 0, %s574
    %s577 = sphi 0, %s576
    %s591 = sphi 0, %s577
    %s595 = sphi 0, %s595
    %s597 = sphi 0, %s595
    %s598 = sphi 0, %s597
    %s612 = sphi 0, %s598
    %s616 = sphi 0, %s616
    %s618 = sphi 0, %s616
    %s619 = sphi 0, %s618
    %s633 = sphi 0, %s619
    %s637 = sphi 0, %s637
    %s639 = sphi 0, %s637
    %s640 = sphi 0, %s639
    %s654 = sphi 0, %s640
    %s658 = sphi 0, %s658
    %s660 = sphi 0, %s658
    %s661 = sphi 0, %s660
    %s675 = sphi 0, %s661
    %s681 = sphi 0, %s683
    %s684 = sphi 0, %s681
    %s685 = sphi 0, %s684
    %s701 = sphi 0, %s685
    %s707 = sphi 0, %s709
    %s710 = sphi 0, %s707
    %s711 = sphi 0, %s710
    %s727 = sphi 0, %s711
    %s733 = sphi 0, %s735
    %s736 = sphi 0, %s733
    %s737 = sphi 0, %s736
    %s753 = sphi 0, %s737
  $region4: #{dfn_forward.1} parent=0 // loop_header_branch
    %71 = sbr.rel (%p69) target = $region8
  $region5: #{dfn_forward.1} parent=0 // loop_body
    %s73 = ssub.s32 %s68, 1
    %s74 = ssub.s32 %s68, 2
    %s75 = sadd.s32 %s68, 1
    %s76 = ssub.s32 %s68, %s75
    %p77 = scmp.eq.s32.totalorder %s76, 0
    %s79 = sadd.s32 %s78, 1
    %s80 = scalar_select %p77, %s78, %s79
    %p83 = pneg %p77
    %p84 = scmp.eq.s32.totalorder %s68, 1
    %p85 = por %p83, %p84
    %p86 = scmp.ne.s32.totalorder %s78, %s81
    %p87 = scmp.eq.s32.totalorder %s68, 0
    %p88 = por %p86, %p87
    %p89 = scmp.ne.s32.totalorder %s78, %s81
    %p90 = scmp.eq.s32.totalorder %s73, 1
    %p91 = por %p89, %p90
    %p92 = scmp.ne.s32.totalorder %s81, %s82
    %p93 = scmp.eq.s32.totalorder %s73, 0
    %p94 = por %p92, %p93
    %p95 = scmp.ne.s32.totalorder %s81, %s82
    %p96 = scmp.eq.s32.totalorder %s74, 1
    %p97 = por %p95, %p96
    %p99 = scmp.ne.s32.totalorder %s82, %s98
    %p100 = scmp.eq.s32.totalorder %s74, 0
    %p101 = por %p99, %p100
    %s102 = ssub.s32 %s68, %s75
    %p103 = scmp.eq.s32.totalorder %s102, 0
    %s105 = sadd.s32 %s104, 1
    %s106 = scalar_select %p103, %s104, %s105
    %p109 = pneg %p103
    %p110 = scmp.eq.s32.totalorder %s68, 1
    %p111 = por %p109, %p110
    %p112 = scmp.ne.s32.totalorder %s104, %s107
    %p113 = scmp.eq.s32.totalorder %s68, 0
    %p114 = por %p112, %p113
    %p115 = scmp.ne.s32.totalorder %s104, %s107
    %p116 = scmp.eq.s32.totalorder %s73, 1
    %p117 = por %p115, %p116
    %p118 = scmp.ne.s32.totalorder %s107, %s108
    %p119 = scmp.eq.s32.totalorder %s73, 0
    %p120 = por %p118, %p119
    %p121 = scmp.ne.s32.totalorder %s107, %s108
    %p122 = scmp.eq.s32.totalorder %s74, 1
    %p123 = por %p121, %p122
    %p125 = scmp.ne.s32.totalorder %s108, %s124
    %p126 = scmp.eq.s32.totalorder %s74, 0
    %p127 = por %p125, %p126
    %s128 = ssub.s32 %s68, %s75
    %p129 = scmp.eq.s32.totalorder %s128, 0
    %s131 = sadd.s32 %s130, 1
    %s132 = scalar_select %p129, %s130, %s131
    %p135 = pneg %p129
    %p136 = scmp.eq.s32.totalorder %s68, 1
    %p137 = por %p135, %p136
    %p138 = scmp.ne.s32.totalorder %s130, %s133
    %p139 = scmp.eq.s32.totalorder %s68, 0
    %p140 = por %p138, %p139
    %p141 = scmp.ne.s32.totalorder %s130, %s133
    %p142 = scmp.eq.s32.totalorder %s73, 1
    %p143 = por %p141, %p142
    %p144 = scmp.ne.s32.totalorder %s133, %s134
    %p145 = scmp.eq.s32.totalorder %s73, 0
    %p146 = por %p144, %p145
    %p147 = scmp.ne.s32.totalorder %s133, %s134
    %p148 = scmp.eq.s32.totalorder %s74, 1
    %p149 = por %p147, %p148
    %p151 = scmp.ne.s32.totalorder %s134, %s150
    %p152 = scmp.eq.s32.totalorder %s74, 0
    %p153 = por %p151, %p152
    %s155 = sadd.s32 %s154, 1
    %p158 = scmp.eq.s32.totalorder %s68, 1
    %p159 = scmp.ne.s32.totalorder %s154, %s156
    %p160 = scmp.eq.s32.totalorder %s68, 0
    %p161 = por %p159, %p160
    %p162 = scmp.ne.s32.totalorder %s154, %s156
    %p163 = scmp.eq.s32.totalorder %s73, 1
    %p164 = por %p162, %p163
    %p165 = scmp.ne.s32.totalorder %s156, %s157
    %p166 = scmp.eq.s32.totalorder %s73, 0
    %p167 = por %p165, %p166
    %p168 = scmp.ne.s32.totalorder %s156, %s157
    %p169 = scmp.eq.s32.totalorder %s74, 1
    %p170 = por %p168, %p169
    %p172 = scmp.ne.s32.totalorder %s157, %s171
    %p173 = scmp.eq.s32.totalorder %s74, 0
    %p174 = por %p172, %p173
    %s176 = sadd.s32 %s175, 1
    %p179 = scmp.eq.s32.totalorder %s68, 1
    %p180 = scmp.ne.s32.totalorder %s175, %s177
    %p181 = scmp.eq.s32.totalorder %s68, 0
    %p182 = por %p180, %p181
    %p183 = scmp.ne.s32.totalorder %s175, %s177
    %p184 = scmp.eq.s32.totalorder %s73, 1
    %p185 = por %p183, %p184
    %p186 = scmp.ne.s32.totalorder %s177, %s178
    %p187 = scmp.eq.s32.totalorder %s73, 0
    %p188 = por %p186, %p187
    %p189 = scmp.ne.s32.totalorder %s177, %s178
    %p190 = scmp.eq.s32.totalorder %s74, 1
    %p191 = por %p189, %p190
    %p193 = scmp.ne.s32.totalorder %s178, %s192
    %p194 = scmp.eq.s32.totalorder %s74, 0
    %p195 = por %p193, %p194
    %s197 = sadd.s32 %s196, 1
    %p200 = scmp.eq.s32.totalorder %s68, 1
    %p201 = scmp.ne.s32.totalorder %s196, %s198
    %p202 = scmp.eq.s32.totalorder %s68, 0
    %p203 = por %p201, %p202
    %p204 = scmp.ne.s32.totalorder %s196, %s198
    %p205 = scmp.eq.s32.totalorder %s73, 1
    %p206 = por %p204, %p205
    %p207 = scmp.ne.s32.totalorder %s198, %s199
    %p208 = scmp.eq.s32.totalorder %s73, 0
    %p209 = por %p207, %p208
    %p210 = scmp.ne.s32.totalorder %s198, %s199
    %p211 = scmp.eq.s32.totalorder %s74, 1
    %p212 = por %p210, %p211
    %p214 = scmp.ne.s32.totalorder %s199, %s213
    %p215 = scmp.eq.s32.totalorder %s74, 0
    %p216 = por %p214, %p215
    %s218 = sadd.s32 %s217, 1
    %p221 = scmp.eq.s32.totalorder %s68, 1
    %p222 = scmp.ne.s32.totalorder %s217, %s219
    %p223 = scmp.eq.s32.totalorder %s68, 0
    %p224 = por %p222, %p223
    %p225 = scmp.ne.s32.totalorder %s217, %s219
    %p226 = scmp.eq.s32.totalorder %s73, 1
    %p227 = por %p225, %p226
    %p228 = scmp.ne.s32.totalorder %s219, %s220
    %p229 = scmp.eq.s32.totalorder %s73, 0
    %p230 = por %p228, %p229
    %p231 = scmp.ne.s32.totalorder %s219, %s220
    %p232 = scmp.eq.s32.totalorder %s74, 1
    %p233 = por %p231, %p232
    %p235 = scmp.ne.s32.totalorder %s220, %s234
    %p236 = scmp.eq.s32.totalorder %s74, 0
    %p237 = por %p235, %p236
    %s239 = sadd.s32 %s238, 1
    %p242 = scmp.eq.s32.totalorder %s68, 1
    %p243 = scmp.ne.s32.totalorder %s238, %s240
    %p244 = scmp.eq.s32.totalorder %s68, 0
    %p245 = por %p243, %p244
    %p246 = scmp.ne.s32.totalorder %s238, %s240
    %p247 = scmp.eq.s32.totalorder %s73, 1
    %p248 = por %p246, %p247
    %p249 = scmp.ne.s32.totalorder %s240, %s241
    %p250 = scmp.eq.s32.totalorder %s73, 0
    %p251 = por %p249, %p250
    %p252 = scmp.ne.s32.totalorder %s240, %s241
    %p253 = scmp.eq.s32.totalorder %s74, 1
    %p254 = por %p252, %p253
    %p256 = scmp.ne.s32.totalorder %s241, %s255
    %p257 = scmp.eq.s32.totalorder %s74, 0
    %p258 = por %p256, %p257
    %s260 = sadd.s32 %s259, 1
    %p263 = scmp.eq.s32.totalorder %s68, 1
    %p264 = scmp.ne.s32.totalorder %s259, %s261
    %p265 = scmp.eq.s32.totalorder %s68, 0
    %p266 = por %p264, %p265
    %p267 = scmp.ne.s32.totalorder %s259, %s261
    %p268 = scmp.eq.s32.totalorder %s73, 1
    %p269 = por %p267, %p268
    %p270 = scmp.ne.s32.totalorder %s261, %s262
    %p271 = scmp.eq.s32.totalorder %s73, 0
    %p272 = por %p270, %p271
    %p273 = scmp.ne.s32.totalorder %s261, %s262
    %p274 = scmp.eq.s32.totalorder %s74, 1
    %p275 = por %p273, %p274
    %p277 = scmp.ne.s32.totalorder %s262, %s276
    %p278 = scmp.eq.s32.totalorder %s74, 0
    %p279 = por %p277, %p278
    %s281 = sadd.s32 %s280, 1
    %p284 = scmp.eq.s32.totalorder %s68, 1
    %p285 = scmp.ne.s32.totalorder %s280, %s282
    %p286 = scmp.eq.s32.totalorder %s68, 0
    %p287 = por %p285, %p286
    %p288 = scmp.ne.s32.totalorder %s280, %s282
    %p289 = scmp.eq.s32.totalorder %s73, 1
    %p290 = por %p288, %p289
    %p291 = scmp.ne.s32.totalorder %s282, %s283
    %p292 = scmp.eq.s32.totalorder %s73, 0
    %p293 = por %p291, %p292
    %p294 = scmp.ne.s32.totalorder %s282, %s283
    %p295 = scmp.eq.s32.totalorder %s74, 1
    %p296 = por %p294, %p295
    %p298 = scmp.ne.s32.totalorder %s283, %s297
    %p299 = scmp.eq.s32.totalorder %s74, 0
    %p300 = por %p298, %p299
    %s302 = sadd.s32 %s301, 1
    %p305 = scmp.eq.s32.totalorder %s68, 1
    %p306 = scmp.ne.s32.totalorder %s301, %s303
    %p307 = scmp.eq.s32.totalorder %s68, 0
    %p308 = por %p306, %p307
    %p309 = scmp.ne.s32.totalorder %s301, %s303
    %p310 = scmp.eq.s32.totalorder %s73, 1
    %p311 = por %p309, %p310
    %p312 = scmp.ne.s32.totalorder %s303, %s304
    %p313 = scmp.eq.s32.totalorder %s73, 0
    %p314 = por %p312, %p313
    %p315 = scmp.ne.s32.totalorder %s303, %s304
    %p316 = scmp.eq.s32.totalorder %s74, 1
    %p317 = por %p315, %p316
    %p319 = scmp.ne.s32.totalorder %s304, %s318
    %p320 = scmp.eq.s32.totalorder %s74, 0
    %p321 = por %p319, %p320
    %s323 = sadd.s32 %s322, 1
    %p326 = scmp.eq.s32.totalorder %s68, 1
    %p327 = scmp.ne.s32.totalorder %s322, %s324
    %p328 = scmp.eq.s32.totalorder %s68, 0
    %p329 = por %p327, %p328
    %p330 = scmp.ne.s32.totalorder %s322, %s324
    %p331 = scmp.eq.s32.totalorder %s73, 1
    %p332 = por %p330, %p331
    %p333 = scmp.ne.s32.totalorder %s324, %s325
    %p334 = scmp.eq.s32.totalorder %s73, 0
    %p335 = por %p333, %p334
    %p336 = scmp.ne.s32.totalorder %s324, %s325
    %p337 = scmp.eq.s32.totalorder %s74, 1
    %p338 = por %p336, %p337
    %p340 = scmp.ne.s32.totalorder %s325, %s339
    %p341 = scmp.eq.s32.totalorder %s74, 0
    %p342 = por %p340, %p341
    %s344 = sadd.s32 %s343, 1
    %p347 = scmp.eq.s32.totalorder %s68, 1
    %p348 = scmp.ne.s32.totalorder %s343, %s345
    %p349 = scmp.eq.s32.totalorder %s68, 0
    %p350 = por %p348, %p349
    %p351 = scmp.ne.s32.totalorder %s343, %s345
    %p352 = scmp.eq.s32.totalorder %s73, 1
    %p353 = por %p351, %p352
    %p354 = scmp.ne.s32.totalorder %s345, %s346
    %p355 = scmp.eq.s32.totalorder %s73, 0
    %p356 = por %p354, %p355
    %p357 = scmp.ne.s32.totalorder %s345, %s346
    %p358 = scmp.eq.s32.totalorder %s74, 1
    %p359 = por %p357, %p358
    %p361 = scmp.ne.s32.totalorder %s346, %s360
    %p362 = scmp.eq.s32.totalorder %s74, 0
    %p363 = por %p361, %p362
    %s365 = sadd.s32 %s364, 1
    %p368 = scmp.eq.s32.totalorder %s68, 1
    %p369 = scmp.ne.s32.totalorder %s364, %s366
    %p370 = scmp.eq.s32.totalorder %s68, 0
    %p371 = por %p369, %p370
    %p372 = scmp.ne.s32.totalorder %s364, %s366
    %p373 = scmp.eq.s32.totalorder %s73, 1
    %p374 = por %p372, %p373
    %p375 = scmp.ne.s32.totalorder %s366, %s367
    %p376 = scmp.eq.s32.totalorder %s73, 0
    %p377 = por %p375, %p376
    %p378 = scmp.ne.s32.totalorder %s366, %s367
    %p379 = scmp.eq.s32.totalorder %s74, 1
    %p380 = por %p378, %p379
    %p382 = scmp.ne.s32.totalorder %s367, %s381
    %p383 = scmp.eq.s32.totalorder %s74, 0
    %p384 = por %p382, %p383
    %s386 = sadd.s32 %s385, 1
    %p389 = scmp.eq.s32.totalorder %s68, 1
    %p390 = scmp.ne.s32.totalorder %s385, %s387
    %p391 = scmp.eq.s32.totalorder %s68, 0
    %p392 = por %p390, %p391
    %p393 = scmp.ne.s32.totalorder %s385, %s387
    %p394 = scmp.eq.s32.totalorder %s73, 1
    %p395 = por %p393, %p394
    %p396 = scmp.ne.s32.totalorder %s387, %s388
    %p397 = scmp.eq.s32.totalorder %s73, 0
    %p398 = por %p396, %p397
    %p399 = scmp.ne.s32.totalorder %s387, %s388
    %p400 = scmp.eq.s32.totalorder %s74, 1
    %p401 = por %p399, %p400
    %p403 = scmp.ne.s32.totalorder %s388, %s402
    %p404 = scmp.eq.s32.totalorder %s74, 0
    %p405 = por %p403, %p404
    %s407 = sadd.s32 %s406, 1
    %p410 = scmp.eq.s32.totalorder %s68, 1
    %p411 = scmp.ne.s32.totalorder %s406, %s408
    %p412 = scmp.eq.s32.totalorder %s68, 0
    %p413 = por %p411, %p412
    %p414 = scmp.ne.s32.totalorder %s406, %s408
    %p415 = scmp.eq.s32.totalorder %s73, 1
    %p416 = por %p414, %p415
    %p417 = scmp.ne.s32.totalorder %s408, %s409
    %p418 = scmp.eq.s32.totalorder %s73, 0
    %p419 = por %p417, %p418
    %p420 = scmp.ne.s32.totalorder %s408, %s409
    %p421 = scmp.eq.s32.totalorder %s74, 1
    %p422 = por %p420, %p421
    %p424 = scmp.ne.s32.totalorder %s409, %s423
    %p425 = scmp.eq.s32.totalorder %s74, 0
    %p426 = por %p424, %p425
    %s428 = sadd.s32 %s427, 1
    %p431 = scmp.eq.s32.totalorder %s68, 1
    %p432 = scmp.ne.s32.totalorder %s427, %s429
    %p433 = scmp.eq.s32.totalorder %s68, 0
    %p434 = por %p432, %p433
    %p435 = scmp.ne.s32.totalorder %s427, %s429
    %p436 = scmp.eq.s32.totalorder %s73, 1
    %p437 = por %p435, %p436
    %p438 = scmp.ne.s32.totalorder %s429, %s430
    %p439 = scmp.eq.s32.totalorder %s73, 0
    %p440 = por %p438, %p439
    %p441 = scmp.ne.s32.totalorder %s429, %s430
    %p442 = scmp.eq.s32.totalorder %s74, 1
    %p443 = por %p441, %p442
    %p445 = scmp.ne.s32.totalorder %s430, %s444
    %p446 = scmp.eq.s32.totalorder %s74, 0
    %p447 = por %p445, %p446
    %s449 = sadd.s32 %s448, 1
    %p452 = scmp.eq.s32.totalorder %s68, 1
    %p453 = scmp.ne.s32.totalorder %s448, %s450
    %p454 = scmp.eq.s32.totalorder %s68, 0
    %p455 = por %p453, %p454
    %p456 = scmp.ne.s32.totalorder %s448, %s450
    %p457 = scmp.eq.s32.totalorder %s73, 1
    %p458 = por %p456, %p457
    %p459 = scmp.ne.s32.totalorder %s450, %s451
    %p460 = scmp.eq.s32.totalorder %s73, 0
    %p461 = por %p459, %p460
    %p462 = scmp.ne.s32.totalorder %s450, %s451
    %p463 = scmp.eq.s32.totalorder %s74, 1
    %p464 = por %p462, %p463
    %p466 = scmp.ne.s32.totalorder %s451, %s465
    %p467 = scmp.eq.s32.totalorder %s74, 0
    %p468 = por %p466, %p467
    %s470 = sadd.s32 %s469, 1
    %p473 = scmp.eq.s32.totalorder %s68, 1
    %p474 = scmp.ne.s32.totalorder %s469, %s471
    %p475 = scmp.eq.s32.totalorder %s68, 0
    %p476 = por %p474, %p475
    %p477 = scmp.ne.s32.totalorder %s469, %s471
    %p478 = scmp.eq.s32.totalorder %s73, 1
    %p479 = por %p477, %p478
    %p480 = scmp.ne.s32.totalorder %s471, %s472
    %p481 = scmp.eq.s32.totalorder %s73, 0
    %p482 = por %p480, %p481
    %p483 = scmp.ne.s32.totalorder %s471, %s472
    %p484 = scmp.eq.s32.totalorder %s74, 1
    %p485 = por %p483, %p484
    %p487 = scmp.ne.s32.totalorder %s472, %s486
    %p488 = scmp.eq.s32.totalorder %s74, 0
    %p489 = por %p487, %p488
    %s491 = sadd.s32 %s490, 1
    %p494 = scmp.eq.s32.totalorder %s68, 1
    %p495 = scmp.ne.s32.totalorder %s490, %s492
    %p496 = scmp.eq.s32.totalorder %s68, 0
    %p497 = por %p495, %p496
    %p498 = scmp.ne.s32.totalorder %s490, %s492
    %p499 = scmp.eq.s32.totalorder %s73, 1
    %p500 = por %p498, %p499
    %p501 = scmp.ne.s32.totalorder %s492, %s493
    %p502 = scmp.eq.s32.totalorder %s73, 0
    %p503 = por %p501, %p502
    %p504 = scmp.ne.s32.totalorder %s492, %s493
    %p505 = scmp.eq.s32.totalorder %s74, 1
    %p506 = por %p504, %p505
    %p508 = scmp.ne.s32.totalorder %s493, %s507
    %p509 = scmp.eq.s32.totalorder %s74, 0
    %p510 = por %p508, %p509
    %s512 = sadd.s32 %s511, 1
    %p515 = scmp.eq.s32.totalorder %s68, 1
    %p516 = scmp.ne.s32.totalorder %s511, %s513
    %p517 = scmp.eq.s32.totalorder %s68, 0
    %p518 = por %p516, %p517
    %p519 = scmp.ne.s32.totalorder %s511, %s513
    %p520 = scmp.eq.s32.totalorder %s73, 1
    %p521 = por %p519, %p520
    %p522 = scmp.ne.s32.totalorder %s513, %s514
    %p523 = scmp.eq.s32.totalorder %s73, 0
    %p524 = por %p522, %p523
    %p525 = scmp.ne.s32.totalorder %s513, %s514
    %p526 = scmp.eq.s32.totalorder %s74, 1
    %p527 = por %p525, %p526
    %p529 = scmp.ne.s32.totalorder %s514, %s528
    %p530 = scmp.eq.s32.totalorder %s74, 0
    %p531 = por %p529, %p530
    %s533 = sadd.s32 %s532, 1
    %p536 = scmp.eq.s32.totalorder %s68, 1
    %p537 = scmp.ne.s32.totalorder %s532, %s534
    %p538 = scmp.eq.s32.totalorder %s68, 0
    %p539 = por %p537, %p538
    %p540 = scmp.ne.s32.totalorder %s532, %s534
    %p541 = scmp.eq.s32.totalorder %s73, 1
    %p542 = por %p540, %p541
    %p543 = scmp.ne.s32.totalorder %s534, %s535
    %p544 = scmp.eq.s32.totalorder %s73, 0
    %p545 = por %p543, %p544
    %p546 = scmp.ne.s32.totalorder %s534, %s535
    %p547 = scmp.eq.s32.totalorder %s74, 1
    %p548 = por %p546, %p547
    %p550 = scmp.ne.s32.totalorder %s535, %s549
    %p551 = scmp.eq.s32.totalorder %s74, 0
    %p552 = por %p550, %p551
    %s554 = sadd.s32 %s553, 1
    %p557 = scmp.eq.s32.totalorder %s68, 1
    %p558 = scmp.ne.s32.totalorder %s553, %s555
    %p559 = scmp.eq.s32.totalorder %s68, 0
    %p560 = por %p558, %p559
    %p561 = scmp.ne.s32.totalorder %s553, %s555
    %p562 = scmp.eq.s32.totalorder %s73, 1
    %p563 = por %p561, %p562
    %p564 = scmp.ne.s32.totalorder %s555, %s556
    %p565 = scmp.eq.s32.totalorder %s73, 0
    %p566 = por %p564, %p565
    %p567 = scmp.ne.s32.totalorder %s555, %s556
    %p568 = scmp.eq.s32.totalorder %s74, 1
    %p569 = por %p567, %p568
    %p571 = scmp.ne.s32.totalorder %s556, %s570
    %p572 = scmp.eq.s32.totalorder %s74, 0
    %p573 = por %p571, %p572
    %s575 = sadd.s32 %s574, 1
    %p578 = scmp.eq.s32.totalorder %s68, 1
    %p579 = scmp.ne.s32.totalorder %s574, %s576
    %p580 = scmp.eq.s32.totalorder %s68, 0
    %p581 = por %p579, %p580
    %p582 = scmp.ne.s32.totalorder %s574, %s576
    %p583 = scmp.eq.s32.totalorder %s73, 1
    %p584 = por %p582, %p583
    %p585 = scmp.ne.s32.totalorder %s576, %s577
    %p586 = scmp.eq.s32.totalorder %s73, 0
    %p587 = por %p585, %p586
    %p588 = scmp.ne.s32.totalorder %s576, %s577
    %p589 = scmp.eq.s32.totalorder %s74, 1
    %p590 = por %p588, %p589
    %p592 = scmp.ne.s32.totalorder %s577, %s591
    %p593 = scmp.eq.s32.totalorder %s74, 0
    %p594 = por %p592, %p593
    %s596 = sadd.s32 %s595, 1
    %p599 = scmp.eq.s32.totalorder %s68, 1
    %p600 = scmp.ne.s32.totalorder %s595, %s597
    %p601 = scmp.eq.s32.totalorder %s68, 0
    %p602 = por %p600, %p601
    %p603 = scmp.ne.s32.totalorder %s595, %s597
    %p604 = scmp.eq.s32.totalorder %s73, 1
    %p605 = por %p603, %p604
    %p606 = scmp.ne.s32.totalorder %s597, %s598
    %p607 = scmp.eq.s32.totalorder %s73, 0
    %p608 = por %p606, %p607
    %p609 = scmp.ne.s32.totalorder %s597, %s598
    %p610 = scmp.eq.s32.totalorder %s74, 1
    %p611 = por %p609, %p610
    %p613 = scmp.ne.s32.totalorder %s598, %s612
    %p614 = scmp.eq.s32.totalorder %s74, 0
    %p615 = por %p613, %p614
    %s617 = sadd.s32 %s616, 1
    %p620 = scmp.eq.s32.totalorder %s68, 1
    %p621 = scmp.ne.s32.totalorder %s616, %s618
    %p622 = scmp.eq.s32.totalorder %s68, 0
    %p623 = por %p621, %p622
    %p624 = scmp.ne.s32.totalorder %s616, %s618
    %p625 = scmp.eq.s32.totalorder %s73, 1
    %p626 = por %p624, %p625
    %p627 = scmp.ne.s32.totalorder %s618, %s619
    %p628 = scmp.eq.s32.totalorder %s73, 0
    %p629 = por %p627, %p628
    %p630 = scmp.ne.s32.totalorder %s618, %s619
    %p631 = scmp.eq.s32.totalorder %s74, 1
    %p632 = por %p630, %p631
    %p634 = scmp.ne.s32.totalorder %s619, %s633
    %p635 = scmp.eq.s32.totalorder %s74, 0
    %p636 = por %p634, %p635
    %s638 = sadd.s32 %s637, 1
    %p641 = scmp.eq.s32.totalorder %s68, 1
    %p642 = scmp.ne.s32.totalorder %s637, %s639
    %p643 = scmp.eq.s32.totalorder %s68, 0
    %p644 = por %p642, %p643
    %p645 = scmp.ne.s32.totalorder %s637, %s639
    %p646 = scmp.eq.s32.totalorder %s73, 1
    %p647 = por %p645, %p646
    %p648 = scmp.ne.s32.totalorder %s639, %s640
    %p649 = scmp.eq.s32.totalorder %s73, 0
    %p650 = por %p648, %p649
    %p651 = scmp.ne.s32.totalorder %s639, %s640
    %p652 = scmp.eq.s32.totalorder %s74, 1
    %p653 = por %p651, %p652
    %p655 = scmp.ne.s32.totalorder %s640, %s654
    %p656 = scmp.eq.s32.totalorder %s74, 0
    %p657 = por %p655, %p656
    %s659 = sadd.s32 %s658, 1
    %p662 = scmp.eq.s32.totalorder %s68, 1
    %p663 = scmp.ne.s32.totalorder %s658, %s660
    %p664 = scmp.eq.s32.totalorder %s68, 0
    %p665 = por %p663, %p664
    %p666 = scmp.ne.s32.totalorder %s658, %s660
    %p667 = scmp.eq.s32.totalorder %s73, 1
    %p668 = por %p666, %p667
    %p669 = scmp.ne.s32.totalorder %s660, %s661
    %p670 = scmp.eq.s32.totalorder %s73, 0
    %p671 = por %p669, %p670
    %p672 = scmp.ne.s32.totalorder %s660, %s661
    %p673 = scmp.eq.s32.totalorder %s74, 1
    %p674 = por %p672, %p673
    %p676 = scmp.ne.s32.totalorder %s661, %s675
    %p677 = scmp.eq.s32.totalorder %s74, 0
    %p678 = por %p676, %p677
    %s679 = ssub.s32 %s68, %s75
    %p680 = scmp.eq.s32.totalorder %s679, 0
    %s682 = sadd.s32 %s681, 1
    %s683 = scalar_select %p680, %s681, %s682
    %p686 = pneg %p680
    %p687 = scmp.eq.s32.totalorder %s68, 1
    %p688 = por %p686, %p687
    %p689 = scmp.ne.s32.totalorder %s681, %s684
    %p690 = scmp.eq.s32.totalorder %s68, 0
    %p691 = por %p689, %p690
    %p692 = scmp.ne.s32.totalorder %s681, %s684
    %p693 = scmp.eq.s32.totalorder %s73, 1
    %p694 = por %p692, %p693
    %p695 = scmp.ne.s32.totalorder %s684, %s685
    %p696 = scmp.eq.s32.totalorder %s73, 0
    %p697 = por %p695, %p696
    %p698 = scmp.ne.s32.totalorder %s684, %s685
    %p699 = scmp.eq.s32.totalorder %s74, 1
    %p700 = por %p698, %p699
    %p702 = scmp.ne.s32.totalorder %s685, %s701
    %p703 = scmp.eq.s32.totalorder %s74, 0
    %p704 = por %p702, %p703
    %s705 = ssub.s32 %s68, %s75
    %p706 = scmp.eq.s32.totalorder %s705, 0
    %s708 = sadd.s32 %s707, 1
    %s709 = scalar_select %p706, %s707, %s708
    %p712 = pneg %p706
    %p713 = scmp.eq.s32.totalorder %s68, 1
    %p714 = por %p712, %p713
    %p715 = scmp.ne.s32.totalorder %s707, %s710
    %p716 = scmp.eq.s32.totalorder %s68, 0
    %p717 = por %p715, %p716
    %p718 = scmp.ne.s32.totalorder %s707, %s710
    %p719 = scmp.eq.s32.totalorder %s73, 1
    %p720 = por %p718, %p719
    %p721 = scmp.ne.s32.totalorder %s710, %s711
    %p722 = scmp.eq.s32.totalorder %s73, 0
    %p723 = por %p721, %p722
    %p724 = scmp.ne.s32.totalorder %s710, %s711
    %p725 = scmp.eq.s32.totalorder %s74, 1
    %p726 = por %p724, %p725
    %p728 = scmp.ne.s32.totalorder %s711, %s727
    %p729 = scmp.eq.s32.totalorder %s74, 0
    %p730 = por %p728, %p729
    %s731 = ssub.s32 %s68, %s75
    %p732 = scmp.eq.s32.totalorder %s731, 0
    %s734 = sadd.s32 %s733, 1
    %s735 = scalar_select %p732, %s733, %s734
    %p738 = pneg %p732
    %p739 = scmp.eq.s32.totalorder %s68, 1
    %p740 = por %p738, %p739
    %p741 = scmp.ne.s32.totalorder %s733, %s736
    %p742 = scmp.eq.s32.totalorder %s68, 0
    %p743 = por %p741, %p742
    %p744 = scmp.ne.s32.totalorder %s733, %s736
    %p745 = scmp.eq.s32.totalorder %s73, 1
    %p746 = por %p744, %p745
    %p747 = scmp.ne.s32.totalorder %s736, %s737
    %p748 = scmp.eq.s32.totalorder %s73, 0
    %p749 = por %p747, %p748
    %p750 = scmp.ne.s32.totalorder %s736, %s737
    %p751 = scmp.eq.s32.totalorder %s74, 1
    %p752 = por %p750, %p751
    %p754 = scmp.ne.s32.totalorder %s737, %s753
    %p755 = scmp.eq.s32.totalorder %s74, 0
    %p756 = por %p754, %p755
    %p757 = scmp.le.s32.totalorder 1, %s68
    %p758 = scmp.lt.s32.totalorder %s68, 3
    %p759 = pnand %p757, %p758
    %p760 = pneg %p759
    // Predicated region
    $region9: #{dfn_forward.1} parent=5 // pred_check
      _
    $region10: #{dfn_forward.1} parent=5 // pred_check_branch
      %762 = sbr.rel (%p759) target = $region12
    $region11: #{dfn_forward.1} parent=5 // pred_region
      %s763 = ssub.s32 %s68, 1
      // Predicated region
      $region13: #{dfn_forward.1} parent=11 // pred_check
        %p764 = pneg %p167
      $region14: #{dfn_forward.1} parent=11 // pred_check_branch
        %766 = sbr.rel (%p764) target = $region16
      $region15: #{dfn_forward.1} parent=11 // pred_region
        _
      $region16: #{dfn_forward.1} parent=11 // pred_fallthru
        _
      // Predicated region
      $region17: #{dfn_forward.1} parent=11 // pred_check
        %p767 = pneg %p188
      $region18: #{dfn_forward.1} parent=11 // pred_check_branch
        %769 = sbr.rel (%p767) target = $region20
      $region19: #{dfn_forward.1} parent=11 // pred_region
        _
      $region20: #{dfn_forward.1} parent=11 // pred_fallthru
        _
      // Predicated region
      $region21: #{dfn_forward.1} parent=11 // pred_check
        %p770 = pneg %p209
      $region22: #{dfn_forward.1} parent=11 // pred_check_branch
        %772 = sbr.rel (%p770) target = $region24
      $region23: #{dfn_forward.1} parent=11 // pred_region
        _
      $region24: #{dfn_forward.1} parent=11 // pred_fallthru
        _
      // Predicated region
      $region25: #{dfn_forward.1} parent=11 // pred_check
        %p773 = pneg %p230
      $region26: #{dfn_forward.1} parent=11 // pred_check_branch
        %775 = sbr.rel (%p773) target = $region28
      $region27: #{dfn_forward.1} parent=11 // pred_region
        _
      $region28: #{dfn_forward.1} parent=11 // pred_fallthru
        _
      // Predicated region
      $region29: #{dfn_forward.1} parent=11 // pred_check
        %p776 = pneg %p251
      $region30: #{dfn_forward.1} parent=11 // pred_check_branch
        %778 = sbr.rel (%p776) target = $region32
      $region31: #{dfn_forward.1} parent=11 // pred_region
        _
      $region32: #{dfn_forward.1} parent=11 // pred_fallthru
        _
      // Predicated region
      $region33: #{dfn_forward.1} parent=11 // pred_check
        %p779 = pneg %p272
      $region34: #{dfn_forward.1} parent=11 // pred_check_branch
        %781 = sbr.rel (%p779) target = $region36
      $region35: #{dfn_forward.1} parent=11 // pred_region
        _
      $region36: #{dfn_forward.1} parent=11 // pred_fallthru
        _
      // Predicated region
      $region37: #{dfn_forward.1} parent=11 // pred_check
        %p782 = pneg %p293
      $region38: #{dfn_forward.1} parent=11 // pred_check_branch
        %784 = sbr.rel (%p782) target = $region40
      $region39: #{dfn_forward.1} parent=11 // pred_region
        _
      $region40: #{dfn_forward.1} parent=11 // pred_fallthru
        _
      // Predicated region
      $region41: #{dfn_forward.1} parent=11 // pred_check
        %p785 = pneg %p314
      $region42: #{dfn_forward.1} parent=11 // pred_check_branch
        %787 = sbr.rel (%p785) target = $region44
      $region43: #{dfn_forward.1} parent=11 // pred_region
        _
      $region44: #{dfn_forward.1} parent=11 // pred_fallthru
        _
      // Predicated region
      $region45: #{dfn_forward.1} parent=11 // pred_check
        %p788 = pneg %p335
      $region46: #{dfn_forward.1} parent=11 // pred_check_branch
        %790 = sbr.rel (%p788) target = $region48
      $region47: #{dfn_forward.1} parent=11 // pred_region
        _
      $region48: #{dfn_forward.1} parent=11 // pred_fallthru
        _
      // Predicated region
      $region49: #{dfn_forward.1} parent=11 // pred_check
        %p791 = pneg %p356
      $region50: #{dfn_forward.1} parent=11 // pred_check_branch
        %793 = sbr.rel (%p791) target = $region52
      $region51: #{dfn_forward.1} parent=11 // pred_region
        _
      $region52: #{dfn_forward.1} parent=11 // pred_fallthru
        _
      // Predicated region
      $region53: #{dfn_forward.1} parent=11 // pred_check
        %p794 = pneg %p377
      $region54: #{dfn_forward.1} parent=11 // pred_check_branch
        %796 = sbr.rel (%p794) target = $region56
      $region55: #{dfn_forward.1} parent=11 // pred_region
        _
      $region56: #{dfn_forward.1} parent=11 // pred_fallthru
        _
      // Predicated region
      $region57: #{dfn_forward.1} parent=11 // pred_check
        %p797 = pneg %p398
      $region58: #{dfn_forward.1} parent=11 // pred_check_branch
        %799 = sbr.rel (%p797) target = $region60
      $region59: #{dfn_forward.1} parent=11 // pred_region
        _
      $region60: #{dfn_forward.1} parent=11 // pred_fallthru
        _
      // Predicated region
      $region61: #{dfn_forward.1} parent=11 // pred_check
        %p800 = pneg %p419
      $region62: #{dfn_forward.1} parent=11 // pred_check_branch
        %802 = sbr.rel (%p800) target = $region64
      $region63: #{dfn_forward.1} parent=11 // pred_region
        _
      $region64: #{dfn_forward.1} parent=11 // pred_fallthru
        _
      // Predicated region
      $region65: #{dfn_forward.1} parent=11 // pred_check
        %p803 = pneg %p440
      $region66: #{dfn_forward.1} parent=11 // pred_check_branch
        %805 = sbr.rel (%p803) target = $region68
      $region67: #{dfn_forward.1} parent=11 // pred_region
        _
      $region68: #{dfn_forward.1} parent=11 // pred_fallthru
        _
      // Predicated region
      $region69: #{dfn_forward.1} parent=11 // pred_check
        %p806 = pneg %p461
      $region70: #{dfn_forward.1} parent=11 // pred_check_branch
        %808 = sbr.rel (%p806) target = $region72
      $region71: #{dfn_forward.1} parent=11 // pred_region
        _
      $region72: #{dfn_forward.1} parent=11 // pred_fallthru
        _
      // Predicated region
      $region73: #{dfn_forward.1} parent=11 // pred_check
        %p809 = pneg %p482
      $region74: #{dfn_forward.1} parent=11 // pred_check_branch
        %811 = sbr.rel (%p809) target = $region76
      $region75: #{dfn_forward.1} parent=11 // pred_region
        _
      $region76: #{dfn_forward.1} parent=11 // pred_fallthru
        _
      // Predicated region
      $region77: #{dfn_forward.1} parent=11 // pred_check
        %p812 = pneg %p503
      $region78: #{dfn_forward.1} parent=11 // pred_check_branch
        %814 = sbr.rel (%p812) target = $region80
      $region79: #{dfn_forward.1} parent=11 // pred_region
        _
      $region80: #{dfn_forward.1} parent=11 // pred_fallthru
        _
      // Predicated region
      $region81: #{dfn_forward.1} parent=11 // pred_check
        %p815 = pneg %p524
      $region82: #{dfn_forward.1} parent=11 // pred_check_branch
        %817 = sbr.rel (%p815) target = $region84
      $region83: #{dfn_forward.1} parent=11 // pred_region
        _
      $region84: #{dfn_forward.1} parent=11 // pred_fallthru
        _
      // Predicated region
      $region85: #{dfn_forward.1} parent=11 // pred_check
        %p818 = pneg %p545
      $region86: #{dfn_forward.1} parent=11 // pred_check_branch
        %820 = sbr.rel (%p818) target = $region88
      $region87: #{dfn_forward.1} parent=11 // pred_region
        _
      $region88: #{dfn_forward.1} parent=11 // pred_fallthru
        _
      // Predicated region
      $region89: #{dfn_forward.1} parent=11 // pred_check
        %p821 = pneg %p566
      $region90: #{dfn_forward.1} parent=11 // pred_check_branch
        %823 = sbr.rel (%p821) target = $region92
      $region91: #{dfn_forward.1} parent=11 // pred_region
        _
      $region92: #{dfn_forward.1} parent=11 // pred_fallthru
        _
      // Predicated region
      $region93: #{dfn_forward.1} parent=11 // pred_check
        %p824 = pneg %p587
      $region94: #{dfn_forward.1} parent=11 // pred_check_branch
        %826 = sbr.rel (%p824) target = $region96
      $region95: #{dfn_forward.1} parent=11 // pred_region
        _
      $region96: #{dfn_forward.1} parent=11 // pred_fallthru
        _
      // Predicated region
      $region97: #{dfn_forward.1} parent=11 // pred_check
        %p827 = pneg %p608
      $region98: #{dfn_forward.1} parent=11 // pred_check_branch
        %829 = sbr.rel (%p827) target = $region100
      $region99: #{dfn_forward.1} parent=11 // pred_region
        _
      $region100: #{dfn_forward.1} parent=11 // pred_fallthru
        _
      // Predicated region
      $region101: #{dfn_forward.1} parent=11 // pred_check
        %p830 = pneg %p629
      $region102: #{dfn_forward.1} parent=11 // pred_check_branch
        %832 = sbr.rel (%p830) target = $region104
      $region103: #{dfn_forward.1} parent=11 // pred_region
        _
      $region104: #{dfn_forward.1} parent=11 // pred_fallthru
        _
      // Predicated region
      $region105: #{dfn_forward.1} parent=11 // pred_check
        %p833 = pneg %p650
      $region106: #{dfn_forward.1} parent=11 // pred_check_branch
        %835 = sbr.rel (%p833) target = $region108
      $region107: #{dfn_forward.1} parent=11 // pred_region
        _
      $region108: #{dfn_forward.1} parent=11 // pred_fallthru
        _
      // Predicated region
      $region109: #{dfn_forward.1} parent=11 // pred_check
        %p836 = pneg %p671
      $region110: #{dfn_forward.1} parent=11 // pred_check_branch
        %838 = sbr.rel (%p836) target = $region112
      $region111: #{dfn_forward.1} parent=11 // pred_region
        _
      $region112: #{dfn_forward.1} parent=11 // pred_fallthru
        _
    $region12: #{dfn_forward.1} parent=5 // pred_fallthru
      _
    %p839 = scmp.lt.s32.totalorder %s68, 2
    // Predicated region
    $region113: #{dfn_forward.1} parent=5 // pred_check
      %p840 = pneg %p839
    $region114: #{dfn_forward.1} parent=5 // pred_check_branch
      %842 = sbr.rel (%p840) target = $region116
    $region115: #{dfn_forward.1} parent=5 // pred_region
      // Predicated region
      $region117: #{dfn_forward.1} parent=115 // pred_check
        %p843 = pneg %p88
      $region118: #{dfn_forward.1} parent=115 // pred_check_branch
        %845 = sbr.rel (%p843) target = $region120
      $region119: #{dfn_forward.1} parent=115 // pred_region
        %p846 = scmp.lt.s32.totalorder %s68, 1
        %s847 = scalar_select %p846, %s68, 1
        %s848 = smul.addr %s847, 2
        %s849 = smul.addr %s848, 8
        %s850 = scalar_lea.vmem %s1, %s849
      $region120: #{dfn_forward.1} parent=115 // pred_fallthru
        _
      // Predicated region
      $region121: #{dfn_forward.1} parent=115 // pred_check
        %p851 = pneg %p114
      $region122: #{dfn_forward.1} parent=115 // pred_check_branch
        %853 = sbr.rel (%p851) target = $region124
      $region123: #{dfn_forward.1} parent=115 // pred_region
        %p854 = scmp.lt.s32.totalorder %s68, 1
        %s855 = scalar_select %p854, %s68, 1
        %s856 = smul.addr %s855, 2
        %s857 = smul.addr %s856, 4
        %s858 = scalar_lea.vmem %s3, %s857
      $region124: #{dfn_forward.1} parent=115 // pred_fallthru
        _
      // Predicated region
      $region125: #{dfn_forward.1} parent=115 // pred_check
        %p859 = pneg %p140
      $region126: #{dfn_forward.1} parent=115 // pred_check_branch
        %861 = sbr.rel (%p859) target = $region128
      $region127: #{dfn_forward.1} parent=115 // pred_region
        %p862 = scmp.lt.s32.totalorder %s68, 1
        %s863 = scalar_select %p862, %s68, 1
        %s864 = smul.addr %s863, 8
        %s865 = smul.addr %s864, 8
        %s866 = scalar_lea.vmem %s5, %s865
      $region128: #{dfn_forward.1} parent=115 // pred_fallthru
        _
    $region116: #{dfn_forward.1} parent=5 // pred_fallthru
      _
    %p867 = scmp.le.s32.totalorder 1, %s68
    %p868 = scmp.lt.s32.totalorder %s68, 3
    %p869 = pnand %p867, %p868
    %p870 = pneg %p869
    // Predicated region
    $region129: #{dfn_forward.1} parent=5 // pred_check
      _
    $region130: #{dfn_forward.1} parent=5 // pred_check_branch
      %872 = sbr.rel (%p869) target = $region132
    $region131: #{dfn_forward.1} parent=5 // pred_region
      %s873 = ssub.s32 %s68, 1
      %p874 = scmp.lt.s32.totalorder %s73, 1
      %s875 = scalar_select %p874, %s73, 1
      %s876 = smul.addr %s875, 2
      %s877 = smul.addr %s876, 8
      %s878 = scalar_lea.vmem %s1, %s877
      %p879 = pneg %p94
      %p880 = pneg %p91
      %p881 = scmp.lt.s32.totalorder %s73, 1
      %s882 = scalar_select %p881, %s73, 1
      %s883 = smul.addr %s882, 2
      %s884 = smul.addr %s883, 4
      %s885 = scalar_lea.vmem %s3, %s884
      %p886 = pneg %p120
      %p887 = pneg %p117
      %p888 = scmp.lt.s32.totalorder %s73, 1
      %s889 = scalar_select %p888, %s73, 1
      %s890 = smul.addr %s889, 8
      %s891 = smul.addr %s890, 8
      %s892 = scalar_lea.vmem %s5, %s891
      %p893 = pneg %p146
      %p894 = pneg %p143
      %p895 = pneg %p167
      %p896 = pneg %p164
      %p897 = pneg %p188
      %p898 = pneg %p185
      %p899 = pneg %p209
      %p900 = pneg %p206
      %p901 = pneg %p230
      %p902 = pneg %p227
      %p903 = pneg %p251
      %p904 = pneg %p248
      %p905 = pneg %p272
      %p906 = pneg %p269
      %p907 = pneg %p293
      %p908 = pneg %p290
      %p909 = pneg %p314
      %p910 = pneg %p311
      %p911 = pneg %p335
      %p912 = pneg %p332
      %p913 = pneg %p356
      %p914 = pneg %p353
      %p915 = pneg %p377
      %p916 = pneg %p374
      %p917 = pneg %p398
      %p918 = pneg %p395
      %p919 = pneg %p419
      %p920 = pneg %p416
      %p921 = pneg %p440
      %p922 = pneg %p437
      %p923 = pneg %p461
      %p924 = pneg %p458
      %p925 = pneg %p482
      %p926 = pneg %p479
      %p927 = pneg %p503
      %p928 = pneg %p500
      %p929 = pneg %p524
      %p930 = pneg %p521
      %p931 = pneg %p545
      %p932 = pneg %p542
      %p933 = pneg %p566
      %p934 = pneg %p563
      %p935 = pneg %p587
      %p936 = pneg %p584
      %p937 = pneg %p608
      %p938 = pneg %p605
      %p939 = pneg %p629
      %p940 = pneg %p626
      %p941 = pneg %p650
      %p942 = pneg %p647
      %p943 = pneg %p671
      %p944 = pneg %p668
      %p945 = pneg %p697
      %p946 = pneg %p694
      %p947 = scmp.lt.s32.totalorder %s73, 1
      %s948 = scalar_select %p947, %s73, 1
      %s949 = smul.addr %s948, 2
      %s950 = smul.addr %s949, 2
      %s951 = scalar_lea.vmem %s57, %s950
      %p952 = pneg %p723
      %p953 = pneg %p720
      %p954 = scmp.lt.s32.totalorder %s73, 1
      %s955 = scalar_select %p954, %s73, 1
      %s956 = smul.addr %s955, 2
      %s957 = scalar_lea.vmem %s59, %s956
      %p958 = pneg %p749
      %p959 = pneg %p746
      %p960 = scmp.lt.s32.totalorder %s73, 1
      %s961 = scalar_select %p960, %s73, 1
      %s962 = smul.addr %s961, 8
      %s963 = smul.addr %s962, 8
      %s964 = scalar_lea.vmem %s61, %s963
      %p965 = scmp.lt.s32.totalorder %s73, 1
      %s966 = scalar_select %p965, %s73, 1
      %s967 = smul.addr %s966, 2
      %s968 = smul.addr %s967, 8
      %s969 = scalar_lea.vmem %s1, %s968
      %p970 = scmp.lt.s32.totalorder %s73, 1
      %s971 = scalar_select %p970, %s73, 1
      %s972 = smul.addr %s971, 2
      %s973 = smul.addr %s972, 4
      %s974 = scalar_lea.vmem %s3, %s973
      %p975 = scmp.lt.s32.totalorder %s73, 1
      %s976 = scalar_select %p975, %s73, 1
      %s977 = smul.addr %s976, 8
      %s978 = smul.addr %s977, 8
      %s979 = scalar_lea.vmem %s5, %s978
      %p980 = scmp.lt.s32.totalorder %s73, 1
      %s981 = scalar_select %p980, %s73, 1
      %s982 = smul.addr %s981, 2
      %s983 = smul.addr %s982, 2
      %s984 = scalar_lea.vmem %s57, %s983
      %p985 = scmp.lt.s32.totalorder %s73, 1
      %s986 = scalar_select %p985, %s73, 1
      %s987 = smul.addr %s986, 2
      %s988 = scalar_lea.vmem %s59, %s987
      %p989 = scmp.lt.s32.totalorder %s73, 1
      %s990 = scalar_select %p989, %s73, 1
      %s991 = smul.addr %s990, 8
      %s992 = smul.addr %s991, 8
      %s993 = scalar_lea.vmem %s61, %s992
      %v995 = vld [vmem:[%s7] sm:$0xff]
      %v996 = vld [vmem:[%s7 + $0x8] sm:$0xff]
      %v997 = vld [vmem:[%s7 + $0x10] sm:$0x1]
      %v998 = vld [vmem:[%s7 + $0x18] sm:$0x1]
      %v999 = vld [vmem:[%s969] sm:$0xff]
      %v1000 = vld [vmem:[%s969 + $0x8] sm:$0xff]
      %v1001 = vld [vmem:[%s974] sm:$0xff]
      %v1002 = vld [vmem:[%s979] sm:$0xff]
      %v1003 = vld [vmem:[%s979 + $0x8] sm:$0xff]
      %v1004 = vld [vmem:[%s979 + $0x10] sm:$0xff]
      %v1005 = vld [vmem:[%s979 + $0x18] sm:$0xff]
      %v1006 = vld [vmem:[%s979 + $0x20] sm:$0xff]
      %v1007 = vld [vmem:[%s979 + $0x28] sm:$0xff]
      %v1008 = vld [vmem:[%s979 + $0x30] sm:$0xff]
      %v1009 = vld [vmem:[%s979 + $0x38] sm:$0xff]
      %v1010 = vld [vmem:[%s9] sm:$0xf]
      %v1011 = vld [vmem:[%s9 + $0x4] sm:$0xf]
      %v1012 = vpack.c.bf16 %v999, %v999
      %v1013 = vpack.c.bf16 %v1000, %v1000
      %v1014 = vld [vmem:[%s11] sm:$0xff]
      %v1015 = vld [vmem:[%s11 + $0x8] sm:$0xff]
      %1017 = vset.pattern.permute.xlu0 0
      %1018 = vperm.xlu0 %1017, %v1014
      %v1019 = vpop.permute.xlu0 %1018
      %1022 = vset.pattern.permute.xlu0 0
      %1023 = vperm.xlu0 %1022, %v1015
      %v1024 = vpop.permute.xlu0 %1023
      %v1028 = vunpack.c.l.b16 %v1010
      %v1029 = vunpack.c.l.b16 %v1011
      %v1030 = vpack.c.b16 %v1029, %v1028
      %vm1031 = vcmask 64512
      %v1033 = vsel %vm1031, %v1030, 0
      %vm1035 = vcmask 1043456
      %v1037 = vsel %vm1035, %v1012, 0
      %v1040 = vsel %vm1035, %v1013, 0
      %1042 = vmatprep.subr.bf16.mxu0 %v1040
      %1043 = vmatpush1.bf16.msra.mxu0 %v1037
      %1044 = vmatprep.subr.bf16.mxu0 0
      %1045 = vmatpush1.bf16.msra.mxu0 0
      %1046 = vmatprep.subr.bf16.mxu0 0
      %1047 = vmatpush1.bf16.msra.mxu0 0
      %1048 = vmatprep.subr.bf16.mxu0 0
      %1049 = vmatpush1.bf16.msra.mxu0 0
      %1050 = vmatprep.subr.bf16.mxu0 0
      %1051 = vmatpush1.bf16.msra.mxu0 0
      %1052 = vmatprep.subr.bf16.mxu0 0
      %1053 = vmatpush1.bf16.msra.mxu0 0
      %1054 = vmatprep.subr.bf16.mxu0 0
      %1055 = vmatpush1.bf16.msra.mxu0 0
      %1056 = vmatprep.subr.bf16.mxu0 0
      %1057 = vmatpush1.bf16.msra.mxu0 0
      %1058 = vmatprep.subr.bf16.mxu0 0
      %1059 = vmatpush1.bf16.msra.mxu0 0
      %1060 = vmatprep.subr.bf16.mxu0 0
      %1061 = vmatpush1.bf16.msra.mxu0 0
      %1062 = vmatprep.subr.bf16.mxu0 0
      %1063 = vmatpush1.bf16.msra.mxu0 0
      %1064 = vmatprep.subr.bf16.mxu0 0
      %1065 = vmatpush1.bf16.msra.mxu0 0
      %1066 = vmatprep.subr.bf16.mxu0 0
      %1067 = vmatpush1.bf16.msra.mxu0 0
      %1068 = vmatprep.subr.bf16.mxu0 0
      %1069 = vmatpush1.bf16.msra.mxu0 0
      %1070 = vmatprep.subr.bf16.mxu0 0
      %1071 = vmatpush1.bf16.msra.mxu0 0
      %1072 = vmatprep.subr.bf16.mxu0 0
      %1073 = vmatpush1.bf16.msra.mxu0 0
      %1074 = vmatprep.mubr.bf16.mxu0 0
      %1075 = vmatmul.mubr.bf16.gmra.mrb[0].mxu0 %v1033
      %v1076 = vpop.f32.mrb[0].mxu0
      %v1077 = vadd.f32 %v1019, %v1076
      %v1078 = vpop.f32.mrb[0].mxu0
      %v1079 = vadd.f32 %v1019, %v1078
      %v1080 = vpop.f32.mrb[0].mxu0
      %v1081 = vadd.f32 %v1024, %v1080
      %v1082 = vpop.f32.mrb[0].mxu0
      %v1083 = vadd.f32 %v1024, %v1082
      %1084 = vdwg.mxu0
      %v1085 = vld [vmem:[%s13] sm:$0xf]
      %v1086 = vld [vmem:[%s13 + $0x4] sm:$0xf]
      %v1087 = vld [vmem:[%s13 + $0x8] sm:$0xf]
      %v1088 = vld [vmem:[%s13 + $0xc] sm:$0xf]
      %v1089 = vpack.c.bf16 %v1081, %v1077
      %v1090 = vpack.c.bf16 %v1083, %v1079
      %v1091 = vld [vmem:[%s15] sm:$0xf]
      %v1092 = vld [vmem:[%s15 + $0x4] sm:$0xf]
      %v1093 = vld [vmem:[%s15 + $0x8] sm:$0xf]
      %v1094 = vld [vmem:[%s15 + $0xc] sm:$0xf]
      %v1096 = vcombine.high %v1001, %v1001
      %v1098 = vpack.c.bf16 %v1001, %v1001
      %v1099 = vpack.c.bf16 %v1096, %v1096
      %v1104 = vunpack.c.l.b16 %v1091
      %v1105 = vunpack.c.l.b16 %v1092
      %v1106 = vunpack.c.l.b16 %v1093
      %v1107 = vunpack.c.l.b16 %v1094
      %v1108 = vpack.c.b16 %v1105, %v1104
      %v1109 = vpack.c.b16 %v1107, %v1106
      %vm1110 = vcmask 31744
      %v1112 = vsel %vm1110, %v1108, 0
      %v1115 = vsel %vm1110, %v1109, 0
      %vm1117 = vcmask 1041408
      %v1119 = vsel %vm1117, %v1098, 0
      %v1122 = vsel %vm1117, %v1099, 0
      %1124 = vmatprep.subr.bf16.mxu0 %v1122
      %1125 = vmatpush1.bf16.msra.mxu0 %v1119
      %1126 = vmatprep.subr.bf16.mxu0 0
      %1127 = vmatpush1.bf16.msra.mxu0 0
      %1128 = vmatprep.subr.bf16.mxu0 0
      %1129 = vmatpush1.bf16.msra.mxu0 0
      %1130 = vmatprep.subr.bf16.mxu0 0
      %1131 = vmatpush1.bf16.msra.mxu0 0
      %1132 = vmatprep.subr.bf16.mxu0 0
      %1133 = vmatpush1.bf16.msra.mxu0 0
      %1134 = vmatprep.subr.bf16.mxu0 0
      %1135 = vmatpush1.bf16.msra.mxu0 0
      %1136 = vmatprep.subr.bf16.mxu0 0
      %1137 = vmatpush1.bf16.msra.mxu0 0
      %1138 = vmatprep.subr.bf16.mxu0 0
      %1139 = vmatpush1.bf16.msra.mxu0 0
      %1140 = vmatprep.subr.bf16.mxu0 0
      %1141 = vmatpush1.bf16.msra.mxu0 0
      %1142 = vmatprep.subr.bf16.mxu0 0
      %1143 = vmatpush1.bf16.msra.mxu0 0
      %1144 = vmatprep.subr.bf16.mxu0 0
      %1145 = vmatpush1.bf16.msra.mxu0 0
      %1146 = vmatprep.subr.bf16.mxu0 0
      %1147 = vmatpush1.bf16.msra.mxu0 0
      %1148 = vmatprep.subr.bf16.mxu0 0
      %1149 = vmatpush1.bf16.msra.mxu0 0
      %1150 = vmatprep.subr.bf16.mxu0 0
      %1151 = vmatpush1.bf16.msra.mxu0 0
      %1152 = vmatprep.subr.bf16.mxu0 0
      %1153 = vmatpush1.bf16.msra.mxu0 0
      %1154 = vmatprep.subr.bf16.mxu0 0
      %1155 = vmatpush1.bf16.msra.mxu0 0
      %1156 = vmatprep.mubr.bf16.mxu0 0
      %1157 = vmatmul.mubr.bf16.gmra.mrb[0].mxu0 %v1112
      %v1158 = vpop.f32.mrb[0].mxu0
      %v1159 = vadd.f32 0.0, %v1158
      %v1160 = vpop.f32.mrb[0].mxu0
      %v1161 = vadd.f32 0.0, %v1160
      %v1162 = vpop.f32.mrb[0].mxu0
      %v1163 = vadd.f32 0.0, %v1162
      %v1164 = vpop.f32.mrb[0].mxu0
      %v1165 = vadd.f32 0.0, %v1164
      %1166 = vmatprep.mubr.bf16.mxu0 0
      %1167 = vmatmul.mubr.bf16.gmra.mrb[0].mxu0 %v1115
      %v1168 = vpop.f32.mrb[0].mxu0
      %v1169 = vadd.f32 0.0, %v1168
      %v1170 = vpop.f32.mrb[0].mxu0
      %v1171 = vadd.f32 0.0, %v1170
      %v1172 = vpop.f32.mrb[0].mxu0
      %v1173 = vadd.f32 0.0, %v1172
      %v1174 = vpop.f32.mrb[0].mxu0
      %v1175 = vadd.f32 0.0, %v1174
      %1176 = vdwg.mxu0
      %v1181 = vunpack.c.l.b16 %v1085
      %v1182 = vunpack.c.l.b16 %v1086
      %v1183 = vunpack.c.l.b16 %v1087
      %v1184 = vunpack.c.l.b16 %v1088
      %v1185 = vpack.c.b16 %v1182, %v1181
      %v1186 = vpack.c.b16 %v1184, %v1183
      %vm1187 = vcmask 130048
      %v1189 = vsel %vm1187, %v1185, 0
      %v1192 = vsel %vm1187, %v1186, 0
      %1194 = vmatprep.subr.bf16.mxu0 %v1090
      %1195 = vmatpush1.bf16.msra.mxu0 %v1089
      %1196 = vmatprep.subr.bf16.mxu0 0
      %1197 = vmatpush1.bf16.msra.mxu0 0
      %1198 = vmatprep.subr.bf16.mxu0 0
      %1199 = vmatpush1.bf16.msra.mxu0 0
      %1200 = vmatprep.subr.bf16.mxu0 0
      %1201 = vmatpush1.bf16.msra.mxu0 0
      %1202 = vmatprep.subr.bf16.mxu0 0
      %1203 = vmatpush1.bf16.msra.mxu0 0
      %1204 = vmatprep.subr.bf16.mxu0 0
      %1205 = vmatpush1.bf16.msra.mxu0 0
      %1206 = vmatprep.subr.bf16.mxu0 0
      %1207 = vmatpush1.bf16.msra.mxu0 0
      %1208 = vmatprep.subr.bf16.mxu0 0
      %1209 = vmatpush1.bf16.msra.mxu0 0
      %1210 = vmatprep.subr.bf16.mxu0 0
      %1211 = vmatpush1.bf16.msra.mxu0 0
      %1212 = vmatprep.subr.bf16.mxu0 0
      %1213 = vmatpush1.bf16.msra.mxu0 0
      %1214 = vmatprep.subr.bf16.mxu0 0
      %1215 = vmatpush1.bf16.msra.mxu0 0
      %1216 = vmatprep.subr.bf16.mxu0 0
      %1217 = vmatpush1.bf16.msra.mxu0 0
      %1218 = vmatprep.subr.bf16.mxu0 0
      %1219 = vmatpush1.bf16.msra.mxu0 0
      %1220 = vmatprep.subr.bf16.mxu0 0
      %1221 = vmatpush1.bf16.msra.mxu0 0
      %1222 = vmatprep.subr.bf16.mxu0 0
      %1223 = vmatpush1.bf16.msra.mxu0 0
      %1224 = vmatprep.subr.bf16.mxu0 0
      %1225 = vmatpush1.bf16.msra.mxu0 0
      %1226 = vmatprep.mubr.bf16.mxu0 0
      %1227 = vmatmul.mubr.bf16.gmra.mrb[0].mxu0 %v1189
      %v1228 = vpop.f32.mrb[0].mxu0
      %v1229 = vadd.f32 %v1159, %v1228
      %v1230 = vpop.f32.mrb[0].mxu0
      %v1231 = vadd.f32 %v1161, %v1230
      %v1232 = vpop.f32.mrb[0].mxu0
      %v1233 = vadd.f32 %v1163, %v1232
      %v1234 = vpop.f32.mrb[0].mxu0
      %v1235 = vadd.f32 %v1165, %v1234
      %1236 = vmatprep.mubr.bf16.mxu0 0
      %1237 = vmatmul.mubr.bf16.gmra.mrb[0].mxu0 %v1192
      %v1238 = vpop.f32.mrb[0].mxu0
      %v1239 = vadd.f32 %v1169, %v1238
      %v1240 = vpop.f32.mrb[0].mxu0
      %v1241 = vadd.f32 %v1171, %v1240
      %v1242 = vpop.f32.mrb[0].mxu0
      %v1243 = vadd.f32 %v1173, %v1242
      %v1244 = vpop.f32.mrb[0].mxu0
      %v1245 = vadd.f32 %v1175, %v1244
      %1246 = vdwg.mxu0
      %v1247 = vld [vmem:[%s17] sm:$0xff]
      %v1248 = vld [vmem:[%s17 + $0x8] sm:$0xff]
      %v1249 = vld [vmem:[%s17 + $0x10] sm:$0xff]
      %v1250 = vld [vmem:[%s17 + $0x18] sm:$0xff]
      %1252 = vset.pattern.permute.xlu0 0
      %1253 = vperm.xlu0 %1252, %v1247
      %v1254 = vpop.permute.xlu0 %1253
      %1257 = vset.pattern.permute.xlu0 0
      %1258 = vperm.xlu0 %1257, %v1248
      %v1259 = vpop.permute.xlu0 %1258
      %1262 = vset.pattern.permute.xlu0 0
      %1263 = vperm.xlu0 %1262, %v1249
      %v1264 = vpop.permute.xlu0 %1263
      %1267 = vset.pattern.permute.xlu0 0
      %1268 = vperm.xlu0 %1267, %v1250
      %v1269 = vpop.permute.xlu0 %1268
      %v1271 = vadd.f32 %v1229, %v1254
      %v1272 = vadd.f32 %v1231, %v1254
      %v1273 = vadd.f32 %v1233, %v1259
      %v1274 = vadd.f32 %v1235, %v1259
      %v1275 = vadd.f32 %v1239, %v1264
      %v1276 = vadd.f32 %v1241, %v1264
      %v1277 = vadd.f32 %v1243, %v1269
      %v1278 = vadd.f32 %v1245, %v1269
      %1279 = vrot.lane.b32.xlu0 %v1271, 17
      %v1280 = vpop.permute.xlu0 %1279
      %1281 = vrot.lane.b32.xlu0 %v1273, 17
      %v1282 = vpop.permute.xlu0 %1281
      %1283 = vrot.lane.b32.xlu0 %v1275, 17
      %v1284 = vpop.permute.xlu0 %1283
      %1285 = vrot.lane.b32.xlu0 %v1277, 17
      %v1286 = vpop.permute.xlu0 %1285
      %1287 = vrot.lane.b32.xlu0 %v1272, 17
      %v1288 = vpop.permute.xlu0 %1287
      %1289 = vrot.lane.b32.xlu0 %v1274, 17
      %v1290 = vpop.permute.xlu0 %1289
      %1291 = vrot.lane.b32.xlu0 %v1276, 17
      %v1292 = vpop.permute.xlu0 %1291
      %1293 = vrot.lane.b32.xlu0 %v1278, 17
      %v1294 = vpop.permute.xlu0 %1293
      %v1295 = vlaneseq
      %v1296 = vand.u32 %v1295, 127
      %vm1297 = vcmp.lt.s32.totalorder %v1296, 17
      %v1298 = vsel %vm1297, %v1280, %v1288
      %v1299 = vsel %vm1297, %v1282, %v1290
      %v1300 = vsel %vm1297, %v1284, %v1292
      %v1301 = vsel %vm1297, %v1286, %v1294
      %v1302 = vsel %vm1297, %v1288, %v1280
      %v1303 = vsel %vm1297, %v1290, %v1282
      %v1304 = vsel %vm1297, %v1292, %v1284
      %v1305 = vsel %vm1297, %v1294, %v1286
      %v1306 = vlaneseq
      %v1307 = vshrl.u32 %v1306, 7
      %v1308 = vsub.s32 0, %v1307
      %v1309 = vrot.slane %v995, %v1308
      %v1310 = vlaneseq
      %v1311 = vshrl.u32 %v1310, 7
      %v1312 = vsub.s32 0, %v1311
      %v1313 = vrot.slane %v996, %v1312
      %v1314 = vmul.f32 %v1302, %v1309
      %v1315 = vmul.f32 %v1298, %v1313
      %v1316 = vmul.f32 %v1303, %v1309
      %v1317 = vmul.f32 %v1299, %v1313
      %v1318 = vmul.f32 %v1304, %v1309
      %v1319 = vmul.f32 %v1300, %v1313
      %v1320 = vmul.f32 %v1305, %v1309
      %v1321 = vmul.f32 %v1301, %v1313
      %v1322 = vpack.c.bf16 %v1316, %v1314
      %v1323 = vpack.c.bf16 %v1317, %v1315
      %v1324 = vpack.c.bf16 %v1320, %v1318
      %v1325 = vpack.c.bf16 %v1321, %v1319
      %1326 = vrot.lane.b32.xlu0 %v1271, 16
      %v1327 = vpop.permute.xlu0 %1326
      %1328 = vrot.lane.b32.xlu0 %v1273, 16
      %v1329 = vpop.permute.xlu0 %1328
      %1330 = vrot.lane.b32.xlu0 %v1275, 16
      %v1331 = vpop.permute.xlu0 %1330
      %1332 = vrot.lane.b32.xlu0 %v1277, 16
      %v1333 = vpop.permute.xlu0 %1332
      %1334 = vrot.lane.b32.xlu0 %v1272, 16
      %v1335 = vpop.permute.xlu0 %1334
      %1336 = vrot.lane.b32.xlu0 %v1274, 16
      %v1337 = vpop.permute.xlu0 %1336
      %1338 = vrot.lane.b32.xlu0 %v1276, 16
      %v1339 = vpop.permute.xlu0 %1338
      %1340 = vrot.lane.b32.xlu0 %v1278, 16
      %v1341 = vpop.permute.xlu0 %1340
      %vm1342 = vcmp.lt.s32.totalorder %v1296, 16
      %v1343 = vsel %vm1342, %v1327, %v1335
      %v1344 = vsel %vm1342, %v1329, %v1337
      %v1345 = vsel %vm1342, %v1331, %v1339
      %v1346 = vsel %vm1342, %v1333, %v1341
      %v1347 = vsel %vm1342, %v1335, %v1327
      %v1348 = vsel %vm1342, %v1337, %v1329
      %v1349 = vsel %vm1342, %v1339, %v1331
      %v1350 = vsel %vm1342, %v1341, %v1333
      %v1351 = vlaneseq
      %v1352 = vshrl.u32 %v1351, 7
      %v1353 = vsub.s32 1, %v1352
      %v1354 = vrot.slane %v995, %v1353
      %v1355 = vlaneseq
      %v1356 = vshrl.u32 %v1355, 7
      %v1357 = vsub.s32 1, %v1356
      %v1358 = vrot.slane %v996, %v1357
      %v1359 = vmul.f32 %v1347, %v1354
      %v1360 = vmul.f32 %v1343, %v1358
      %v1361 = vmul.f32 %v1348, %v1354
      %v1362 = vmul.f32 %v1344, %v1358
      %v1363 = vmul.f32 %v1349, %v1354
      %v1364 = vmul.f32 %v1345, %v1358
      %v1365 = vmul.f32 %v1350, %v1354
      %v1366 = vmul.f32 %v1346, %v1358
      %v1367 = vpack.c.bf16 %v1361, %v1359
      %v1368 = vpack.c.bf16 %v1362, %v1360
      %v1369 = vpack.c.bf16 %v1365, %v1363
      %v1370 = vpack.c.bf16 %v1366, %v1364
      %1371 = vrot.lane.b32.xlu0 %v1271, 15
      %v1372 = vpop.permute.xlu0 %1371
      %1373 = vrot.lane.b32.xlu0 %v1273, 15
      %v1374 = vpop.permute.xlu0 %1373
      %1375 = vrot.lane.b32.xlu0 %v1275, 15
      %v1376 = vpop.permute.xlu0 %1375
      %1377 = vrot.lane.b32.xlu0 %v1277, 15
      %v1378 = vpop.permute.xlu0 %1377
      %1379 = vrot.lane.b32.xlu0 %v1272, 15
      %v1380 = vpop.permute.xlu0 %1379
      %1381 = vrot.lane.b32.xlu0 %v1274, 15
      %v1382 = vpop.permute.xlu0 %1381
      %1383 = vrot.lane.b32.xlu0 %v1276, 15
      %v1384 = vpop.permute.xlu0 %1383
      %1385 = vrot.lane.b32.xlu0 %v1278, 15
      %v1386 = vpop.permute.xlu0 %1385
      %vm1387 = vcmp.lt.s32.totalorder %v1296, 15
      %v1388 = vsel %vm1387, %v1372, %v1380
      %v1389 = vsel %vm1387, %v1374, %v1382
      %v1390 = vsel %vm1387, %v1376, %v1384
      %v1391 = vsel %vm1387, %v1378, %v1386
      %v1392 = vsel %vm1387, %v1380, %v1372
      %v1393 = vsel %vm1387, %v1382, %v1374
      %v1394 = vsel %vm1387, %v1384, %v1376
      %v1395 = vsel %vm1387, %v1386, %v1378
      %v1396 = vlaneseq
      %v1397 = vshrl.u32 %v1396, 7
      %v1398 = vsub.s32 2, %v1397
      %v1399 = vrot.slane %v995, %v1398
      %v1400 = vlaneseq
      %v1401 = vshrl.u32 %v1400, 7
      %v1402 = vsub.s32 2, %v1401
      %v1403 = vrot.slane %v996, %v1402
      %v1404 = vmul.f32 %v1392, %v1399
      %v1405 = vmul.f32 %v1388, %v1403
      %v1406 = vmul.f32 %v1393, %v1399
      %v1407 = vmul.f32 %v1389, %v1403
      %v1408 = vmul.f32 %v1394, %v1399
      %v1409 = vmul.f32 %v1390, %v1403
      %v1410 = vmul.f32 %v1395, %v1399
      %v1411 = vmul.f32 %v1391, %v1403
      %v1412 = vpack.c.bf16 %v1406, %v1404
      %v1413 = vpack.c.bf16 %v1407, %v1405
      %v1414 = vpack.c.bf16 %v1410, %v1408
      %v1415 = vpack.c.bf16 %v1411, %v1409
      %1416 = vrot.lane.b32.xlu0 %v1271, 1
      %v1417 = vpop.permute.xlu0 %1416
      %1418 = vrot.lane.b32.xlu0 %v1273, 1
      %v1419 = vpop.permute.xlu0 %1418
      %1420 = vrot.lane.b32.xlu0 %v1275, 1
      %v1421 = vpop.permute.xlu0 %1420
      %1422 = vrot.lane.b32.xlu0 %v1277, 1
      %v1423 = vpop.permute.xlu0 %1422
      %1424 = vrot.lane.b32.xlu0 %v1272, 1
      %v1425 = vpop.permute.xlu0 %1424
      %1426 = vrot.lane.b32.xlu0 %v1274, 1
      %v1427 = vpop.permute.xlu0 %1426
      %1428 = vrot.lane.b32.xlu0 %v1276, 1
      %v1429 = vpop.permute.xlu0 %1428
      %1430 = vrot.lane.b32.xlu0 %v1278, 1
      %v1431 = vpop.permute.xlu0 %1430
      %vm1432 = vcmp.lt.s32.totalorder %v1296, 1
      %v1433 = vsel %vm1432, %v1417, %v1425
      %v1434 = vsel %vm1432, %v1419, %v1427
      %v1435 = vsel %vm1432, %v1421, %v1429
      %v1436 = vsel %vm1432, %v1423, %v1431
      %v1437 = vsel %vm1432, %v1425, %v1417
      %v1438 = vsel %vm1432, %v1427, %v1419
      %v1439 = vsel %vm1432, %v1429, %v1421
      %v1440 = vsel %vm1432, %v1431, %v1423
      %v1441 = vlaneseq
      %v1442 = vshrl.u32 %v1441, 7
      %v1443 = vsub.s32 3, %v1442
      %v1444 = vrot.slane %v995, %v1443
      %v1445 = vlaneseq
      %v1446 = vshrl.u32 %v1445, 7
      %v1447 = vsub.s32 3, %v1446
      %v1448 = vrot.slane %v996, %v1447
      %v1449 = vmul.f32 %v1437, %v1444
      %v1450 = vmul.f32 %v1433, %v1448
      %v1451 = vmul.f32 %v1438, %v1444
      %v1452 = vmul.f32 %v1434, %v1448
      %v1453 = vmul.f32 %v1439, %v1444
      %v1454 = vmul.f32 %v1435, %v1448
      %v1455 = vmul.f32 %v1440, %v1444
      %v1456 = vmul.f32 %v1436, %v1448
      %v1457 = vpack.c.bf16 %v1451, %v1449
      %v1458 = vpack.c.bf16 %v1452, %v1450
      %v1459 = vpack.c.bf16 %v1455, %v1453
      %v1460 = vpack.c.bf16 %v1456, %v1454
      %v1461 = vpack.c.bf16 %v1273, %v1271
      %v1462 = vpack.c.bf16 %v1274, %v1272
      %v1463 = vpack.c.bf16 %v1277, %v1275
      %v1464 = vpack.c.bf16 %v1278, %v1276
      %1465 = vrot.lane.b32.xlu0 %v1271, 127
      %v1466 = vpop.permute.xlu0 %1465
      %1467 = vrot.lane.b32.xlu0 %v1273, 127
      %v1468 = vpop.permute.xlu0 %1467
      %1469 = vrot.lane.b32.xlu0 %v1275, 127
      %v1470 = vpop.permute.xlu0 %1469
      %1471 = vrot.lane.b32.xlu0 %v1277, 127
      %v1472 = vpop.permute.xlu0 %1471
      %1473 = vrot.lane.b32.xlu0 %v1272, 127
      %v1474 = vpop.permute.xlu0 %1473
      %1475 = vrot.lane.b32.xlu0 %v1274, 127
      %v1476 = vpop.permute.xlu0 %1475
      %1477 = vrot.lane.b32.xlu0 %v1276, 127
      %v1478 = vpop.permute.xlu0 %1477
      %1479 = vrot.lane.b32.xlu0 %v1278, 127
      %v1480 = vpop.permute.xlu0 %1479
      %vm1481 = vcmp.lt.s32.totalorder %v1296, 127
      %v1482 = vsel %vm1481, %v1466, %v1474
      %v1483 = vsel %vm1481, %v1468, %v1476
      %v1484 = vsel %vm1481, %v1470, %v1478
      %v1485 = vsel %vm1481, %v1472, %v1480
      %v1486 = vsel %vm1481, %v1474, %v1466
      %v1487 = vsel %vm1481, %v1476, %v1468
      %v1488 = vsel %vm1481, %v1478, %v1470
      %v1489 = vsel %vm1481, %v1480, %v1472
      %v1490 = vlaneseq
      %v1491 = vshrl.u32 %v1490, 7
      %v1492 = vsub.s32 5, %v1491
      %v1493 = vrot.slane %v995, %v1492
      %v1494 = vlaneseq
      %v1495 = vshrl.u32 %v1494, 7
      %v1496 = vsub.s32 5, %v1495
      %v1497 = vrot.slane %v996, %v1496
      %v1498 = vmul.f32 %v1482, %v1493
      %v1499 = vmul.f32 %v1486, %v1497
      %v1500 = vmul.f32 %v1483, %v1493
      %v1501 = vmul.f32 %v1487, %v1497
      %v1502 = vmul.f32 %v1484, %v1493
      %v1503 = vmul.f32 %v1488, %v1497
      %v1504 = vmul.f32 %v1485, %v1493
      %v1505 = vmul.f32 %v1489, %v1497
      %v1506 = vpack.c.bf16 %v1500, %v1498
      %v1507 = vpack.c.bf16 %v1501, %v1499
      %v1508 = vpack.c.bf16 %v1504, %v1502
      %v1509 = vpack.c.bf16 %v1505, %v1503
      %1510 = vrot.lane.b32.xlu0 %v1271, 113
      %v1511 = vpop.permute.xlu0 %1510
      %1512 = vrot.lane.b32.xlu0 %v1273, 113
      %v1513 = vpop.permute.xlu0 %1512
      %1514 = vrot.lane.b32.xlu0 %v1275, 113
      %v1515 = vpop.permute.xlu0 %1514
      %1516 = vrot.lane.b32.xlu0 %v1277, 113
      %v1517 = vpop.permute.xlu0 %1516
      %1518 = vrot.lane.b32.xlu0 %v1272, 113
      %v1519 = vpop.permute.xlu0 %1518
      %1520 = vrot.lane.b32.xlu0 %v1274, 113
      %v1521 = vpop.permute.xlu0 %1520
      %1522 = vrot.lane.b32.xlu0 %v1276, 113
      %v1523 = vpop.permute.xlu0 %1522
      %1524 = vrot.lane.b32.xlu0 %v1278, 113
      %v1525 = vpop.permute.xlu0 %1524
      %vm1526 = vcmp.lt.s32.totalorder %v1296, 113
      %v1527 = vsel %vm1526, %v1511, %v1519
      %v1528 = vsel %vm1526, %v1513, %v1521
      %v1529 = vsel %vm1526, %v1515, %v1523
      %v1530 = vsel %vm1526, %v1517, %v1525
      %v1531 = vsel %vm1526, %v1519, %v1511
      %v1532 = vsel %vm1526, %v1521, %v1513
      %v1533 = vsel %vm1526, %v1523, %v1515
      %v1534 = vsel %vm1526, %v1525, %v1517
      %v1535 = vlaneseq
      %v1536 = vshrl.u32 %v1535, 7
      %v1537 = vsub.s32 6, %v1536
      %v1538 = vrot.slane %v995, %v1537
      %v1539 = vlaneseq
      %v1540 = vshrl.u32 %v1539, 7
      %v1541 = vsub.s32 6, %v1540
      %v1542 = vrot.slane %v996, %v1541
      %v1543 = vmul.f32 %v1527, %v1538
      %v1544 = vmul.f32 %v1531, %v1542
      %v1545 = vmul.f32 %v1528, %v1538
      %v1546 = vmul.f32 %v1532, %v1542
      %v1547 = vmul.f32 %v1529, %v1538
      %v1548 = vmul.f32 %v1533, %v1542
      %v1549 = vmul.f32 %v1530, %v1538
      %v1550 = vmul.f32 %v1534, %v1542
      %v1551 = vpack.c.bf16 %v1545, %v1543
      %v1552 = vpack.c.bf16 %v1546, %v1544
      %v1553 = vpack.c.bf16 %v1549, %v1547
      %v1554 = vpack.c.bf16 %v1550, %v1548
      %1555 = vrot.lane.b32.xlu0 %v1271, 112
      %v1556 = vpop.permute.xlu0 %1555
      %1557 = vrot.lane.b32.xlu0 %v1273, 112
      %v1558 = vpop.permute.xlu0 %1557
      %1559 = vrot.lane.b32.xlu0 %v1275, 112
      %v1560 = vpop.permute.xlu0 %1559
      %1561 = vrot.lane.b32.xlu0 %v1277, 112
      %v1562 = vpop.permute.xlu0 %1561
      %1563 = vrot.lane.b32.xlu0 %v1272, 112
      %v1564 = vpop.permute.xlu0 %1563
      %1565 = vrot.lane.b32.xlu0 %v1274, 112
      %v1566 = vpop.permute.xlu0 %1565
      %1567 = vrot.lane.b32.xlu0 %v1276, 112
      %v1568 = vpop.permute.xlu0 %1567
      %1569 = vrot.lane.b32.xlu0 %v1278, 112
      %v1570 = vpop.permute.xlu0 %1569
      %vm1571 = vcmp.lt.s32.totalorder %v1296, 112
      %v1572 = vsel %vm1571, %v1556, %v1564
      %v1573 = vsel %vm1571, %v1558, %v1566
      %v1574 = vsel %vm1571, %v1560, %v1568
      %v1575 = vsel %vm1571, %v1562, %v1570
      %v1576 = vsel %vm1571, %v1564, %v1556
      %v1577 = vsel %vm1571, %v1566, %v1558
      %v1578 = vsel %vm1571, %v1568, %v1560
      %v1579 = vsel %vm1571, %v1570, %v1562
      %v1580 = vlaneseq
      %v1581 = vshrl.u32 %v1580, 7
      %v1582 = vsub.s32 7, %v1581
      %v1583 = vrot.slane %v995, %v1582
      %v1584 = vlaneseq
      %v1585 = vshrl.u32 %v1584, 7
      %v1586 = vsub.s32 7, %v1585
      %v1587 = vrot.slane %v996, %v1586
      %v1588 = vmul.f32 %v1572, %v1583
      %v1589 = vmul.f32 %v1576, %v1587
      %v1590 = vmul.f32 %v1573, %v1583
      %v1591 = vmul.f32 %v1577, %v1587
      %v1592 = vmul.f32 %v1574, %v1583
      %v1593 = vmul.f32 %v1578, %v1587
      %v1594 = vmul.f32 %v1575, %v1583
      %v1595 = vmul.f32 %v1579, %v1587
      %v1596 = vpack.c.bf16 %v1590, %v1588
      %v1597 = vpack.c.bf16 %v1591, %v1589
      %v1598 = vpack.c.bf16 %v1594, %v1592
      %v1599 = vpack.c.bf16 %v1595, %v1593
      %1600 = vrot.lane.b32.xlu0 %v1271, 111
      %v1601 = vpop.permute.xlu0 %1600
      %1602 = vrot.lane.b32.xlu0 %v1273, 111
      %v1603 = vpop.permute.xlu0 %1602
      %1604 = vrot.lane.b32.xlu0 %v1275, 111
      %v1605 = vpop.permute.xlu0 %1604
      %1606 = vrot.lane.b32.xlu0 %v1277, 111
      %v1607 = vpop.permute.xlu0 %1606
      %1608 = vrot.lane.b32.xlu0 %v1272, 111
      %v1609 = vpop.permute.xlu0 %1608
      %1610 = vrot.lane.b32.xlu0 %v1274, 111
      %v1611 = vpop.permute.xlu0 %1610
      %1612 = vrot.lane.b32.xlu0 %v1276, 111
      %v1613 = vpop.permute.xlu0 %1612
      %1614 = vrot.lane.b32.xlu0 %v1278, 111
      %v1615 = vpop.permute.xlu0 %1614
      %vm1616 = vcmp.lt.s32.totalorder %v1296, 111
      %v1617 = vsel %vm1616, %v1601, %v1609
      %v1618 = vsel %vm1616, %v1603, %v1611
      %v1619 = vsel %vm1616, %v1605, %v1613
      %v1620 = vsel %vm1616, %v1607, %v1615
      %v1621 = vsel %vm1616, %v1609, %v1601
      %v1622 = vsel %vm1616, %v1611, %v1603
      %v1623 = vsel %vm1616, %v1613, %v1605
      %v1624 = vsel %vm1616, %v1615, %v1607
      %v1625 = vlaneseq
      %v1626 = vshrl.u32 %v1625, 7
      %v1627 = vsub.s32 0, %v1626
      %v1628 = vrot.slane %v997, %v1627
      %v1629 = vlaneseq
      %v1630 = vshrl.u32 %v1629, 7
      %v1631 = vsub.s32 0, %v1630
      %v1632 = vrot.slane %v998, %v1631
      %v1633 = vmul.f32 %v1617, %v1628
      %v1634 = vmul.f32 %v1621, %v1632
      %v1635 = vmul.f32 %v1618, %v1628
      %v1636 = vmul.f32 %v1622, %v1632
      %v1637 = vmul.f32 %v1619, %v1628
      %v1638 = vmul.f32 %v1623, %v1632
      %v1639 = vmul.f32 %v1620, %v1628
      %v1640 = vmul.f32 %v1624, %v1632
      %v1641 = vpack.c.bf16 %v1635, %v1633
      %v1642 = vpack.c.bf16 %v1636, %v1634
      %v1643 = vpack.c.bf16 %v1639, %v1637
      %v1644 = vpack.c.bf16 %v1640, %v1638
      %v1645 = vld [vmem:[%s19] sm:$0xff]
      %v1646 = vld [vmem:[%s19 + $0x8] sm:$0xf]
      %v1647 = vld [vmem:[%s19 + $0xc] sm:$0xff]
      %v1648 = vld [vmem:[%s19 + $0x14] sm:$0xf]
      %v1649 = vld [vmem:[%s19 + $0x18] sm:$0xff]
      %v1650 = vld [vmem:[%s19 + $0x20] sm:$0xf]
      %v1651 = vld [vmem:[%s19 + $0x24] sm:$0xff]
      %v1652 = vld [vmem:[%s19 + $0x2c] sm:$0xf]
      %v1661 = vunpack.c.l.b16 %v1645
      %v1662 = vunpack.c.h.b16 %v1645
      %v1663 = vunpack.c.l.b16 %v1646
      %v1664 = vunpack.c.l.b16 %v1647
      %v1665 = vunpack.c.h.b16 %v1647
      %v1666 = vunpack.c.l.b16 %v1648
      %v1667 = vunpack.c.l.b16 %v1649
      %v1668 = vunpack.c.h.b16 %v1649
      %v1669 = vunpack.c.l.b16 %v1650
      %v1670 = vunpack.c.l.b16 %v1651
      %v1671 = vunpack.c.h.b16 %v1651
      %v1672 = vunpack.c.l.b16 %v1652
      %v1673 = vpack.c.b16 %v1664, %v1661
      %v1674 = vpack.c.b16 %v1665, %v1662
      %v1675 = vpack.c.b16 %v1666, %v1663
      %v1676 = vpack.c.b16 %v1670, %v1667
      %v1677 = vpack.c.b16 %v1671, %v1668
      %v1678 = vpack.c.b16 %v1672, %v1669
      %vm1683 = vcmask 261120
      %v1685 = vsel %vm1683, %v1675, 0
      %v1688 = vsel %vm1683, %v1678, 0
      %1690 = vmatprep.subr.bf16.mxu0 %v1323
      %1691 = vmatpush1.bf16.msra.mxu0 %v1322
      %1692 = vmatprep.subr.bf16.mxu0 %v1325
      %1693 = vmatpush1.bf16.msra.mxu0 %v1324
      %1694 = vmatprep.subr.bf16.mxu0 %v1368
      %1695 = vmatpush1.bf16.msra.mxu0 %v1367
      %1696 = vmatprep.subr.bf16.mxu0 %v1370
      %1697 = vmatpush1.bf16.msra.mxu0 %v1369
      %1698 = vmatprep.subr.bf16.mxu0 %v1413
      %1699 = vmatpush1.bf16.msra.mxu0 %v1412
      %1700 = vmatprep.subr.bf16.mxu0 %v1415
      %1701 = vmatpush1.bf16.msra.mxu0 %v1414
      %1702 = vmatprep.subr.bf16.mxu0 %v1458
      %1703 = vmatpush1.bf16.msra.mxu0 %v1457
      %1704 = vmatprep.subr.bf16.mxu0 %v1460
      %1705 = vmatpush1.bf16.msra.mxu0 %v1459
      %1706 = vmatprep.subr.bf16.mxu0 %v1462
      %1707 = vmatpush1.bf16.msra.mxu0 %v1461
      %1708 = vmatprep.subr.bf16.mxu0 %v1464
      %1709 = vmatpush1.bf16.msra.mxu0 %v1463
      %1710 = vmatprep.subr.bf16.mxu0 %v1507
      %1711 = vmatpush1.bf16.msra.mxu0 %v1506
      %1712 = vmatprep.subr.bf16.mxu0 %v1509
      %1713 = vmatpush1.bf16.msra.mxu0 %v1508
      %1714 = vmatprep.subr.bf16.mxu0 %v1552
      %1715 = vmatpush1.bf16.msra.mxu0 %v1551
      %1716 = vmatprep.subr.bf16.mxu0 %v1554
      %1717 = vmatpush1.bf16.msra.mxu0 %v1553
      %1718 = vmatprep.subr.bf16.mxu0 %v1597
      %1719 = vmatpush1.bf16.msra.mxu0 %v1596
      %1720 = vmatprep.subr.bf16.mxu0 %v1599
      %1721 = vmatpush1.bf16.msra.mxu0 %v1598
      %1722 = vmatprep.mubr.bf16.mxu0 %v1674
      %1723 = vmatmul.mubr.bf16.gmra.mrb[0].mxu0 %v1673
      %v1724 = vpop.f32.mrb[0].mxu0
      %v1725 = vadd.f32 0.0, %v1724
      %v1726 = vpop.f32.mrb[0].mxu0
      %v1727 = vadd.f32 0.0, %v1726
      %v1728 = vpop.f32.mrb[0].mxu0
      %v1729 = vadd.f32 0.0, %v1728
      %v1730 = vpop.f32.mrb[0].mxu0
      %v1731 = vadd.f32 0.0, %v1730
      %1732 = vmatprep.mubr.bf16.mxu0 %v1677
      %1733 = vmatmul.mubr.bf16.gmra.mrb[0].mxu0 %v1676
      %v1734 = vpop.f32.mrb[0].mxu0
      %v1735 = vadd.f32 0.0, %v1734
      %v1736 = vpop.f32.mrb[0].mxu0
      %v1737 = vadd.f32 0.0, %v1736
      %v1738 = vpop.f32.mrb[0].mxu0
      %v1739 = vadd.f32 0.0, %v1738
      %v1740 = vpop.f32.mrb[0].mxu0
      %v1741 = vadd.f32 0.0, %v1740
      %1742 = vdwg.mxu0
      %1743 = vmatprep.subr.bf16.mxu0 %v1642
      %1744 = vmatpush1.bf16.msra.mxu0 %v1641
      %1745 = vmatprep.subr.bf16.mxu0 %v1644
      %1746 = vmatpush1.bf16.msra.mxu0 %v1643
      %1747 = vmatprep.subr.bf16.mxu0 0
      %1748 = vmatpush1.bf16.msra.mxu0 0
      %1749 = vmatprep.subr.bf16.mxu0 0
      %1750 = vmatpush1.bf16.msra.mxu0 0
      %1751 = vmatprep.subr.bf16.mxu0 0
      %1752 = vmatpush1.bf16.msra.mxu0 0
      %1753 = vmatprep.subr.bf16.mxu0 0
      %1754 = vmatpush1.bf16.msra.mxu0 0
      %1755 = vmatprep.subr.bf16.mxu0 0
      %1756 = vmatpush1.bf16.msra.mxu0 0
      %1757 = vmatprep.subr.bf16.mxu0 0
      %1758 = vmatpush1.bf16.msra.mxu0 0
      %1759 = vmatprep.subr.bf16.mxu0 0
      %1760 = vmatpush1.bf16.msra.mxu0 0
      %1761 = vmatprep.subr.bf16.mxu0 0
      %1762 = vmatpush1.bf16.msra.mxu0 0
      %1763 = vmatprep.subr.bf16.mxu0 0
      %1764 = vmatpush1.bf16.msra.mxu0 0
      %1765 = vmatprep.subr.bf16.mxu0 0
      %1766 = vmatpush1.bf16.msra.mxu0 0
      %1767 = vmatprep.subr.bf16.mxu0 0
      %1768 = vmatpush1.bf16.msra.mxu0 0
      %1769 = vmatprep.subr.bf16.mxu0 0
      %1770 = vmatpush1.bf16.msra.mxu0 0
      %1771 = vmatprep.subr.bf16.mxu0 0
      %1772 = vmatpush1.bf16.msra.mxu0 0
      %1773 = vmatprep.subr.bf16.mxu0 0
      %1774 = vmatpush1.bf16.msra.mxu0 0
      %1775 = vmatprep.mubr.bf16.mxu0 0
      %1776 = vmatmul.mubr.bf16.gmra.mrb[0].mxu0 %v1685
      %v1777 = vpop.f32.mrb[0].mxu0
      %v1778 = vadd.f32 %v1725, %v1777
      %v1779 = vpop.f32.mrb[0].mxu0
      %v1780 = vadd.f32 %v1727, %v1779
      %v1781 = vpop.f32.mrb[0].mxu0
      %v1782 = vadd.f32 %v1729, %v1781
      %v1783 = vpop.f32.mrb[0].mxu0
      %v1784 = vadd.f32 %v1731, %v1783
      %1785 = vmatprep.mubr.bf16.mxu0 0
      %1786 = vmatmul.mubr.bf16.gmra.mrb[0].mxu0 %v1688
      %v1787 = vpop.f32.mrb[0].mxu0
      %v1788 = vadd.f32 %v1735, %v1787
      %v1789 = vpop.f32.mrb[0].mxu0
      %v1790 = vadd.f32 %v1737, %v1789
      %v1791 = vpop.f32.mrb[0].mxu0
      %v1792 = vadd.f32 %v1739, %v1791
      %v1793 = vpop.f32.mrb[0].mxu0
      %v1794 = vadd.f32 %v1741, %v1793
      %1795 = vdwg.mxu0
      %v1796 = vld [vmem:[%s21] sm:$0xff]
      %v1797 = vld [vmem:[%s21 + $0x8] sm:$0xff]
      %v1798 = vld [vmem:[%s21 + $0x10] sm:$0xff]
      %v1799 = vld [vmem:[%s21 + $0x18] sm:$0xff]
      %1801 = vset.pattern.permute.xlu0 0
      %1802 = vperm.xlu0 %1801, %v1796
      %v1803 = vpop.permute.xlu0 %1802
      %1806 = vset.pattern.permute.xlu0 0
      %1807 = vperm.xlu0 %1806, %v1797
      %v1808 = vpop.permute.xlu0 %1807
      %1811 = vset.pattern.permute.xlu0 0
      %1812 = vperm.xlu0 %1811, %v1798
      %v1813 = vpop.permute.xlu0 %1812
      %1816 = vset.pattern.permute.xlu0 0
      %1817 = vperm.xlu0 %1816, %v1799
      %v1818 = vpop.permute.xlu0 %1817
      %v1820 = vmul.f32 %v1778, %v1803
      %v1821 = vmul.f32 %v1780, %v1803
      %v1822 = vmul.f32 %v1782, %v1808
      %v1823 = vmul.f32 %v1784, %v1808
      %v1824 = vmul.f32 %v1788, %v1813
      %v1825 = vmul.f32 %v1790, %v1813
      %v1826 = vmul.f32 %v1792, %v1818
      %v1827 = vmul.f32 %v1794, %v1818
      %v1828 = vld [vmem:[%s23] sm:$0xff]
      %v1829 = vld [vmem:[%s23 + $0x8] sm:$0xff]
      %v1830 = vld [vmem:[%s23 + $0x10] sm:$0xff]
      %v1831 = vld [vmem:[%s23 + $0x18] sm:$0xff]
      %1833 = vset.pattern.permute.xlu0 0
      %1834 = vperm.xlu0 %1833, %v1828
      %v1835 = vpop.permute.xlu0 %1834
      %1838 = vset.pattern.permute.xlu0 0
      %1839 = vperm.xlu0 %1838, %v1829
      %v1840 = vpop.permute.xlu0 %1839
      %1843 = vset.pattern.permute.xlu0 0
      %1844 = vperm.xlu0 %1843, %v1830
      %v1845 = vpop.permute.xlu0 %1844
      %1848 = vset.pattern.permute.xlu0 0
      %1849 = vperm.xlu0 %1848, %v1831
      %v1850 = vpop.permute.xlu0 %1849
      %v1852 = vadd.f32 %v1820, %v1835
      %v1853 = vadd.f32 %v1821, %v1835
      %v1854 = vadd.f32 %v1822, %v1840
      %v1855 = vadd.f32 %v1823, %v1840
      %v1856 = vadd.f32 %v1824, %v1845
      %v1857 = vadd.f32 %v1825, %v1845
      %v1858 = vadd.f32 %v1826, %v1850
      %v1859 = vadd.f32 %v1827, %v1850
      %v1860 = vmax.f32 %v1852, 0.0
      %v1861 = vmax.f32 %v1853, 0.0
      %v1862 = vmax.f32 %v1854, 0.0
      %v1863 = vmax.f32 %v1855, 0.0
      %v1864 = vmax.f32 %v1856, 0.0
      %v1865 = vmax.f32 %v1857, 0.0
      %v1866 = vmax.f32 %v1858, 0.0
      %v1867 = vmax.f32 %v1859, 0.0
      %1868 = vrot.lane.b32.xlu0 %v1860, 17
      %v1869 = vpop.permute.xlu0 %1868
      %1870 = vrot.lane.b32.xlu0 %v1862, 17
      %v1871 = vpop.permute.xlu0 %1870
      %1872 = vrot.lane.b32.xlu0 %v1864, 17
      %v1873 = vpop.permute.xlu0 %1872
      %1874 = vrot.lane.b32.xlu0 %v1866, 17
      %v1875 = vpop.permute.xlu0 %1874
      %1876 = vrot.lane.b32.xlu0 %v1861, 17
      %v1877 = vpop.permute.xlu0 %1876
      %1878 = vrot.lane.b32.xlu0 %v1863, 17
      %v1879 = vpop.permute.xlu0 %1878
      %1880 = vrot.lane.b32.xlu0 %v1865, 17
      %v1881 = vpop.permute.xlu0 %1880
      %1882 = vrot.lane.b32.xlu0 %v1867, 17
      %v1883 = vpop.permute.xlu0 %1882
      %v1884 = vsel %vm1297, %v1869, %v1877
      %v1885 = vsel %vm1297, %v1871, %v1879
      %v1886 = vsel %vm1297, %v1873, %v1881
      %v1887 = vsel %vm1297, %v1875, %v1883
      %v1888 = vsel %vm1297, %v1877, %v1869
      %v1889 = vsel %vm1297, %v1879, %v1871
      %v1890 = vsel %vm1297, %v1881, %v1873
      %v1891 = vsel %vm1297, %v1883, %v1875
      %v1892 = vmul.f32 %v1888, %v1309
      %v1893 = vmul.f32 %v1884, %v1313
      %v1894 = vmul.f32 %v1889, %v1309
      %v1895 = vmul.f32 %v1885, %v1313
      %v1896 = vmul.f32 %v1890, %v1309
      %v1897 = vmul.f32 %v1886, %v1313
      %v1898 = vmul.f32 %v1891, %v1309
      %v1899 = vmul.f32 %v1887, %v1313
      %v1900 = vpack.c.bf16 %v1894, %v1892
      %v1901 = vpack.c.bf16 %v1895, %v1893
      %v1902 = vpack.c.bf16 %v1898, %v1896
      %v1903 = vpack.c.bf16 %v1899, %v1897
      %1904 = vrot.lane.b32.xlu0 %v1860, 16
      %v1905 = vpop.permute.xlu0 %1904
      %1906 = vrot.lane.b32.xlu0 %v1862, 16
      %v1907 = vpop.permute.xlu0 %1906
      %1908 = vrot.lane.b32.xlu0 %v1864, 16
      %v1909 = vpop.permute.xlu0 %1908
      %1910 = vrot.lane.b32.xlu0 %v1866, 16
      %v1911 = vpop.permute.xlu0 %1910
      %1912 = vrot.lane.b32.xlu0 %v1861, 16
      %v1913 = vpop.permute.xlu0 %1912
      %1914 = vrot.lane.b32.xlu0 %v1863, 16
      %v1915 = vpop.permute.xlu0 %1914
      %1916 = vrot.lane.b32.xlu0 %v1865, 16
      %v1917 = vpop.permute.xlu0 %1916
      %1918 = vrot.lane.b32.xlu0 %v1867, 16
      %v1919 = vpop.permute.xlu0 %1918
      %v1920 = vsel %vm1342, %v1905, %v1913
      %v1921 = vsel %vm1342, %v1907, %v1915
      %v1922 = vsel %vm1342, %v1909, %v1917
      %v1923 = vsel %vm1342, %v1911, %v1919
      %v1924 = vsel %vm1342, %v1913, %v1905
      %v1925 = vsel %vm1342, %v1915, %v1907
      %v1926 = vsel %vm1342, %v1917, %v1909
      %v1927 = vsel %vm1342, %v1919, %v1911
      %v1928 = vmul.f32 %v1924, %v1354
      %v1929 = vmul.f32 %v1920, %v1358
      %v1930 = vmul.f32 %v1925, %v1354
      %v1931 = vmul.f32 %v1921, %v1358
      %v1932 = vmul.f32 %v1926, %v1354
      %v1933 = vmul.f32 %v1922, %v1358
      %v1934 = vmul.f32 %v1927, %v1354
      %v1935 = vmul.f32 %v1923, %v1358
      %v1936 = vpack.c.bf16 %v1930, %v1928
      %v1937 = vpack.c.bf16 %v1931, %v1929
      %v1938 = vpack.c.bf16 %v1934, %v1932
      %v1939 = vpack.c.bf16 %v1935, %v1933
      %1940 = vrot.lane.b32.xlu0 %v1860, 15
      %v1941 = vpop.permute.xlu0 %1940
      %1942 = vrot.lane.b32.xlu0 %v1862, 15
      %v1943 = vpop.permute.xlu0 %1942
      %1944 = vrot.lane.b32.xlu0 %v1864, 15
      %v1945 = vpop.permute.xlu0 %1944
      %1946 = vrot.lane.b32.xlu0 %v1866, 15
      %v1947 = vpop.permute.xlu0 %1946
      %1948 = vrot.lane.b32.xlu0 %v1861, 15
      %v1949 = vpop.permute.xlu0 %1948
      %1950 = vrot.lane.b32.xlu0 %v1863, 15
      %v1951 = vpop.permute.xlu0 %1950
      %1952 = vrot.lane.b32.xlu0 %v1865, 15
      %v1953 = vpop.permute.xlu0 %1952
      %1954 = vrot.lane.b32.xlu0 %v1867, 15
      %v1955 = vpop.permute.xlu0 %1954
      %v1956 = vsel %vm1387, %v1941, %v1949
      %v1957 = vsel %vm1387, %v1943, %v1951
      %v1958 = vsel %vm1387, %v1945, %v1953
      %v1959 = vsel %vm1387, %v1947, %v1955
      %v1960 = vsel %vm1387, %v1949, %v1941
      %v1961 = vsel %vm1387, %v1951, %v1943
      %v1962 = vsel %vm1387, %v1953, %v1945
      %v1963 = vsel %vm1387, %v1955, %v1947
      %v1964 = vmul.f32 %v1960, %v1399
      %v1965 = vmul.f32 %v1956, %v1403
      %v1966 = vmul.f32 %v1961, %v1399
      %v1967 = vmul.f32 %v1957, %v1403
      %v1968 = vmul.f32 %v1962, %v1399
      %v1969 = vmul.f32 %v1958, %v1403
      %v1970 = vmul.f32 %v1963, %v1399
      %v1971 = vmul.f32 %v1959, %v1403
      %v1972 = vpack.c.bf16 %v1966, %v1964
      %v1973 = vpack.c.bf16 %v1967, %v1965
      %v1974 = vpack.c.bf16 %v1970, %v1968
      %v1975 = vpack.c.bf16 %v1971, %v1969
      %1976 = vrot.lane.b32.xlu0 %v1860, 1
      %v1977 = vpop.permute.xlu0 %1976
      %1978 = vrot.lane.b32.xlu0 %v1862, 1
      %v1979 = vpop.permute.xlu0 %1978
      %1980 = vrot.lane.b32.xlu0 %v1864, 1
      %v1981 = vpop.permute.xlu0 %1980
      %1982 = vrot.lane.b32.xlu0 %v1866, 1
      %v1983 = vpop.permute.xlu0 %1982
      %1984 = vrot.lane.b32.xlu0 %v1861, 1
      %v1985 = vpop.permute.xlu0 %1984
      %1986 = vrot.lane.b32.xlu0 %v1863, 1
      %v1987 = vpop.permute.xlu0 %1986
      %1988 = vrot.lane.b32.xlu0 %v1865, 1
      %v1989 = vpop.permute.xlu0 %1988
      %1990 = vrot.lane.b32.xlu0 %v1867, 1
      %v1991 = vpop.permute.xlu0 %1990
      %v1992 = vsel %vm1432, %v1977, %v1985
      %v1993 = vsel %vm1432, %v1979, %v1987
      %v1994 = vsel %vm1432, %v1981, %v1989
      %v1995 = vsel %vm1432, %v1983, %v1991
      %v1996 = vsel %vm1432, %v1985, %v1977
      %v1997 = vsel %vm1432, %v1987, %v1979
      %v1998 = vsel %vm1432, %v1989, %v1981
      %v1999 = vsel %vm1432, %v1991, %v1983
      %v2000 = vmul.f32 %v1996, %v1444
      %v2001 = vmul.f32 %v1992, %v1448
      %v2002 = vmul.f32 %v1997, %v1444
      %v2003 = vmul.f32 %v1993, %v1448
      %v2004 = vmul.f32 %v1998, %v1444
      %v2005 = vmul.f32 %v1994, %v1448
      %v2006 = vmul.f32 %v1999, %v1444
      %v2007 = vmul.f32 %v1995, %v1448
      %v2008 = vpack.c.bf16 %v2002, %v2000
      %v2009 = vpack.c.bf16 %v2003, %v2001
      %v2010 = vpack.c.bf16 %v2006, %v2004
      %v2011 = vpack.c.bf16 %v2007, %v2005
      %v2012 = vpack.c.bf16 %v1862, %v1860
      %v2013 = vpack.c.bf16 %v1863, %v1861
      %v2014 = vpack.c.bf16 %v1866, %v1864
      %v2015 = vpack.c.bf16 %v1867, %v1865
      %2016 = vrot.lane.b32.xlu0 %v1860, 127
      %v2017 = vpop.permute.xlu0 %2016
      %2018 = vrot.lane.b32.xlu0 %v1862, 127
      %v2019 = vpop.permute.xlu0 %2018
      %2020 = vrot.lane.b32.xlu0 %v1864, 127
      %v2021 = vpop.permute.xlu0 %2020
      %2022 = vrot.lane.b32.xlu0 %v1866, 127
      %v2023 = vpop.permute.xlu0 %2022
      %2024 = vrot.lane.b32.xlu0 %v1861, 127
      %v2025 = vpop.permute.xlu0 %2024
      %2026 = vrot.lane.b32.xlu0 %v1863, 127
      %v2027 = vpop.permute.xlu0 %2026
      %2028 = vrot.lane.b32.xlu0 %v1865, 127
      %v2029 = vpop.permute.xlu0 %2028
      %2030 = vrot.lane.b32.xlu0 %v1867, 127
      %v2031 = vpop.permute.xlu0 %2030
      %v2032 = vsel %vm1481, %v2017, %v2025
      %v2033 = vsel %vm1481, %v2019, %v2027
      %v2034 = vsel %vm1481, %v2021, %v2029
      %v2035 = vsel %vm1481, %v2023, %v2031
      %v2036 = vsel %vm1481, %v2025, %v2017
      %v2037 = vsel %vm1481, %v2027, %v2019
      %v2038 = vsel %vm1481, %v2029, %v2021
      %v2039 = vsel %vm1481, %v2031, %v2023
      %v2040 = vmul.f32 %v2032, %v1493
      %v2041 = vmul.f32 %v2036, %v1497
      %v2042 = vmul.f32 %v2033, %v1493
      %v2043 = vmul.f32 %v2037, %v1497
      %v2044 = vmul.f32 %v2034, %v1493
      %v2045 = vmul.f32 %v2038, %v1497
      %v2046 = vmul.f32 %v2035, %v1493
      %v2047 = vmul.f32 %v2039, %v1497
      %v2048 = vpack.c.bf16 %v2042, %v2040
      %v2049 = vpack.c.bf16 %v2043, %v2041
      %v2050 = vpack.c.bf16 %v2046, %v2044
      %v2051 = vpack.c.bf16 %v2047, %v2045
      %2052 = vrot.lane.b32.xlu0 %v1860, 113
      %v2053 = vpop.permute.xlu0 %2052
      %2054 = vrot.lane.b32.xlu0 %v1862, 113
      %v2055 = vpop.permute.xlu0 %2054
      %2056 = vrot.lane.b32.xlu0 %v1864, 113
      %v2057 = vpop.permute.xlu0 %2056
      %2058 = vrot.lane.b32.xlu0 %v1866, 113
      %v2059 = vpop.permute.xlu0 %2058
      %2060 = vrot.lane.b32.xlu0 %v1861, 113
      %v2061 = vpop.permute.xlu0 %2060
      %2062 = vrot.lane.b32.xlu0 %v1863, 113
      %v2063 = vpop.permute.xlu0 %2062
      %2064 = vrot.lane.b32.xlu0 %v1865, 113
      %v2065 = vpop.permute.xlu0 %2064
      %2066 = vrot.lane.b32.xlu0 %v1867, 113
      %v2067 = vpop.permute.xlu0 %2066
      %v2068 = vsel %vm1526, %v2053, %v2061
      %v2069 = vsel %vm1526, %v2055, %v2063
      %v2070 = vsel %vm1526, %v2057, %v2065
      %v2071 = vsel %vm1526, %v2059, %v2067
      %v2072 = vsel %vm1526, %v2061, %v2053
      %v2073 = vsel %vm1526, %v2063, %v2055
      %v2074 = vsel %vm1526, %v2065, %v2057
      %v2075 = vsel %vm1526, %v2067, %v2059
      %v2076 = vmul.f32 %v2068, %v1538
      %v2077 = vmul.f32 %v2072, %v1542
      %v2078 = vmul.f32 %v2069, %v1538
      %v2079 = vmul.f32 %v2073, %v1542
      %v2080 = vmul.f32 %v2070, %v1538
      %v2081 = vmul.f32 %v2074, %v1542
      %v2082 = vmul.f32 %v2071, %v1538
      %v2083 = vmul.f32 %v2075, %v1542
      %v2084 = vpack.c.bf16 %v2078, %v2076
      %v2085 = vpack.c.bf16 %v2079, %v2077
      %v2086 = vpack.c.bf16 %v2082, %v2080
      %v2087 = vpack.c.bf16 %v2083, %v2081
      %2088 = vrot.lane.b32.xlu0 %v1860, 112
      %v2089 = vpop.permute.xlu0 %2088
      %2090 = vrot.lane.b32.xlu0 %v1862, 112
      %v2091 = vpop.permute.xlu0 %2090
      %2092 = vrot.lane.b32.xlu0 %v1864, 112
      %v2093 = vpop.permute.xlu0 %2092
      %2094 = vrot.lane.b32.xlu0 %v1866, 112
      %v2095 = vpop.permute.xlu0 %2094
      %2096 = vrot.lane.b32.xlu0 %v1861, 112
      %v2097 = vpop.permute.xlu0 %2096
      %2098 = vrot.lane.b32.xlu0 %v1863, 112
      %v2099 = vpop.permute.xlu0 %2098
      %2100 = vrot.lane.b32.xlu0 %v1865, 112
      %v2101 = vpop.permute.xlu0 %2100
      %2102 = vrot.lane.b32.xlu0 %v1867, 112
      %v2103 = vpop.permute.xlu0 %2102
      %v2104 = vsel %vm1571, %v2089, %v2097
      %v2105 = vsel %vm1571, %v2091, %v2099
      %v2106 = vsel %vm1571, %v2093, %v2101
      %v2107 = vsel %vm1571, %v2095, %v2103
      %v2108 = vsel %vm1571, %v2097, %v2089
      %v2109 = vsel %vm1571, %v2099, %v2091
      %v2110 = vsel %vm1571, %v2101, %v2093
      %v2111 = vsel %vm1571, %v2103, %v2095
      %v2112 = vmul.f32 %v2104, %v1583
      %v2113 = vmul.f32 %v2108, %v1587
      %v2114 = vmul.f32 %v2105, %v1583
      %v2115 = vmul.f32 %v2109, %v1587
      %v2116 = vmul.f32 %v2106, %v1583
      %v2117 = vmul.f32 %v2110, %v1587
      %v2118 = vmul.f32 %v2107, %v1583
      %v2119 = vmul.f32 %v2111, %v1587
      %v2120 = vpack.c.bf16 %v2114, %v2112
      %v2121 = vpack.c.bf16 %v2115, %v2113
      %v2122 = vpack.c.bf16 %v2118, %v2116
      %v2123 = vpack.c.bf16 %v2119, %v2117
      %2124 = vrot.lane.b32.xlu0 %v1860, 111
      %v2125 = vpop.permute.xlu0 %2124
      %2126 = vrot.lane.b32.xlu0 %v1862, 111
      %v2127 = vpop.permute.xlu0 %2126
      %2128 = vrot.lane.b32.xlu0 %v1864, 111
      %v2129 = vpop.permute.xlu0 %2128
      %2130 = vrot.lane.b32.xlu0 %v1866, 111
      %v2131 = vpop.permute.xlu0 %2130
      %2132 = vrot.lane.b32.xlu0 %v1861, 111
      %v2133 = vpop.permute.xlu0 %2132
      %2134 = vrot.lane.b32.xlu0 %v1863, 111
      %v2135 = vpop.permute.xlu0 %2134
      %2136 = vrot.lane.b32.xlu0 %v1865, 111
      %v2137 = vpop.permute.xlu0 %2136
      %2138 = vrot.lane.b32.xlu0 %v1867, 111
      %v2139 = vpop.permute.xlu0 %2138
      %v2140 = vsel %vm1616, %v2125, %v2133
      %v2141 = vsel %vm1616, %v2127, %v2135
      %v2142 = vsel %vm1616, %v2129, %v2137
      %v2143 = vsel %vm1616, %v2131, %v2139
      %v2144 = vsel %vm1616, %v2133, %v2125
      %v2145 = vsel %vm1616, %v2135, %v2127
      %v2146 = vsel %vm1616, %v2137, %v2129
      %v2147 = vsel %vm1616, %v2139, %v2131
      %v2148 = vmul.f32 %v2140, %v1628
      %v2149 = vmul.f32 %v2144, %v1632
      %v2150 = vmul.f32 %v2141, %v1628
      %v2151 = vmul.f32 %v2145, %v1632
      %v2152 = vmul.f32 %v2142, %v1628
      %v2153 = vmul.f32 %v2146, %v1632
      %v2154 = vmul.f32 %v2143, %v1628
      %v2155 = vmul.f32 %v2147, %v1632
      %v2156 = vpack.c.bf16 %v2150, %v2148
      %v2157 = vpack.c.bf16 %v2151, %v2149
      %v2158 = vpack.c.bf16 %v2154, %v2152
      %v2159 = vpack.c.bf16 %v2155, %v2153
      %v2160 = vld [vmem:[%s25] sm:$0xff]
      %v2161 = vld [vmem:[%s25 + $0x8] sm:$0xf]
      %v2162 = vld [vmem:[%s25 + $0xc] sm:$0xff]
      %v2163 = vld [vmem:[%s25 + $0x14] sm:$0xf]
      %v2164 = vld [vmem:[%s25 + $0x18] sm:$0xff]
      %v2165 = vld [vmem:[%s25 + $0x20] sm:$0xf]
      %v2166 = vld [vmem:[%s25 + $0x24] sm:$0xff]
      %v2167 = vld [vmem:[%s25 + $0x2c] sm:$0xf]
      %v2168 = vld [vmem:[%s27] sm:$0xff]
      %v2169 = vld [vmem:[%s27 + $0x8] sm:$0xff]
      %v2170 = vld [vmem:[%s27 + $0x10] sm:$0xff]
      %v2171 = vld [vmem:[%s27 + $0x18] sm:$0xff]
      %2173 = vset.pattern.permute.xlu0 0
      %2174 = vperm.xlu0 %2173, %v2168
      %v2175 = vpop.permute.xlu0 %2174
      %2178 = vset.pattern.permute.xlu0 0
      %2179 = vperm.xlu0 %2178, %v2169
      %v2180 = vpop.permute.xlu0 %2179
      %2183 = vset.pattern.permute.xlu0 0
      %2184 = vperm.xlu0 %2183, %v2170
      %v2185 = vpop.permute.xlu0 %2184
      %2188 = vset.pattern.permute.xlu0 0
      %2189 = vperm.xlu0 %2188, %v2171
      %v2190 = vpop.permute.xlu0 %2189
      %v2200 = vunpack.c.l.b16 %v2160
      %v2201 = vunpack.c.h.b16 %v2160
      %v2202 = vunpack.c.l.b16 %v2161
      %v2203 = vunpack.c.l.b16 %v2162
      %v2204 = vunpack.c.h.b16 %v2162
      %v2205 = vunpack.c.l.b16 %v2163
      %v2206 = vunpack.c.l.b16 %v2164
      %v2207 = vunpack.c.h.b16 %v2164
      %v2208 = vunpack.c.l.b16 %v2165
      %v2209 = vunpack.c.l.b16 %v2166
      %v2210 = vunpack.c.h.b16 %v2166
      %v2211 = vunpack.c.l.b16 %v2167
      %v2212 = vpack.c.b16 %v2203, %v2200
      %v2213 = vpack.c.b16 %v2204, %v2201
      %v2214 = vpack.c.b16 %v2205, %v2202
      %v2215 = vpack.c.b16 %v2209, %v2206
      %v2216 = vpack.c.b16 %v2210, %v2207
      %v2217 = vpack.c.b16 %v2211, %v2208
      %v2223 = vsel %vm1683, %v2214, 0
      %v2226 = vsel %vm1683, %v2217, 0
      %2228 = vmatprep.subr.bf16.mxu0 %v1901
      %2229 = vmatpush1.bf16.msra.mxu0 %v1900
      %2230 = vmatprep.subr.bf16.mxu0 %v1903
      %2231 = vmatpush1.bf16.msra.mxu0 %v1902
      %2232 = vmatprep.subr.bf16.mxu0 %v1937
      %2233 = vmatpush1.bf16.msra.mxu0 %v1936
      %2234 = vmatprep.subr.bf16.mxu0 %v1939
      %2235 = vmatpush1.bf16.msra.mxu0 %v1938
      %2236 = vmatprep.subr.bf16.mxu0 %v1973
      %2237 = vmatpush1.bf16.msra.mxu0 %v1972
      %2238 = vmatprep.subr.bf16.mxu0 %v1975
      %2239 = vmatpush1.bf16.msra.mxu0 %v1974
      %2240 = vmatprep.subr.bf16.mxu0 %v2009
      %2241 = vmatpush1.bf16.msra.mxu0 %v2008
      %2242 = vmatprep.subr.bf16.mxu0 %v2011
      %2243 = vmatpush1.bf16.msra.mxu0 %v2010
      %2244 = vmatprep.subr.bf16.mxu0 %v2013
      %2245 = vmatpush1.bf16.msra.mxu0 %v2012
      %2246 = vmatprep.subr.bf16.mxu0 %v2015
      %2247 = vmatpush1.bf16.msra.mxu0 %v2014
      %2248 = vmatprep.subr.bf16.mxu0 %v2049
      %2249 = vmatpush1.bf16.msra.mxu0 %v2048
      %2250 = vmatprep.subr.bf16.mxu0 %v2051
      %2251 = vmatpush1.bf16.msra.mxu0 %v2050
      %2252 = vmatprep.subr.bf16.mxu0 %v2085
      %2253 = vmatpush1.bf16.msra.mxu0 %v2084
      %2254 = vmatprep.subr.bf16.mxu0 %v2087
      %2255 = vmatpush1.bf16.msra.mxu0 %v2086
      %2256 = vmatprep.subr.bf16.mxu0 %v2121
      %2257 = vmatpush1.bf16.msra.mxu0 %v2120
      %2258 = vmatprep.subr.bf16.mxu0 %v2123
      %2259 = vmatpush1.bf16.msra.mxu0 %v2122
      %2260 = vmatprep.mubr.bf16.mxu0 %v2213
      %2261 = vmatmul.mubr.bf16.gmra.mrb[0].mxu0 %v2212
      %v2262 = vpop.f32.mrb[0].mxu0
      %v2263 = vadd.f32 %v2175, %v2262
      %v2264 = vpop.f32.mrb[0].mxu0
      %v2265 = vadd.f32 %v2175, %v2264
      %v2266 = vpop.f32.mrb[0].mxu0
      %v2267 = vadd.f32 %v2180, %v2266
      %v2268 = vpop.f32.mrb[0].mxu0
      %v2269 = vadd.f32 %v2180, %v2268
      %2270 = vmatprep.mubr.bf16.mxu0 %v2216
      %2271 = vmatmul.mubr.bf16.gmra.mrb[0].mxu0 %v2215
      %v2272 = vpop.f32.mrb[0].mxu0
      %v2273 = vadd.f32 %v2185, %v2272
      %v2274 = vpop.f32.mrb[0].mxu0
      %v2275 = vadd.f32 %v2185, %v2274
      %v2276 = vpop.f32.mrb[0].mxu0
      %v2277 = vadd.f32 %v2190, %v2276
      %v2278 = vpop.f32.mrb[0].mxu0
      %v2279 = vadd.f32 %v2190, %v2278
      %2280 = vdwg.mxu0
      %2281 = vmatprep.subr.bf16.mxu0 %v2157
      %2282 = vmatpush1.bf16.msra.mxu0 %v2156
      %2283 = vmatprep.subr.bf16.mxu0 %v2159
      %2284 = vmatpush1.bf16.msra.mxu0 %v2158
      %2285 = vmatprep.subr.bf16.mxu0 0
      %2286 = vmatpush1.bf16.msra.mxu0 0
      %2287 = vmatprep.subr.bf16.mxu0 0
      %2288 = vmatpush1.bf16.msra.mxu0 0
      %2289 = vmatprep.subr.bf16.mxu0 0
      %2290 = vmatpush1.bf16.msra.mxu0 0
      %2291 = vmatprep.subr.bf16.mxu0 0
      %2292 = vmatpush1.bf16.msra.mxu0 0
      %2293 = vmatprep.subr.bf16.mxu0 0
      %2294 = vmatpush1.bf16.msra.mxu0 0
      %2295 = vmatprep.subr.bf16.mxu0 0
      %2296 = vmatpush1.bf16.msra.mxu0 0
      %2297 = vmatprep.subr.bf16.mxu0 0
      %2298 = vmatpush1.bf16.msra.mxu0 0
      %2299 = vmatprep.subr.bf16.mxu0 0
      %2300 = vmatpush1.bf16.msra.mxu0 0
      %2301 = vmatprep.subr.bf16.mxu0 0
      %2302 = vmatpush1.bf16.msra.mxu0 0
      %2303 = vmatprep.subr.bf16.mxu0 0
      %2304 = vmatpush1.bf16.msra.mxu0 0
      %2305 = vmatprep.subr.bf16.mxu0 0
      %2306 = vmatpush1.bf16.msra.mxu0 0
      %2307 = vmatprep.subr.bf16.mxu0 0
      %2308 = vmatpush1.bf16.msra.mxu0 0
      %2309 = vmatprep.subr.bf16.mxu0 0
      %2310 = vmatpush1.bf16.msra.mxu0 0
      %2311 = vmatprep.subr.bf16.mxu0 0
      %2312 = vmatpush1.bf16.msra.mxu0 0
      %2313 = vmatprep.mubr.bf16.mxu0 0
      %2314 = vmatmul.mubr.bf16.gmra.mrb[0].mxu0 %v2223
      %v2315 = vpop.f32.mrb[0].mxu0
      %v2316 = vadd.f32 %v2263, %v2315
      %v2317 = vpop.f32.mrb[0].mxu0
      %v2318 = vadd.f32 %v2265, %v2317
      %v2319 = vpop.f32.mrb[0].mxu0
      %v2320 = vadd.f32 %v2267, %v2319
      %v2321 = vpop.f32.mrb[0].mxu0
      %v2322 = vadd.f32 %v2269, %v2321
      %2323 = vmatprep.mubr.bf16.mxu0 0
      %2324 = vmatmul.mubr.bf16.gmra.mrb[0].mxu0 %v2226
      %v2325 = vpop.f32.mrb[0].mxu0
      %v2326 = vadd.f32 %v2273, %v2325
      %v2327 = vpop.f32.mrb[0].mxu0
      %v2328 = vadd.f32 %v2275, %v2327
      %v2329 = vpop.f32.mrb[0].mxu0
      %v2330 = vadd.f32 %v2277, %v2329
      %v2331 = vpop.f32.mrb[0].mxu0
      %v2332 = vadd.f32 %v2279, %v2331
      %2333 = vdwg.mxu0
      %v2334 = vadd.f32 %v1271, %v2316
      %v2335 = vadd.f32 %v1272, %v2318
      %v2336 = vadd.f32 %v1273, %v2320
      %v2337 = vadd.f32 %v1274, %v2322
      %v2338 = vadd.f32 %v1275, %v2326
      %v2339 = vadd.f32 %v1276, %v2328
      %v2340 = vadd.f32 %v1277, %v2330
      %v2341 = vadd.f32 %v1278, %v2332
      %v2342 = vmax.f32 %v2334, 0.0
      %v2343 = vmax.f32 %v2335, 0.0
      %v2344 = vmax.f32 %v2336, 0.0
      %v2345 = vmax.f32 %v2337, 0.0
      %v2346 = vmax.f32 %v2338, 0.0
      %v2347 = vmax.f32 %v2339, 0.0
      %v2348 = vmax.f32 %v2340, 0.0
      %v2349 = vmax.f32 %v2341, 0.0
      %v2350 = vadd.f32 %v1002, %v1003
      %2351 = vadd.xlane.f32.xlu0 %v2350
      %v2352 = vpop.xlane.xlu0 %2351
      %v2353 = vadd.f32 %v1004, %v1005
      %2354 = vadd.xlane.f32.xlu0 %v2353
      %v2355 = vpop.xlane.xlu0 %2354
      %v2356 = vadd.f32 %v1006, %v1007
      %2357 = vadd.xlane.f32.xlu0 %v2356
      %v2358 = vpop.xlane.xlu0 %2357
      %v2359 = vadd.f32 %v1008, %v1009
      %2360 = vadd.xlane.f32.xlu0 %v2359
      %v2361 = vpop.xlane.xlu0 %2360
      %v2362 = vrcp.pop 256.0
      %v2363 = vmul.f32 %v2352, %v2362
      %v2364 = vmul.f32 %v2355, %v2362
      %v2365 = vmul.f32 %v2358, %v2362
      %v2366 = vmul.f32 %v2361, %v2362
      %v2367 = vadd.f32 %v2342, %v2343
      %2368 = vadd.xlane.f32.xlu0 %v2367
      %v2369 = vpop.xlane.xlu0 %2368
      %v2370 = vadd.f32 %v2344, %v2345
      %2371 = vadd.xlane.f32.xlu0 %v2370
      %v2372 = vpop.xlane.xlu0 %2371
      %v2373 = vadd.f32 %v2346, %v2347
      %2374 = vadd.xlane.f32.xlu0 %v2373
      %v2375 = vpop.xlane.xlu0 %2374
      %v2376 = vadd.f32 %v2348, %v2349
      %2377 = vadd.xlane.f32.xlu0 %v2376
      %v2378 = vpop.xlane.xlu0 %2377
      %v2379 = vmul.f32 %v2369, %v2362
      %v2380 = vmul.f32 %v2372, %v2362
      %v2381 = vmul.f32 %v2375, %v2362
      %v2382 = vmul.f32 %v2378, %v2362
      %v2383 = vld [vmem:[%s29] sm:$0xff]
      %v2384 = vld [vmem:[%s29 + $0x8] sm:$0xff]
      %v2385 = vld [vmem:[%s29 + $0x10] sm:$0xff]
      %v2386 = vld [vmem:[%s29 + $0x18] sm:$0xff]
      %v2387 = vld [vmem:[%s31] sm:$0xff]
      %v2388 = vld [vmem:[%s31 + $0x8] sm:$0xff]
      %v2389 = vld [vmem:[%s31 + $0x10] sm:$0xff]
      %v2390 = vld [vmem:[%s31 + $0x18] sm:$0xff]
      %v2392 = vsel %vm1683, %v2387, 0
      %v2395 = vsel %vm1683, %v2388, 0
      %v2398 = vsel %vm1683, %v2389, 0
      %v2401 = vsel %vm1683, %v2390, 0
      %2403 = vmatprep.subr.mxu0 0.0
      %2404 = vmatpush1.msra.mxu0 %v2379
      %2405 = vmatprep.subr.mxu0 0.0
      %2406 = vmatpush1.msra.mxu0 %v2380
      %2407 = vmatprep.subr.mxu0 0.0
      %2408 = vmatpush1.msra.mxu0 %v2381
      %2409 = vmatprep.subr.mxu0 0.0
      %2410 = vmatpush1.msra.mxu0 %v2382
      %2411 = vmatprep.subr.mxu0 0.0
      %2412 = vmatpush1.msra.mxu0 0.0
      %2413 = vmatprep.subr.mxu0 0.0
      %2414 = vmatpush1.msra.mxu0 0.0
      %2415 = vmatprep.subr.mxu0 0.0
      %2416 = vmatpush1.msra.mxu0 0.0
      %2417 = vmatprep.subr.mxu0 0.0
      %2418 = vmatpush1.msra.mxu0 0.0
      %2419 = vmatprep.subr.mxu0 0.0
      %2420 = vmatpush1.msra.mxu0 0.0
      %2421 = vmatprep.subr.mxu0 0.0
      %2422 = vmatpush1.msra.mxu0 0.0
      %2423 = vmatprep.subr.mxu0 0.0
      %2424 = vmatpush1.msra.mxu0 0.0
      %2425 = vmatprep.subr.mxu0 0.0
      %2426 = vmatpush1.msra.mxu0 0.0
      %2427 = vmatprep.subr.mxu0 0.0
      %2428 = vmatpush1.msra.mxu0 0.0
      %2429 = vmatprep.subr.mxu0 0.0
      %2430 = vmatpush1.msra.mxu0 0.0
      %2431 = vmatprep.subr.mxu0 0.0
      %2432 = vmatpush1.msra.mxu0 0.0
      %2433 = vmatprep.subr.mxu0 0.0
      %2434 = vmatpush1.msra.mxu0 0.0
      %2435 = vmatprep.subr.mxu0 0.0
      %2436 = vmatpush1.msra.mxu0 0.0
      %2437 = vmatprep.subr.mxu0 0.0
      %2438 = vmatpush1.msra.mxu0 0.0
      %2439 = vmatprep.subr.mxu0 0.0
      %2440 = vmatpush1.msra.mxu0 0.0
      %2441 = vmatprep.subr.mxu0 0.0
      %2442 = vmatpush1.msra.mxu0 0.0
      %2443 = vmatprep.subr.mxu0 0.0
      %2444 = vmatpush1.msra.mxu0 0.0
      %2445 = vmatprep.subr.mxu0 0.0
      %2446 = vmatpush1.msra.mxu0 0.0
      %2447 = vmatprep.subr.mxu0 0.0
      %2448 = vmatpush1.msra.mxu0 0.0
      %2449 = vmatprep.subr.mxu0 0.0
      %2450 = vmatpush1.msra.mxu0 0.0
      %2451 = vmatprep.subr.mxu0 0.0
      %2452 = vmatpush1.msra.mxu0 0.0
      %2453 = vmatprep.subr.mxu0 0.0
      %2454 = vmatpush1.msra.mxu0 0.0
      %2455 = vmatprep.subr.mxu0 0.0
      %2456 = vmatpush1.msra.mxu0 0.0
      %2457 = vmatprep.subr.mxu0 0.0
      %2458 = vmatpush1.msra.mxu0 0.0
      %2459 = vmatprep.subr.mxu0 0.0
      %2460 = vmatpush1.msra.mxu0 0.0
      %2461 = vmatprep.subr.mxu0 0.0
      %2462 = vmatpush1.msra.mxu0 0.0
      %2463 = vmatprep.subr.mxu0 0.0
      %2464 = vmatpush1.msra.mxu0 0.0
      %2465 = vmatprep.subr.mxu0 0.0
      %2466 = vmatpush1.msra.mxu0 0.0
      %2467 = vmatprep.mubr.f32.mxu0 0.0
      %2468 = vmatmul.mubr.f32.gmra.mrb[0].mxu0 %v2392
      %v2469 = vpop.f32.mrb[0].mxu0
      %v2470 = vadd.f32 0.0, %v2469
      %v2471 = vpop.f32.mrb[0].mxu0
      %2472 = vmatprep.mubr.f32.mxu0 0.0
      %2473 = vmatmul.mubr.f32.gmra.mrb[0].mxu0 %v2395
      %v2474 = vpop.f32.mrb[0].mxu0
      %v2475 = vadd.f32 0.0, %v2474
      %v2476 = vpop.f32.mrb[0].mxu0
      %2477 = vmatprep.mubr.f32.mxu0 0.0
      %2478 = vmatmul.mubr.f32.gmra.mrb[0].mxu0 %v2398
      %v2479 = vpop.f32.mrb[0].mxu0
      %v2480 = vadd.f32 0.0, %v2479
      %v2481 = vpop.f32.mrb[0].mxu0
      %2482 = vmatprep.mubr.f32.mxu0 0.0
      %2483 = vmatmul.mubr.f32.gmra.mrb[0].mxu0 %v2401
      %v2484 = vpop.f32.mrb[0].mxu0
      %v2485 = vadd.f32 0.0, %v2484
      %v2486 = vpop.f32.mrb[0].mxu0
      %2487 = vdwg.mxu0
      %v2489 = vsel %vm1683, %v2383, 0
      %v2492 = vsel %vm1683, %v2384, 0
      %v2495 = vsel %vm1683, %v2385, 0
      %v2498 = vsel %vm1683, %v2386, 0
      %2500 = vmatprep.subr.mxu0 0.0
      %2501 = vmatpush1.msra.mxu0 %v2363
      %2502 = vmatprep.subr.mxu0 0.0
      %2503 = vmatpush1.msra.mxu0 %v2364
      %2504 = vmatprep.subr.mxu0 0.0
      %2505 = vmatpush1.msra.mxu0 %v2365
      %2506 = vmatprep.subr.mxu0 0.0
      %2507 = vmatpush1.msra.mxu0 %v2366
      %2508 = vmatprep.subr.mxu0 0.0
      %2509 = vmatpush1.msra.mxu0 0.0
      %2510 = vmatprep.subr.mxu0 0.0
      %2511 = vmatpush1.msra.mxu0 0.0
      %2512 = vmatprep.subr.mxu0 0.0
      %2513 = vmatpush1.msra.mxu0 0.0
      %2514 = vmatprep.subr.mxu0 0.0
      %2515 = vmatpush1.msra.mxu0 0.0
      %2516 = vmatprep.subr.mxu0 0.0
      %2517 = vmatpush1.msra.mxu0 0.0
      %2518 = vmatprep.subr.mxu0 0.0
      %2519 = vmatpush1.msra.mxu0 0.0
      %2520 = vmatprep.subr.mxu0 0.0
      %2521 = vmatpush1.msra.mxu0 0.0
      %2522 = vmatprep.subr.mxu0 0.0
      %2523 = vmatpush1.msra.mxu0 0.0
      %2524 = vmatprep.subr.mxu0 0.0
      %2525 = vmatpush1.msra.mxu0 0.0
      %2526 = vmatprep.subr.mxu0 0.0
      %2527 = vmatpush1.msra.mxu0 0.0
      %2528 = vmatprep.subr.mxu0 0.0
      %2529 = vmatpush1.msra.mxu0 0.0
      %2530 = vmatprep.subr.mxu0 0.0
      %2531 = vmatpush1.msra.mxu0 0.0
      %2532 = vmatprep.subr.mxu0 0.0
      %2533 = vmatpush1.msra.mxu0 0.0
      %2534 = vmatprep.subr.mxu0 0.0
      %2535 = vmatpush1.msra.mxu0 0.0
      %2536 = vmatprep.subr.mxu0 0.0
      %2537 = vmatpush1.msra.mxu0 0.0
      %2538 = vmatprep.subr.mxu0 0.0
      %2539 = vmatpush1.msra.mxu0 0.0
      %2540 = vmatprep.subr.mxu0 0.0
      %2541 = vmatpush1.msra.mxu0 0.0
      %2542 = vmatprep.subr.mxu0 0.0
      %2543 = vmatpush1.msra.mxu0 0.0
      %2544 = vmatprep.subr.mxu0 0.0
      %2545 = vmatpush1.msra.mxu0 0.0
      %2546 = vmatprep.subr.mxu0 0.0
      %2547 = vmatpush1.msra.mxu0 0.0
      %2548 = vmatprep.subr.mxu0 0.0
      %2549 = vmatpush1.msra.mxu0 0.0
      %2550 = vmatprep.subr.mxu0 0.0
      %2551 = vmatpush1.msra.mxu0 0.0
      %2552 = vmatprep.subr.mxu0 0.0
      %2553 = vmatpush1.msra.mxu0 0.0
      %2554 = vmatprep.subr.mxu0 0.0
      %2555 = vmatpush1.msra.mxu0 0.0
      %2556 = vmatprep.subr.mxu0 0.0
      %2557 = vmatpush1.msra.mxu0 0.0
      %2558 = vmatprep.subr.mxu0 0.0
      %2559 = vmatpush1.msra.mxu0 0.0
      %2560 = vmatprep.subr.mxu0 0.0
      %2561 = vmatpush1.msra.mxu0 0.0
      %2562 = vmatprep.subr.mxu0 0.0
      %2563 = vmatpush1.msra.mxu0 0.0
      %2564 = vmatprep.mubr.f32.mxu0 0.0
      %2565 = vmatmul.mubr.f32.gmra.mrb[0].mxu0 %v2489
      %v2566 = vpop.f32.mrb[0].mxu0
      %v2567 = vadd.f32 %v2470, %v2566
      %v2568 = vpop.f32.mrb[0].mxu0
      %2569 = vmatprep.mubr.f32.mxu0 0.0
      %2570 = vmatmul.mubr.f32.gmra.mrb[0].mxu0 %v2492
      %v2571 = vpop.f32.mrb[0].mxu0
      %v2572 = vadd.f32 %v2475, %v2571
      %v2573 = vpop.f32.mrb[0].mxu0
      %2574 = vmatprep.mubr.f32.mxu0 0.0
      %2575 = vmatmul.mubr.f32.gmra.mrb[0].mxu0 %v2495
      %v2576 = vpop.f32.mrb[0].mxu0
      %v2577 = vadd.f32 %v2480, %v2576
      %v2578 = vpop.f32.mrb[0].mxu0
      %2579 = vmatprep.mubr.f32.mxu0 0.0
      %2580 = vmatmul.mubr.f32.gmra.mrb[0].mxu0 %v2498
      %v2581 = vpop.f32.mrb[0].mxu0
      %v2582 = vadd.f32 %v2485, %v2581
      %v2583 = vpop.f32.mrb[0].mxu0
      %2584 = vdwg.mxu0
      %v2585 = vld [vmem:[%s33] sm:$0xff]
      %v2586 = vld [vmem:[%s33 + $0x8] sm:$0xff]
      %v2587 = vld [vmem:[%s33 + $0x10] sm:$0xff]
      %v2588 = vld [vmem:[%s33 + $0x18] sm:$0xff]
      %v2589 = vadd.f32 %v2567, %v2585
      %v2590 = vadd.f32 %v2572, %v2586
      %v2591 = vadd.f32 %v2577, %v2587
      %v2592 = vadd.f32 %v2582, %v2588
      %v2593 = vmax.f32 %v2589, 0.0
      %v2594 = vmax.f32 %v2590, 0.0
      %v2595 = vmax.f32 %v2591, 0.0
      %v2596 = vmax.f32 %v2592, 0.0
      %v2597 = vld [vmem:[%s35] sm:$0xff]
      %v2598 = vld [vmem:[%s35 + $0x8] sm:$0xff]
      %v2599 = vld [vmem:[%s35 + $0x10] sm:$0xff]
      %v2600 = vld [vmem:[%s35 + $0x18] sm:$0xff]
      %v2601 = vld [vmem:[%s37] sm:$0xff]
      %v2602 = vld [vmem:[%s37 + $0x8] sm:$0xff]
      %v2603 = vld [vmem:[%s37 + $0x10] sm:$0xff]
      %v2604 = vld [vmem:[%s37 + $0x18] sm:$0xff]
      %v2606 = vsel %vm1683, %v2597, 0
      %v2609 = vsel %vm1683, %v2598, 0
      %v2612 = vsel %vm1683, %v2599, 0
      %v2615 = vsel %vm1683, %v2600, 0
      %2617 = vmatprep.subr.mxu0 0.0
      %2618 = vmatpush1.msra.mxu0 %v2593
      %2619 = vmatprep.subr.mxu0 0.0
      %2620 = vmatpush1.msra.mxu0 %v2594
      %2621 = vmatprep.subr.mxu0 0.0
      %2622 = vmatpush1.msra.mxu0 %v2595
      %2623 = vmatprep.subr.mxu0 0.0
      %2624 = vmatpush1.msra.mxu0 %v2596
      %2625 = vmatprep.subr.mxu0 0.0
      %2626 = vmatpush1.msra.mxu0 0.0
      %2627 = vmatprep.subr.mxu0 0.0
      %2628 = vmatpush1.msra.mxu0 0.0
      %2629 = vmatprep.subr.mxu0 0.0
      %2630 = vmatpush1.msra.mxu0 0.0
      %2631 = vmatprep.subr.mxu0 0.0
      %2632 = vmatpush1.msra.mxu0 0.0
      %2633 = vmatprep.subr.mxu0 0.0
      %2634 = vmatpush1.msra.mxu0 0.0
      %2635 = vmatprep.subr.mxu0 0.0
      %2636 = vmatpush1.msra.mxu0 0.0
      %2637 = vmatprep.subr.mxu0 0.0
      %2638 = vmatpush1.msra.mxu0 0.0
      %2639 = vmatprep.subr.mxu0 0.0
      %2640 = vmatpush1.msra.mxu0 0.0
      %2641 = vmatprep.subr.mxu0 0.0
      %2642 = vmatpush1.msra.mxu0 0.0
      %2643 = vmatprep.subr.mxu0 0.0
      %2644 = vmatpush1.msra.mxu0 0.0
      %2645 = vmatprep.subr.mxu0 0.0
      %2646 = vmatpush1.msra.mxu0 0.0
      %2647 = vmatprep.subr.mxu0 0.0
      %2648 = vmatpush1.msra.mxu0 0.0
      %2649 = vmatprep.subr.mxu0 0.0
      %2650 = vmatpush1.msra.mxu0 0.0
      %2651 = vmatprep.subr.mxu0 0.0
      %2652 = vmatpush1.msra.mxu0 0.0
      %2653 = vmatprep.subr.mxu0 0.0
      %2654 = vmatpush1.msra.mxu0 0.0
      %2655 = vmatprep.subr.mxu0 0.0
      %2656 = vmatpush1.msra.mxu0 0.0
      %2657 = vmatprep.subr.mxu0 0.0
      %2658 = vmatpush1.msra.mxu0 0.0
      %2659 = vmatprep.subr.mxu0 0.0
      %2660 = vmatpush1.msra.mxu0 0.0
      %2661 = vmatprep.subr.mxu0 0.0
      %2662 = vmatpush1.msra.mxu0 0.0
      %2663 = vmatprep.subr.mxu0 0.0
      %2664 = vmatpush1.msra.mxu0 0.0
      %2665 = vmatprep.subr.mxu0 0.0
      %2666 = vmatpush1.msra.mxu0 0.0
      %2667 = vmatprep.subr.mxu0 0.0
      %2668 = vmatpush1.msra.mxu0 0.0
      %2669 = vmatprep.subr.mxu0 0.0
      %2670 = vmatpush1.msra.mxu0 0.0
      %2671 = vmatprep.subr.mxu0 0.0
      %2672 = vmatpush1.msra.mxu0 0.0
      %2673 = vmatprep.subr.mxu0 0.0
      %2674 = vmatpush1.msra.mxu0 0.0
      %2675 = vmatprep.subr.mxu0 0.0
      %2676 = vmatpush1.msra.mxu0 0.0
      %2677 = vmatprep.subr.mxu0 0.0
      %2678 = vmatpush1.msra.mxu0 0.0
      %2679 = vmatprep.subr.mxu0 0.0
      %2680 = vmatpush1.msra.mxu0 0.0
      %2681 = vmatprep.mubr.f32.mxu0 0.0
      %2682 = vmatmul.mubr.f32.gmra.mrb[0].mxu0 %v2606
      %v2683 = vpop.f32.mrb[0].mxu0
      %v2684 = vadd.f32 %v2601, %v2683
      %v2685 = vpop.f32.mrb[0].mxu0
      %2686 = vmatprep.mubr.f32.mxu0 0.0
      %2687 = vmatmul.mubr.f32.gmra.mrb[0].mxu0 %v2609
      %v2688 = vpop.f32.mrb[0].mxu0
      %v2689 = vadd.f32 %v2602, %v2688
      %v2690 = vpop.f32.mrb[0].mxu0
      %2691 = vmatprep.mubr.f32.mxu0 0.0
      %2692 = vmatmul.mubr.f32.gmra.mrb[0].mxu0 %v2612
      %v2693 = vpop.f32.mrb[0].mxu0
      %v2694 = vadd.f32 %v2603, %v2693
      %v2695 = vpop.f32.mrb[0].mxu0
      %2696 = vmatprep.mubr.f32.mxu0 0.0
      %2697 = vmatmul.mubr.f32.gmra.mrb[0].mxu0 %v2615
      %v2698 = vpop.f32.mrb[0].mxu0
      %v2699 = vadd.f32 %v2604, %v2698
      %v2700 = vpop.f32.mrb[0].mxu0
      %2701 = vdwg.mxu0
      %v2702 = vxor.u32 %v2684, 2147483648
      %v2703 = vxor.u32 %v2689, 2147483648
      %v2704 = vxor.u32 %v2694, 2147483648
      %v2705 = vxor.u32 %v2699, 2147483648
      %v2706 = vmul.f32 %v2702, 1.442695
      %v2707 = vpow.pop %v2706
      %v2708 = vmul.f32 %v2703, 1.442695
      %v2709 = vpow.pop %v2708
      %v2710 = vmul.f32 %v2704, 1.442695
      %v2711 = vpow.pop %v2710
      %v2712 = vmul.f32 %v2705, 1.442695
      %v2713 = vpow.pop %v2712
      %v2714 = vadd.f32 %v2707, 1.0
      %v2715 = vadd.f32 %v2709, 1.0
      %v2716 = vadd.f32 %v2711, 1.0
      %v2717 = vadd.f32 %v2713, 1.0
      %v2718 = vrcp.pop %v2714
      %v2719 = vmul.f32 1.0, %v2718
      %v2720 = vrcp.pop %v2715
      %v2721 = vmul.f32 1.0, %v2720
      %v2722 = vrcp.pop %v2716
      %v2723 = vmul.f32 1.0, %v2722
      %v2724 = vrcp.pop %v2717
      %v2725 = vmul.f32 1.0, %v2724
      %2727 = vset.pattern.permute.xlu0 0
      %2728 = vperm.xlu0 %2727, %v2719
      %v2729 = vpop.permute.xlu0 %2728
      %2732 = vset.pattern.permute.xlu0 0
      %2733 = vperm.xlu0 %2732, %v2721
      %v2734 = vpop.permute.xlu0 %2733
      %2737 = vset.pattern.permute.xlu0 0
      %2738 = vperm.xlu0 %2737, %v2723
      %v2739 = vpop.permute.xlu0 %2738
      %2742 = vset.pattern.permute.xlu0 0
      %2743 = vperm.xlu0 %2742, %v2725
      %v2744 = vpop.permute.xlu0 %2743
      %v2746 = vmul.f32 %v2729, %v2342
      %v2747 = vmul.f32 %v2729, %v2343
      %v2748 = vmul.f32 %v2734, %v2344
      %v2749 = vmul.f32 %v2734, %v2345
      %v2750 = vmul.f32 %v2739, %v2346
      %v2751 = vmul.f32 %v2739, %v2347
      %v2752 = vmul.f32 %v2744, %v2348
      %v2753 = vmul.f32 %v2744, %v2349
      %v2754 = vadd.f32 %v1002, %v2746
      %v2755 = vadd.f32 %v1003, %v2747
      %v2756 = vadd.f32 %v1004, %v2748
      %v2757 = vadd.f32 %v1005, %v2749
      %v2758 = vadd.f32 %v1006, %v2750
      %v2759 = vadd.f32 %v1007, %v2751
      %v2760 = vadd.f32 %v1008, %v2752
      %v2761 = vadd.f32 %v1009, %v2753
      %v2762 = vld [vmem:[%s39] sm:$0xf]
      %v2763 = vld [vmem:[%s39 + $0x4] sm:$0xf]
      %v2764 = vld [vmem:[%s39 + $0x8] sm:$0xf]
      %v2765 = vld [vmem:[%s39 + $0xc] sm:$0xf]
      %v2766 = vpack.c.bf16 %v2756, %v2754
      %v2767 = vpack.c.bf16 %v2757, %v2755
      %v2768 = vpack.c.bf16 %v2760, %v2758
      %v2769 = vpack.c.bf16 %v2761, %v2759
      %v2770 = vld [vmem:[%s41] sm:$0xff]
      %v2771 = vld [vmem:[%s41 + $0x8] sm:$0xff]
      %v2772 = vld [vmem:[%s41 + $0x10] sm:$0xff]
      %v2773 = vld [vmem:[%s41 + $0x18] sm:$0xff]
      %2775 = vset.pattern.permute.xlu0 0
      %2776 = vperm.xlu0 %2775, %v2770
      %v2777 = vpop.permute.xlu0 %2776
      %2780 = vset.pattern.permute.xlu0 0
      %2781 = vperm.xlu0 %2780, %v2771
      %v2782 = vpop.permute.xlu0 %2781
      %2785 = vset.pattern.permute.xlu0 0
      %2786 = vperm.xlu0 %2785, %v2772
      %v2787 = vpop.permute.xlu0 %2786
      %2790 = vset.pattern.permute.xlu0 0
      %2791 = vperm.xlu0 %2790, %v2773
      %v2792 = vpop.permute.xlu0 %2791
      %v2798 = vunpack.c.l.b16 %v2762
      %v2799 = vunpack.c.l.b16 %v2763
      %v2800 = vunpack.c.l.b16 %v2764
      %v2801 = vunpack.c.l.b16 %v2765
      %v2802 = vpack.c.b16 %v2799, %v2798
      %v2803 = vpack.c.b16 %v2801, %v2800
      %v2805 = vsel %vm1683, %v2802, 0
      %v2808 = vsel %vm1683, %v2803, 0
      %2810 = vmatprep.subr.bf16.mxu0 %v2767
      %2811 = vmatpush1.bf16.msra.mxu0 %v2766
      %2812 = vmatprep.subr.bf16.mxu0 %v2769
      %2813 = vmatpush1.bf16.msra.mxu0 %v2768
      %2814 = vmatprep.subr.bf16.mxu0 0
      %2815 = vmatpush1.bf16.msra.mxu0 0
      %2816 = vmatprep.subr.bf16.mxu0 0
      %2817 = vmatpush1.bf16.msra.mxu0 0
      %2818 = vmatprep.subr.bf16.mxu0 0
      %2819 = vmatpush1.bf16.msra.mxu0 0
      %2820 = vmatprep.subr.bf16.mxu0 0
      %2821 = vmatpush1.bf16.msra.mxu0 0
      %2822 = vmatprep.subr.bf16.mxu0 0
      %2823 = vmatpush1.bf16.msra.mxu0 0
      %2824 = vmatprep.subr.bf16.mxu0 0
      %2825 = vmatpush1.bf16.msra.mxu0 0
      %2826 = vmatprep.subr.bf16.mxu0 0
      %2827 = vmatpush1.bf16.msra.mxu0 0
      %2828 = vmatprep.subr.bf16.mxu0 0
      %2829 = vmatpush1.bf16.msra.mxu0 0
      %2830 = vmatprep.subr.bf16.mxu0 0
      %2831 = vmatpush1.bf16.msra.mxu0 0
      %2832 = vmatprep.subr.bf16.mxu0 0
      %2833 = vmatpush1.bf16.msra.mxu0 0
      %2834 = vmatprep.subr.bf16.mxu0 0
      %2835 = vmatpush1.bf16.msra.mxu0 0
      %2836 = vmatprep.subr.bf16.mxu0 0
      %2837 = vmatpush1.bf16.msra.mxu0 0
      %2838 = vmatprep.subr.bf16.mxu0 0
      %2839 = vmatpush1.bf16.msra.mxu0 0
      %2840 = vmatprep.subr.bf16.mxu0 0
      %2841 = vmatpush1.bf16.msra.mxu0 0
      %2842 = vmatprep.mubr.bf16.mxu0 0
      %2843 = vmatmul.mubr.bf16.gmra.mrb[0].mxu0 %v2805
      %v2844 = vpop.f32.mrb[0].mxu0
      %v2845 = vadd.f32 %v2777, %v2844
      %v2846 = vpop.f32.mrb[0].mxu0
      %v2847 = vadd.f32 %v2777, %v2846
      %v2848 = vpop.f32.mrb[0].mxu0
      %v2849 = vadd.f32 %v2782, %v2848
      %v2850 = vpop.f32.mrb[0].mxu0
      %v2851 = vadd.f32 %v2782, %v2850
      %2852 = vmatprep.mubr.bf16.mxu0 0
      %2853 = vmatmul.mubr.bf16.gmra.mrb[0].mxu0 %v2808
      %v2854 = vpop.f32.mrb[0].mxu0
      %v2855 = vadd.f32 %v2787, %v2854
      %v2856 = vpop.f32.mrb[0].mxu0
      %v2857 = vadd.f32 %v2787, %v2856
      %v2858 = vpop.f32.mrb[0].mxu0
      %v2859 = vadd.f32 %v2792, %v2858
      %v2860 = vpop.f32.mrb[0].mxu0
      %v2861 = vadd.f32 %v2792, %v2860
      %2862 = vdwg.mxu0
      %2863 = vrot.lane.b32.xlu0 %v2845, 17
      %v2864 = vpop.permute.xlu0 %2863
      %2865 = vrot.lane.b32.xlu0 %v2849, 17
      %v2866 = vpop.permute.xlu0 %2865
      %2867 = vrot.lane.b32.xlu0 %v2855, 17
      %v2868 = vpop.permute.xlu0 %2867
      %2869 = vrot.lane.b32.xlu0 %v2859, 17
      %v2870 = vpop.permute.xlu0 %2869
      %2871 = vrot.lane.b32.xlu0 %v2847, 17
      %v2872 = vpop.permute.xlu0 %2871
      %2873 = vrot.lane.b32.xlu0 %v2851, 17
      %v2874 = vpop.permute.xlu0 %2873
      %2875 = vrot.lane.b32.xlu0 %v2857, 17
      %v2876 = vpop.permute.xlu0 %2875
      %2877 = vrot.lane.b32.xlu0 %v2861, 17
      %v2878 = vpop.permute.xlu0 %2877
      %v2879 = vsel %vm1297, %v2864, %v2872
      %v2880 = vsel %vm1297, %v2866, %v2874
      %v2881 = vsel %vm1297, %v2868, %v2876
      %v2882 = vsel %vm1297, %v2870, %v2878
      %v2883 = vsel %vm1297, %v2872, %v2864
      %v2884 = vsel %vm1297, %v2874, %v2866
      %v2885 = vsel %vm1297, %v2876, %v2868
      %v2886 = vsel %vm1297, %v2878, %v2870
      %v2887 = vmul.f32 %v2883, %v1309
      %v2888 = vmul.f32 %v2879, %v1313
      %v2889 = vmul.f32 %v2884, %v1309
      %v2890 = vmul.f32 %v2880, %v1313
      %v2891 = vmul.f32 %v2885, %v1309
      %v2892 = vmul.f32 %v2881, %v1313
      %v2893 = vmul.f32 %v2886, %v1309
      %v2894 = vmul.f32 %v2882, %v1313
      %v2895 = vpack.c.bf16 %v2889, %v2887
      %v2896 = vpack.c.bf16 %v2890, %v2888
      %v2897 = vpack.c.bf16 %v2893, %v2891
      %v2898 = vpack.c.bf16 %v2894, %v2892
      %2899 = vrot.lane.b32.xlu0 %v2845, 16
      %v2900 = vpop.permute.xlu0 %2899
      %2901 = vrot.lane.b32.xlu0 %v2849, 16
      %v2902 = vpop.permute.xlu0 %2901
      %2903 = vrot.lane.b32.xlu0 %v2855, 16
      %v2904 = vpop.permute.xlu0 %2903
      %2905 = vrot.lane.b32.xlu0 %v2859, 16
      %v2906 = vpop.permute.xlu0 %2905
      %2907 = vrot.lane.b32.xlu0 %v2847, 16
      %v2908 = vpop.permute.xlu0 %2907
      %2909 = vrot.lane.b32.xlu0 %v2851, 16
      %v2910 = vpop.permute.xlu0 %2909
      %2911 = vrot.lane.b32.xlu0 %v2857, 16
      %v2912 = vpop.permute.xlu0 %2911
      %2913 = vrot.lane.b32.xlu0 %v2861, 16
      %v2914 = vpop.permute.xlu0 %2913
      %v2915 = vsel %vm1342, %v2900, %v2908
      %v2916 = vsel %vm1342, %v2902, %v2910
      %v2917 = vsel %vm1342, %v2904, %v2912
      %v2918 = vsel %vm1342, %v2906, %v2914
      %v2919 = vsel %vm1342, %v2908, %v2900
      %v2920 = vsel %vm1342, %v2910, %v2902
      %v2921 = vsel %vm1342, %v2912, %v2904
      %v2922 = vsel %vm1342, %v2914, %v2906
      %v2923 = vmul.f32 %v2919, %v1354
      %v2924 = vmul.f32 %v2915, %v1358
      %v2925 = vmul.f32 %v2920, %v1354
      %v2926 = vmul.f32 %v2916, %v1358
      %v2927 = vmul.f32 %v2921, %v1354
      %v2928 = vmul.f32 %v2917, %v1358
      %v2929 = vmul.f32 %v2922, %v1354
      %v2930 = vmul.f32 %v2918, %v1358
      %v2931 = vpack.c.bf16 %v2925, %v2923
      %v2932 = vpack.c.bf16 %v2926, %v2924
      %v2933 = vpack.c.bf16 %v2929, %v2927
      %v2934 = vpack.c.bf16 %v2930, %v2928
      %2935 = vrot.lane.b32.xlu0 %v2845, 15
      %v2936 = vpop.permute.xlu0 %2935
      %2937 = vrot.lane.b32.xlu0 %v2849, 15
      %v2938 = vpop.permute.xlu0 %2937
      %2939 = vrot.lane.b32.xlu0 %v2855, 15
      %v2940 = vpop.permute.xlu0 %2939
      %2941 = vrot.lane.b32.xlu0 %v2859, 15
      %v2942 = vpop.permute.xlu0 %2941
      %2943 = vrot.lane.b32.xlu0 %v2847, 15
      %v2944 = vpop.permute.xlu0 %2943
      %2945 = vrot.lane.b32.xlu0 %v2851, 15
      %v2946 = vpop.permute.xlu0 %2945
      %2947 = vrot.lane.b32.xlu0 %v2857, 15
      %v2948 = vpop.permute.xlu0 %2947
      %2949 = vrot.lane.b32.xlu0 %v2861, 15
      %v2950 = vpop.permute.xlu0 %2949
      %v2951 = vsel %vm1387, %v2936, %v2944
      %v2952 = vsel %vm1387, %v2938, %v2946
      %v2953 = vsel %vm1387, %v2940, %v2948
      %v2954 = vsel %vm1387, %v2942, %v2950
      %v2955 = vsel %vm1387, %v2944, %v2936
      %v2956 = vsel %vm1387, %v2946, %v2938
      %v2957 = vsel %vm1387, %v2948, %v2940
      %v2958 = vsel %vm1387, %v2950, %v2942
      %v2959 = vmul.f32 %v2955, %v1399
      %v2960 = vmul.f32 %v2951, %v1403
      %v2961 = vmul.f32 %v2956, %v1399
      %v2962 = vmul.f32 %v2952, %v1403
      %v2963 = vmul.f32 %v2957, %v1399
      %v2964 = vmul.f32 %v2953, %v1403
      %v2965 = vmul.f32 %v2958, %v1399
      %v2966 = vmul.f32 %v2954, %v1403
      %v2967 = vpack.c.bf16 %v2961, %v2959
      %v2968 = vpack.c.bf16 %v2962, %v2960
      %v2969 = vpack.c.bf16 %v2965, %v2963
      %v2970 = vpack.c.bf16 %v2966, %v2964
      %2971 = vrot.lane.b32.xlu0 %v2845, 1
      %v2972 = vpop.permute.xlu0 %2971
      %2973 = vrot.lane.b32.xlu0 %v2849, 1
      %v2974 = vpop.permute.xlu0 %2973
      %2975 = vrot.lane.b32.xlu0 %v2855, 1
      %v2976 = vpop.permute.xlu0 %2975
      %2977 = vrot.lane.b32.xlu0 %v2859, 1
      %v2978 = vpop.permute.xlu0 %2977
      %2979 = vrot.lane.b32.xlu0 %v2847, 1
      %v2980 = vpop.permute.xlu0 %2979
      %2981 = vrot.lane.b32.xlu0 %v2851, 1
      %v2982 = vpop.permute.xlu0 %2981
      %2983 = vrot.lane.b32.xlu0 %v2857, 1
      %v2984 = vpop.permute.xlu0 %2983
      %2985 = vrot.lane.b32.xlu0 %v2861, 1
      %v2986 = vpop.permute.xlu0 %2985
      %v2987 = vsel %vm1432, %v2972, %v2980
      %v2988 = vsel %vm1432, %v2974, %v2982
      %v2989 = vsel %vm1432, %v2976, %v2984
      %v2990 = vsel %vm1432, %v2978, %v2986
      %v2991 = vsel %vm1432, %v2980, %v2972
      %v2992 = vsel %vm1432, %v2982, %v2974
      %v2993 = vsel %vm1432, %v2984, %v2976
      %v2994 = vsel %vm1432, %v2986, %v2978
      %v2995 = vmul.f32 %v2991, %v1444
      %v2996 = vmul.f32 %v2987, %v1448
      %v2997 = vmul.f32 %v2992, %v1444
      %v2998 = vmul.f32 %v2988, %v1448
      %v2999 = vmul.f32 %v2993, %v1444
      %v3000 = vmul.f32 %v2989, %v1448
      %v3001 = vmul.f32 %v2994, %v1444
      %v3002 = vmul.f32 %v2990, %v1448
      %v3003 = vpack.c.bf16 %v2997, %v2995
      %v3004 = vpack.c.bf16 %v2998, %v2996
      %v3005 = vpack.c.bf16 %v3001, %v2999
      %v3006 = vpack.c.bf16 %v3002, %v3000
      %v3007 = vpack.c.bf16 %v2849, %v2845
      %v3008 = vpack.c.bf16 %v2851, %v2847
      %v3009 = vpack.c.bf16 %v2859, %v2855
      %v3010 = vpack.c.bf16 %v2861, %v2857
      %3011 = vrot.lane.b32.xlu0 %v2845, 127
      %v3012 = vpop.permute.xlu0 %3011
      %3013 = vrot.lane.b32.xlu0 %v2849, 127
      %v3014 = vpop.permute.xlu0 %3013
      %3015 = vrot.lane.b32.xlu0 %v2855, 127
      %v3016 = vpop.permute.xlu0 %3015
      %3017 = vrot.lane.b32.xlu0 %v2859, 127
      %v3018 = vpop.permute.xlu0 %3017
      %3019 = vrot.lane.b32.xlu0 %v2847, 127
      %v3020 = vpop.permute.xlu0 %3019
      %3021 = vrot.lane.b32.xlu0 %v2851, 127
      %v3022 = vpop.permute.xlu0 %3021
      %3023 = vrot.lane.b32.xlu0 %v2857, 127
      %v3024 = vpop.permute.xlu0 %3023
      %3025 = vrot.lane.b32.xlu0 %v2861, 127
      %v3026 = vpop.permute.xlu0 %3025
      %v3027 = vsel %vm1481, %v3012, %v3020
      %v3028 = vsel %vm1481, %v3014, %v3022
      %v3029 = vsel %vm1481, %v3016, %v3024
      %v3030 = vsel %vm1481, %v3018, %v3026
      %v3031 = vsel %vm1481, %v3020, %v3012
      %v3032 = vsel %vm1481, %v3022, %v3014
      %v3033 = vsel %vm1481, %v3024, %v3016
      %v3034 = vsel %vm1481, %v3026, %v3018
      %v3035 = vmul.f32 %v3027, %v1493
      %v3036 = vmul.f32 %v3031, %v1497
      %v3037 = vmul.f32 %v3028, %v1493
      %v3038 = vmul.f32 %v3032, %v1497
      %v3039 = vmul.f32 %v3029, %v1493
      %v3040 = vmul.f32 %v3033, %v1497
      %v3041 = vmul.f32 %v3030, %v1493
      %v3042 = vmul.f32 %v3034, %v1497
      %v3043 = vpack.c.bf16 %v3037, %v3035
      %v3044 = vpack.c.bf16 %v3038, %v3036
      %v3045 = vpack.c.bf16 %v3041, %v3039
      %v3046 = vpack.c.bf16 %v3042, %v3040
      %3047 = vrot.lane.b32.xlu0 %v2845, 113
      %v3048 = vpop.permute.xlu0 %3047
      %3049 = vrot.lane.b32.xlu0 %v2849, 113
      %v3050 = vpop.permute.xlu0 %3049
      %3051 = vrot.lane.b32.xlu0 %v2855, 113
      %v3052 = vpop.permute.xlu0 %3051
      %3053 = vrot.lane.b32.xlu0 %v2859, 113
      %v3054 = vpop.permute.xlu0 %3053
      %3055 = vrot.lane.b32.xlu0 %v2847, 113
      %v3056 = vpop.permute.xlu0 %3055
      %3057 = vrot.lane.b32.xlu0 %v2851, 113
      %v3058 = vpop.permute.xlu0 %3057
      %3059 = vrot.lane.b32.xlu0 %v2857, 113
      %v3060 = vpop.permute.xlu0 %3059
      %3061 = vrot.lane.b32.xlu0 %v2861, 113
      %v3062 = vpop.permute.xlu0 %3061
      %v3063 = vsel %vm1526, %v3048, %v3056
      %v3064 = vsel %vm1526, %v3050, %v3058
      %v3065 = vsel %vm1526, %v3052, %v3060
      %v3066 = vsel %vm1526, %v3054, %v3062
      %v3067 = vsel %vm1526, %v3056, %v3048
      %v3068 = vsel %vm1526, %v3058, %v3050
      %v3069 = vsel %vm1526, %v3060, %v3052
      %v3070 = vsel %vm1526, %v3062, %v3054
      %v3071 = vmul.f32 %v3063, %v1538
      %v3072 = vmul.f32 %v3067, %v1542
      %v3073 = vmul.f32 %v3064, %v1538
      %v3074 = vmul.f32 %v3068, %v1542
      %v3075 = vmul.f32 %v3065, %v1538
      %v3076 = vmul.f32 %v3069, %v1542
      %v3077 = vmul.f32 %v3066, %v1538
      %v3078 = vmul.f32 %v3070, %v1542
      %v3079 = vpack.c.bf16 %v3073, %v3071
      %v3080 = vpack.c.bf16 %v3074, %v3072
      %v3081 = vpack.c.bf16 %v3077, %v3075
      %v3082 = vpack.c.bf16 %v3078, %v3076
      %3083 = vrot.lane.b32.xlu0 %v2845, 112
      %v3084 = vpop.permute.xlu0 %3083
      %3085 = vrot.lane.b32.xlu0 %v2849, 112
      %v3086 = vpop.permute.xlu0 %3085
      %3087 = vrot.lane.b32.xlu0 %v2855, 112
      %v3088 = vpop.permute.xlu0 %3087
      %3089 = vrot.lane.b32.xlu0 %v2859, 112
      %v3090 = vpop.permute.xlu0 %3089
      %3091 = vrot.lane.b32.xlu0 %v2847, 112
      %v3092 = vpop.permute.xlu0 %3091
      %3093 = vrot.lane.b32.xlu0 %v2851, 112
      %v3094 = vpop.permute.xlu0 %3093
      %3095 = vrot.lane.b32.xlu0 %v2857, 112
      %v3096 = vpop.permute.xlu0 %3095
      %3097 = vrot.lane.b32.xlu0 %v2861, 112
      %v3098 = vpop.permute.xlu0 %3097
      %v3099 = vsel %vm1571, %v3084, %v3092
      %v3100 = vsel %vm1571, %v3086, %v3094
      %v3101 = vsel %vm1571, %v3088, %v3096
      %v3102 = vsel %vm1571, %v3090, %v3098
      %v3103 = vsel %vm1571, %v3092, %v3084
      %v3104 = vsel %vm1571, %v3094, %v3086
      %v3105 = vsel %vm1571, %v3096, %v3088
      %v3106 = vsel %vm1571, %v3098, %v3090
      %v3107 = vmul.f32 %v3099, %v1583
      %v3108 = vmul.f32 %v3103, %v1587
      %v3109 = vmul.f32 %v3100, %v1583
      %v3110 = vmul.f32 %v3104, %v1587
      %v3111 = vmul.f32 %v3101, %v1583
      %v3112 = vmul.f32 %v3105, %v1587
      %v3113 = vmul.f32 %v3102, %v1583
      %v3114 = vmul.f32 %v3106, %v1587
      %v3115 = vpack.c.bf16 %v3109, %v3107
      %v3116 = vpack.c.bf16 %v3110, %v3108
      %v3117 = vpack.c.bf16 %v3113, %v3111
      %v3118 = vpack.c.bf16 %v3114, %v3112
      %3119 = vrot.lane.b32.xlu0 %v2845, 111
      %v3120 = vpop.permute.xlu0 %3119
      %3121 = vrot.lane.b32.xlu0 %v2849, 111
      %v3122 = vpop.permute.xlu0 %3121
      %3123 = vrot.lane.b32.xlu0 %v2855, 111
      %v3124 = vpop.permute.xlu0 %3123
      %3125 = vrot.lane.b32.xlu0 %v2859, 111
      %v3126 = vpop.permute.xlu0 %3125
      %3127 = vrot.lane.b32.xlu0 %v2847, 111
      %v3128 = vpop.permute.xlu0 %3127
      %3129 = vrot.lane.b32.xlu0 %v2851, 111
      %v3130 = vpop.permute.xlu0 %3129
      %3131 = vrot.lane.b32.xlu0 %v2857, 111
      %v3132 = vpop.permute.xlu0 %3131
      %3133 = vrot.lane.b32.xlu0 %v2861, 111
      %v3134 = vpop.permute.xlu0 %3133
      %v3135 = vsel %vm1616, %v3120, %v3128
      %v3136 = vsel %vm1616, %v3122, %v3130
      %v3137 = vsel %vm1616, %v3124, %v3132
      %v3138 = vsel %vm1616, %v3126, %v3134
      %v3139 = vsel %vm1616, %v3128, %v3120
      %v3140 = vsel %vm1616, %v3130, %v3122
      %v3141 = vsel %vm1616, %v3132, %v3124
      %v3142 = vsel %vm1616, %v3134, %v3126
      %v3143 = vmul.f32 %v3135, %v1628
      %v3144 = vmul.f32 %v3139, %v1632
      %v3145 = vmul.f32 %v3136, %v1628
      %v3146 = vmul.f32 %v3140, %v1632
      %v3147 = vmul.f32 %v3137, %v1628
      %v3148 = vmul.f32 %v3141, %v1632
      %v3149 = vmul.f32 %v3138, %v1628
      %v3150 = vmul.f32 %v3142, %v1632
      %v3151 = vpack.c.bf16 %v3145, %v3143
      %v3152 = vpack.c.bf16 %v3146, %v3144
      %v3153 = vpack.c.bf16 %v3149, %v3147
      %v3154 = vpack.c.bf16 %v3150, %v3148
      %v3155 = vld [vmem:[%s43] sm:$0xff]
      %v3156 = vld [vmem:[%s43 + $0x8] sm:$0xf]
      %v3157 = vld [vmem:[%s43 + $0xc] sm:$0xff]
      %v3158 = vld [vmem:[%s43 + $0x14] sm:$0xf]
      %v3159 = vld [vmem:[%s43 + $0x18] sm:$0xff]
      %v3160 = vld [vmem:[%s43 + $0x20] sm:$0xf]
      %v3161 = vld [vmem:[%s43 + $0x24] sm:$0xff]
      %v3162 = vld [vmem:[%s43 + $0x2c] sm:$0xf]
      %v3171 = vunpack.c.l.b16 %v3155
      %v3172 = vunpack.c.h.b16 %v3155
      %v3173 = vunpack.c.l.b16 %v3156
      %v3174 = vunpack.c.l.b16 %v3157
      %v3175 = vunpack.c.h.b16 %v3157
      %v3176 = vunpack.c.l.b16 %v3158
      %v3177 = vunpack.c.l.b16 %v3159
      %v3178 = vunpack.c.h.b16 %v3159
      %v3179 = vunpack.c.l.b16 %v3160
      %v3180 = vunpack.c.l.b16 %v3161
      %v3181 = vunpack.c.h.b16 %v3161
      %v3182 = vunpack.c.l.b16 %v3162
      %v3183 = vpack.c.b16 %v3174, %v3171
      %v3184 = vpack.c.b16 %v3175, %v3172
      %v3185 = vpack.c.b16 %v3176, %v3173
      %v3186 = vpack.c.b16 %v3180, %v3177
      %v3187 = vpack.c.b16 %v3181, %v3178
      %v3188 = vpack.c.b16 %v3182, %v3179
      %v3194 = vsel %vm1683, %v3185, 0
      %v3197 = vsel %vm1683, %v3188, 0
      %3199 = vmatprep.subr.bf16.mxu0 %v2896
      %3200 = vmatpush1.bf16.msra.mxu0 %v2895
      %3201 = vmatprep.subr.bf16.mxu0 %v2898
      %3202 = vmatpush1.bf16.msra.mxu0 %v2897
      %3203 = vmatprep.subr.bf16.mxu0 %v2932
      %3204 = vmatpush1.bf16.msra.mxu0 %v2931
      %3205 = vmatprep.subr.bf16.mxu0 %v2934
      %3206 = vmatpush1.bf16.msra.mxu0 %v2933
      %3207 = vmatprep.subr.bf16.mxu0 %v2968
      %3208 = vmatpush1.bf16.msra.mxu0 %v2967
      %3209 = vmatprep.subr.bf16.mxu0 %v2970
      %3210 = vmatpush1.bf16.msra.mxu0 %v2969
      %3211 = vmatprep.subr.bf16.mxu0 %v3004
      %3212 = vmatpush1.bf16.msra.mxu0 %v3003
      %3213 = vmatprep.subr.bf16.mxu0 %v3006
      %3214 = vmatpush1.bf16.msra.mxu0 %v3005
      %3215 = vmatprep.subr.bf16.mxu0 %v3008
      %3216 = vmatpush1.bf16.msra.mxu0 %v3007
      %3217 = vmatprep.subr.bf16.mxu0 %v3010
      %3218 = vmatpush1.bf16.msra.mxu0 %v3009
      %3219 = vmatprep.subr.bf16.mxu0 %v3044
      %3220 = vmatpush1.bf16.msra.mxu0 %v3043
      %3221 = vmatprep.subr.bf16.mxu0 %v3046
      %3222 = vmatpush1.bf16.msra.mxu0 %v3045
      %3223 = vmatprep.subr.bf16.mxu0 %v3080
      %3224 = vmatpush1.bf16.msra.mxu0 %v3079
      %3225 = vmatprep.subr.bf16.mxu0 %v3082
      %3226 = vmatpush1.bf16.msra.mxu0 %v3081
      %3227 = vmatprep.subr.bf16.mxu0 %v3116
      %3228 = vmatpush1.bf16.msra.mxu0 %v3115
      %3229 = vmatprep.subr.bf16.mxu0 %v3118
      %3230 = vmatpush1.bf16.msra.mxu0 %v3117
      %3231 = vmatprep.mubr.bf16.mxu0 %v3184
      %3232 = vmatmul.mubr.bf16.gmra.mrb[0].mxu0 %v3183
      %v3233 = vpop.f32.mrb[0].mxu0
      %v3234 = vadd.f32 0.0, %v3233
      %v3235 = vpop.f32.mrb[0].mxu0
      %v3236 = vadd.f32 0.0, %v3235
      %v3237 = vpop.f32.mrb[0].mxu0
      %v3238 = vadd.f32 0.0, %v3237
      %v3239 = vpop.f32.mrb[0].mxu0
      %v3240 = vadd.f32 0.0, %v3239
      %3241 = vmatprep.mubr.bf16.mxu0 %v3187
      %3242 = vmatmul.mubr.bf16.gmra.mrb[0].mxu0 %v3186
      %v3243 = vpop.f32.mrb[0].mxu0
      %v3244 = vadd.f32 0.0, %v3243
      %v3245 = vpop.f32.mrb[0].mxu0
      %v3246 = vadd.f32 0.0, %v3245
      %v3247 = vpop.f32.mrb[0].mxu0
      %v3248 = vadd.f32 0.0, %v3247
      %v3249 = vpop.f32.mrb[0].mxu0
      %v3250 = vadd.f32 0.0, %v3249
      %3251 = vdwg.mxu0
      %3252 = vmatprep.subr.bf16.mxu0 %v3152
      %3253 = vmatpush1.bf16.msra.mxu0 %v3151
      %3254 = vmatprep.subr.bf16.mxu0 %v3154
      %3255 = vmatpush1.bf16.msra.mxu0 %v3153
      %3256 = vmatprep.subr.bf16.mxu0 0
      %3257 = vmatpush1.bf16.msra.mxu0 0
      %3258 = vmatprep.subr.bf16.mxu0 0
      %3259 = vmatpush1.bf16.msra.mxu0 0
      %3260 = vmatprep.subr.bf16.mxu0 0
      %3261 = vmatpush1.bf16.msra.mxu0 0
      %3262 = vmatprep.subr.bf16.mxu0 0
      %3263 = vmatpush1.bf16.msra.mxu0 0
      %3264 = vmatprep.subr.bf16.mxu0 0
      %3265 = vmatpush1.bf16.msra.mxu0 0
      %3266 = vmatprep.subr.bf16.mxu0 0
      %3267 = vmatpush1.bf16.msra.mxu0 0
      %3268 = vmatprep.subr.bf16.mxu0 0
      %3269 = vmatpush1.bf16.msra.mxu0 0
      %3270 = vmatprep.subr.bf16.mxu0 0
      %3271 = vmatpush1.bf16.msra.mxu0 0
      %3272 = vmatprep.subr.bf16.mxu0 0
      %3273 = vmatpush1.bf16.msra.mxu0 0
      %3274 = vmatprep.subr.bf16.mxu0 0
      %3275 = vmatpush1.bf16.msra.mxu0 0
      %3276 = vmatprep.subr.bf16.mxu0 0
      %3277 = vmatpush1.bf16.msra.mxu0 0
      %3278 = vmatprep.subr.bf16.mxu0 0
      %3279 = vmatpush1.bf16.msra.mxu0 0
      %3280 = vmatprep.subr.bf16.mxu0 0
      %3281 = vmatpush1.bf16.msra.mxu0 0
      %3282 = vmatprep.subr.bf16.mxu0 0
      %3283 = vmatpush1.bf16.msra.mxu0 0
      %3284 = vmatprep.mubr.bf16.mxu0 0
      %3285 = vmatmul.mubr.bf16.gmra.mrb[0].mxu0 %v3194
      %v3286 = vpop.f32.mrb[0].mxu0
      %v3287 = vadd.f32 %v3234, %v3286
      %v3288 = vpop.f32.mrb[0].mxu0
      %v3289 = vadd.f32 %v3236, %v3288
      %v3290 = vpop.f32.mrb[0].mxu0
      %v3291 = vadd.f32 %v3238, %v3290
      %v3292 = vpop.f32.mrb[0].mxu0
      %v3293 = vadd.f32 %v3240, %v3292
      %3294 = vmatprep.mubr.bf16.mxu0 0
      %3295 = vmatmul.mubr.bf16.gmra.mrb[0].mxu0 %v3197
      %v3296 = vpop.f32.mrb[0].mxu0
      %v3297 = vadd.f32 %v3244, %v3296
      %v3298 = vpop.f32.mrb[0].mxu0
      %v3299 = vadd.f32 %v3246, %v3298
      %v3300 = vpop.f32.mrb[0].mxu0
      %v3301 = vadd.f32 %v3248, %v3300
      %v3302 = vpop.f32.mrb[0].mxu0
      %v3303 = vadd.f32 %v3250, %v3302
      %3304 = vdwg.mxu0
      %v3305 = vld [vmem:[%s45] sm:$0xff]
      %v3306 = vld [vmem:[%s45 + $0x8] sm:$0xff]
      %v3307 = vld [vmem:[%s45 + $0x10] sm:$0xff]
      %v3308 = vld [vmem:[%s45 + $0x18] sm:$0xff]
      %3310 = vset.pattern.permute.xlu0 0
      %3311 = vperm.xlu0 %3310, %v3305
      %v3312 = vpop.permute.xlu0 %3311
      %3315 = vset.pattern.permute.xlu0 0
      %3316 = vperm.xlu0 %3315, %v3306
      %v3317 = vpop.permute.xlu0 %3316
      %3320 = vset.pattern.permute.xlu0 0
      %3321 = vperm.xlu0 %3320, %v3307
      %v3322 = vpop.permute.xlu0 %3321
      %3325 = vset.pattern.permute.xlu0 0
      %3326 = vperm.xlu0 %3325, %v3308
      %v3327 = vpop.permute.xlu0 %3326
      %v3329 = vmul.f32 %v3287, %v3312
      %v3330 = vmul.f32 %v3289, %v3312
      %v3331 = vmul.f32 %v3291, %v3317
      %v3332 = vmul.f32 %v3293, %v3317
      %v3333 = vmul.f32 %v3297, %v3322
      %v3334 = vmul.f32 %v3299, %v3322
      %v3335 = vmul.f32 %v3301, %v3327
      %v3336 = vmul.f32 %v3303, %v3327
      %v3337 = vld [vmem:[%s47] sm:$0xff]
      %v3338 = vld [vmem:[%s47 + $0x8] sm:$0xff]
      %v3339 = vld [vmem:[%s47 + $0x10] sm:$0xff]
      %v3340 = vld [vmem:[%s47 + $0x18] sm:$0xff]
      %3342 = vset.pattern.permute.xlu0 0
      %3343 = vperm.xlu0 %3342, %v3337
      %v3344 = vpop.permute.xlu0 %3343
      %3347 = vset.pattern.permute.xlu0 0
      %3348 = vperm.xlu0 %3347, %v3338
      %v3349 = vpop.permute.xlu0 %3348
      %3352 = vset.pattern.permute.xlu0 0
      %3353 = vperm.xlu0 %3352, %v3339
      %v3354 = vpop.permute.xlu0 %3353
      %3357 = vset.pattern.permute.xlu0 0
      %3358 = vperm.xlu0 %3357, %v3340
      %v3359 = vpop.permute.xlu0 %3358
      %v3361 = vadd.f32 %v3329, %v3344
      %v3362 = vadd.f32 %v3330, %v3344
      %v3363 = vadd.f32 %v3331, %v3349
      %v3364 = vadd.f32 %v3332, %v3349
      %v3365 = vadd.f32 %v3333, %v3354
      %v3366 = vadd.f32 %v3334, %v3354
      %v3367 = vadd.f32 %v3335, %v3359
      %v3368 = vadd.f32 %v3336, %v3359
      %v3369 = vmax.f32 %v3361, 0.0
      %v3370 = vmax.f32 %v3362, 0.0
      %v3371 = vmax.f32 %v3363, 0.0
      %v3372 = vmax.f32 %v3364, 0.0
      %v3373 = vmax.f32 %v3365, 0.0
      %v3374 = vmax.f32 %v3366, 0.0
      %v3375 = vmax.f32 %v3367, 0.0
      %v3376 = vmax.f32 %v3368, 0.0
      %3377 = vrot.lane.b32.xlu0 %v3369, 17
      %v3378 = vpop.permute.xlu0 %3377
      %3379 = vrot.lane.b32.xlu0 %v3371, 17
      %v3380 = vpop.permute.xlu0 %3379
      %3381 = vrot.lane.b32.xlu0 %v3373, 17
      %v3382 = vpop.permute.xlu0 %3381
      %3383 = vrot.lane.b32.xlu0 %v3375, 17
      %v3384 = vpop.permute.xlu0 %3383
      %3385 = vrot.lane.b32.xlu0 %v3370, 17
      %v3386 = vpop.permute.xlu0 %3385
      %3387 = vrot.lane.b32.xlu0 %v3372, 17
      %v3388 = vpop.permute.xlu0 %3387
      %3389 = vrot.lane.b32.xlu0 %v3374, 17
      %v3390 = vpop.permute.xlu0 %3389
      %3391 = vrot.lane.b32.xlu0 %v3376, 17
      %v3392 = vpop.permute.xlu0 %3391
      %v3393 = vsel %vm1297, %v3378, %v3386
      %v3394 = vsel %vm1297, %v3380, %v3388
      %v3395 = vsel %vm1297, %v3382, %v3390
      %v3396 = vsel %vm1297, %v3384, %v3392
      %v3397 = vsel %vm1297, %v3386, %v3378
      %v3398 = vsel %vm1297, %v3388, %v3380
      %v3399 = vsel %vm1297, %v3390, %v3382
      %v3400 = vsel %vm1297, %v3392, %v3384
      %v3401 = vmul.f32 %v3397, %v1309
      %v3402 = vmul.f32 %v3393, %v1313
      %v3403 = vmul.f32 %v3398, %v1309
      %v3404 = vmul.f32 %v3394, %v1313
      %v3405 = vmul.f32 %v3399, %v1309
      %v3406 = vmul.f32 %v3395, %v1313
      %v3407 = vmul.f32 %v3400, %v1309
      %v3408 = vmul.f32 %v3396, %v1313
      %v3409 = vpack.c.bf16 %v3403, %v3401
      %v3410 = vpack.c.bf16 %v3404, %v3402
      %v3411 = vpack.c.bf16 %v3407, %v3405
      %v3412 = vpack.c.bf16 %v3408, %v3406
      %3413 = vrot.lane.b32.xlu0 %v3369, 16
      %v3414 = vpop.permute.xlu0 %3413
      %3415 = vrot.lane.b32.xlu0 %v3371, 16
      %v3416 = vpop.permute.xlu0 %3415
      %3417 = vrot.lane.b32.xlu0 %v3373, 16
      %v3418 = vpop.permute.xlu0 %3417
      %3419 = vrot.lane.b32.xlu0 %v3375, 16
      %v3420 = vpop.permute.xlu0 %3419
      %3421 = vrot.lane.b32.xlu0 %v3370, 16
      %v3422 = vpop.permute.xlu0 %3421
      %3423 = vrot.lane.b32.xlu0 %v3372, 16
      %v3424 = vpop.permute.xlu0 %3423
      %3425 = vrot.lane.b32.xlu0 %v3374, 16
      %v3426 = vpop.permute.xlu0 %3425
      %3427 = vrot.lane.b32.xlu0 %v3376, 16
      %v3428 = vpop.permute.xlu0 %3427
      %v3429 = vsel %vm1342, %v3414, %v3422
      %v3430 = vsel %vm1342, %v3416, %v3424
      %v3431 = vsel %vm1342, %v3418, %v3426
      %v3432 = vsel %vm1342, %v3420, %v3428
      %v3433 = vsel %vm1342, %v3422, %v3414
      %v3434 = vsel %vm1342, %v3424, %v3416
      %v3435 = vsel %vm1342, %v3426, %v3418
      %v3436 = vsel %vm1342, %v3428, %v3420
      %v3437 = vmul.f32 %v3433, %v1354
      %v3438 = vmul.f32 %v3429, %v1358
      %v3439 = vmul.f32 %v3434, %v1354
      %v3440 = vmul.f32 %v3430, %v1358
      %v3441 = vmul.f32 %v3435, %v1354
      %v3442 = vmul.f32 %v3431, %v1358
      %v3443 = vmul.f32 %v3436, %v1354
      %v3444 = vmul.f32 %v3432, %v1358
      %v3445 = vpack.c.bf16 %v3439, %v3437
      %v3446 = vpack.c.bf16 %v3440, %v3438
      %v3447 = vpack.c.bf16 %v3443, %v3441
      %v3448 = vpack.c.bf16 %v3444, %v3442
      %3449 = vrot.lane.b32.xlu0 %v3369, 15
      %v3450 = vpop.permute.xlu0 %3449
      %3451 = vrot.lane.b32.xlu0 %v3371, 15
      %v3452 = vpop.permute.xlu0 %3451
      %3453 = vrot.lane.b32.xlu0 %v3373, 15
      %v3454 = vpop.permute.xlu0 %3453
      %3455 = vrot.lane.b32.xlu0 %v3375, 15
      %v3456 = vpop.permute.xlu0 %3455
      %3457 = vrot.lane.b32.xlu0 %v3370, 15
      %v3458 = vpop.permute.xlu0 %3457
      %3459 = vrot.lane.b32.xlu0 %v3372, 15
      %v3460 = vpop.permute.xlu0 %3459
      %3461 = vrot.lane.b32.xlu0 %v3374, 15
      %v3462 = vpop.permute.xlu0 %3461
      %3463 = vrot.lane.b32.xlu0 %v3376, 15
      %v3464 = vpop.permute.xlu0 %3463
      %v3465 = vsel %vm1387, %v3450, %v3458
      %v3466 = vsel %vm1387, %v3452, %v3460
      %v3467 = vsel %vm1387, %v3454, %v3462
      %v3468 = vsel %vm1387, %v3456, %v3464
      %v3469 = vsel %vm1387, %v3458, %v3450
      %v3470 = vsel %vm1387, %v3460, %v3452
      %v3471 = vsel %vm1387, %v3462, %v3454
      %v3472 = vsel %vm1387, %v3464, %v3456
      %v3473 = vmul.f32 %v3469, %v1399
      %v3474 = vmul.f32 %v3465, %v1403
      %v3475 = vmul.f32 %v3470, %v1399
      %v3476 = vmul.f32 %v3466, %v1403
      %v3477 = vmul.f32 %v3471, %v1399
      %v3478 = vmul.f32 %v3467, %v1403
      %v3479 = vmul.f32 %v3472, %v1399
      %v3480 = vmul.f32 %v3468, %v1403
      %v3481 = vpack.c.bf16 %v3475, %v3473
      %v3482 = vpack.c.bf16 %v3476, %v3474
      %v3483 = vpack.c.bf16 %v3479, %v3477
      %v3484 = vpack.c.bf16 %v3480, %v3478
      %3485 = vrot.lane.b32.xlu0 %v3369, 1
      %v3486 = vpop.permute.xlu0 %3485
      %3487 = vrot.lane.b32.xlu0 %v3371, 1
      %v3488 = vpop.permute.xlu0 %3487
      %3489 = vrot.lane.b32.xlu0 %v3373, 1
      %v3490 = vpop.permute.xlu0 %3489
      %3491 = vrot.lane.b32.xlu0 %v3375, 1
      %v3492 = vpop.permute.xlu0 %3491
      %3493 = vrot.lane.b32.xlu0 %v3370, 1
      %v3494 = vpop.permute.xlu0 %3493
      %3495 = vrot.lane.b32.xlu0 %v3372, 1
      %v3496 = vpop.permute.xlu0 %3495
      %3497 = vrot.lane.b32.xlu0 %v3374, 1
      %v3498 = vpop.permute.xlu0 %3497
      %3499 = vrot.lane.b32.xlu0 %v3376, 1
      %v3500 = vpop.permute.xlu0 %3499
      %v3501 = vsel %vm1432, %v3486, %v3494
      %v3502 = vsel %vm1432, %v3488, %v3496
      %v3503 = vsel %vm1432, %v3490, %v3498
      %v3504 = vsel %vm1432, %v3492, %v3500
      %v3505 = vsel %vm1432, %v3494, %v3486
      %v3506 = vsel %vm1432, %v3496, %v3488
      %v3507 = vsel %vm1432, %v3498, %v3490
      %v3508 = vsel %vm1432, %v3500, %v3492
      %v3509 = vmul.f32 %v3505, %v1444
      %v3510 = vmul.f32 %v3501, %v1448
      %v3511 = vmul.f32 %v3506, %v1444
      %v3512 = vmul.f32 %v3502, %v1448
      %v3513 = vmul.f32 %v3507, %v1444
      %v3514 = vmul.f32 %v3503, %v1448
      %v3515 = vmul.f32 %v3508, %v1444
      %v3516 = vmul.f32 %v3504, %v1448
      %v3517 = vpack.c.bf16 %v3511, %v3509
      %v3518 = vpack.c.bf16 %v3512, %v3510
      %v3519 = vpack.c.bf16 %v3515, %v3513
      %v3520 = vpack.c.bf16 %v3516, %v3514
      %v3521 = vpack.c.bf16 %v3371, %v3369
      %v3522 = vpack.c.bf16 %v3372, %v3370
      %v3523 = vpack.c.bf16 %v3375, %v3373
      %v3524 = vpack.c.bf16 %v3376, %v3374
      %3525 = vrot.lane.b32.xlu0 %v3369, 127
      %v3526 = vpop.permute.xlu0 %3525
      %3527 = vrot.lane.b32.xlu0 %v3371, 127
      %v3528 = vpop.permute.xlu0 %3527
      %3529 = vrot.lane.b32.xlu0 %v3373, 127
      %v3530 = vpop.permute.xlu0 %3529
      %3531 = vrot.lane.b32.xlu0 %v3375, 127
      %v3532 = vpop.permute.xlu0 %3531
      %3533 = vrot.lane.b32.xlu0 %v3370, 127
      %v3534 = vpop.permute.xlu0 %3533
      %3535 = vrot.lane.b32.xlu0 %v3372, 127
      %v3536 = vpop.permute.xlu0 %3535
      %3537 = vrot.lane.b32.xlu0 %v3374, 127
      %v3538 = vpop.permute.xlu0 %3537
      %3539 = vrot.lane.b32.xlu0 %v3376, 127
      %v3540 = vpop.permute.xlu0 %3539
      %v3541 = vsel %vm1481, %v3526, %v3534
      %v3542 = vsel %vm1481, %v3528, %v3536
      %v3543 = vsel %vm1481, %v3530, %v3538
      %v3544 = vsel %vm1481, %v3532, %v3540
      %v3545 = vsel %vm1481, %v3534, %v3526
      %v3546 = vsel %vm1481, %v3536, %v3528
      %v3547 = vsel %vm1481, %v3538, %v3530
      %v3548 = vsel %vm1481, %v3540, %v3532
      %v3549 = vmul.f32 %v3541, %v1493
      %v3550 = vmul.f32 %v3545, %v1497
      %v3551 = vmul.f32 %v3542, %v1493
      %v3552 = vmul.f32 %v3546, %v1497
      %v3553 = vmul.f32 %v3543, %v1493
      %v3554 = vmul.f32 %v3547, %v1497
      %v3555 = vmul.f32 %v3544, %v1493
      %v3556 = vmul.f32 %v3548, %v1497
      %v3557 = vpack.c.bf16 %v3551, %v3549
      %v3558 = vpack.c.bf16 %v3552, %v3550
      %v3559 = vpack.c.bf16 %v3555, %v3553
      %v3560 = vpack.c.bf16 %v3556, %v3554
      %3561 = vrot.lane.b32.xlu0 %v3369, 113
      %v3562 = vpop.permute.xlu0 %3561
      %3563 = vrot.lane.b32.xlu0 %v3371, 113
      %v3564 = vpop.permute.xlu0 %3563
      %3565 = vrot.lane.b32.xlu0 %v3373, 113
      %v3566 = vpop.permute.xlu0 %3565
      %3567 = vrot.lane.b32.xlu0 %v3375, 113
      %v3568 = vpop.permute.xlu0 %3567
      %3569 = vrot.lane.b32.xlu0 %v3370, 113
      %v3570 = vpop.permute.xlu0 %3569
      %3571 = vrot.lane.b32.xlu0 %v3372, 113
      %v3572 = vpop.permute.xlu0 %3571
      %3573 = vrot.lane.b32.xlu0 %v3374, 113
      %v3574 = vpop.permute.xlu0 %3573
      %3575 = vrot.lane.b32.xlu0 %v3376, 113
      %v3576 = vpop.permute.xlu0 %3575
      %v3577 = vsel %vm1526, %v3562, %v3570
      %v3578 = vsel %vm1526, %v3564, %v3572
      %v3579 = vsel %vm1526, %v3566, %v3574
      %v3580 = vsel %vm1526, %v3568, %v3576
      %v3581 = vsel %vm1526, %v3570, %v3562
      %v3582 = vsel %vm1526, %v3572, %v3564
      %v3583 = vsel %vm1526, %v3574, %v3566
      %v3584 = vsel %vm1526, %v3576, %v3568
      %v3585 = vmul.f32 %v3577, %v1538
      %v3586 = vmul.f32 %v3581, %v1542
      %v3587 = vmul.f32 %v3578, %v1538
      %v3588 = vmul.f32 %v3582, %v1542
      %v3589 = vmul.f32 %v3579, %v1538
      %v3590 = vmul.f32 %v3583, %v1542
      %v3591 = vmul.f32 %v3580, %v1538
      %v3592 = vmul.f32 %v3584, %v1542
      %v3593 = vpack.c.bf16 %v3587, %v3585
      %v3594 = vpack.c.bf16 %v3588, %v3586
      %v3595 = vpack.c.bf16 %v3591, %v3589
      %v3596 = vpack.c.bf16 %v3592, %v3590
      %3597 = vrot.lane.b32.xlu0 %v3369, 112
      %v3598 = vpop.permute.xlu0 %3597
      %3599 = vrot.lane.b32.xlu0 %v3371, 112
      %v3600 = vpop.permute.xlu0 %3599
      %3601 = vrot.lane.b32.xlu0 %v3373, 112
      %v3602 = vpop.permute.xlu0 %3601
      %3603 = vrot.lane.b32.xlu0 %v3375, 112
      %v3604 = vpop.permute.xlu0 %3603
      %3605 = vrot.lane.b32.xlu0 %v3370, 112
      %v3606 = vpop.permute.xlu0 %3605
      %3607 = vrot.lane.b32.xlu0 %v3372, 112
      %v3608 = vpop.permute.xlu0 %3607
      %3609 = vrot.lane.b32.xlu0 %v3374, 112
      %v3610 = vpop.permute.xlu0 %3609
      %3611 = vrot.lane.b32.xlu0 %v3376, 112
      %v3612 = vpop.permute.xlu0 %3611
      %v3613 = vsel %vm1571, %v3598, %v3606
      %v3614 = vsel %vm1571, %v3600, %v3608
      %v3615 = vsel %vm1571, %v3602, %v3610
      %v3616 = vsel %vm1571, %v3604, %v3612
      %v3617 = vsel %vm1571, %v3606, %v3598
      %v3618 = vsel %vm1571, %v3608, %v3600
      %v3619 = vsel %vm1571, %v3610, %v3602
      %v3620 = vsel %vm1571, %v3612, %v3604
      %v3621 = vmul.f32 %v3613, %v1583
      %v3622 = vmul.f32 %v3617, %v1587
      %v3623 = vmul.f32 %v3614, %v1583
      %v3624 = vmul.f32 %v3618, %v1587
      %v3625 = vmul.f32 %v3615, %v1583
      %v3626 = vmul.f32 %v3619, %v1587
      %v3627 = vmul.f32 %v3616, %v1583
      %v3628 = vmul.f32 %v3620, %v1587
      %v3629 = vpack.c.bf16 %v3623, %v3621
      %v3630 = vpack.c.bf16 %v3624, %v3622
      %v3631 = vpack.c.bf16 %v3627, %v3625
      %v3632 = vpack.c.bf16 %v3628, %v3626
      %3633 = vrot.lane.b32.xlu0 %v3369, 111
      %v3634 = vpop.permute.xlu0 %3633
      %3635 = vrot.lane.b32.xlu0 %v3371, 111
      %v3636 = vpop.permute.xlu0 %3635
      %3637 = vrot.lane.b32.xlu0 %v3373, 111
      %v3638 = vpop.permute.xlu0 %3637
      %3639 = vrot.lane.b32.xlu0 %v3375, 111
      %v3640 = vpop.permute.xlu0 %3639
      %3641 = vrot.lane.b32.xlu0 %v3370, 111
      %v3642 = vpop.permute.xlu0 %3641
      %3643 = vrot.lane.b32.xlu0 %v3372, 111
      %v3644 = vpop.permute.xlu0 %3643
      %3645 = vrot.lane.b32.xlu0 %v3374, 111
      %v3646 = vpop.permute.xlu0 %3645
      %3647 = vrot.lane.b32.xlu0 %v3376, 111
      %v3648 = vpop.permute.xlu0 %3647
      %v3649 = vsel %vm1616, %v3634, %v3642
      %v3650 = vsel %vm1616, %v3636, %v3644
      %v3651 = vsel %vm1616, %v3638, %v3646
      %v3652 = vsel %vm1616, %v3640, %v3648
      %v3653 = vsel %vm1616, %v3642, %v3634
      %v3654 = vsel %vm1616, %v3644, %v3636
      %v3655 = vsel %vm1616, %v3646, %v3638
      %v3656 = vsel %vm1616, %v3648, %v3640
      %v3657 = vmul.f32 %v3649, %v1628
      %v3658 = vmul.f32 %v3653, %v1632
      %v3659 = vmul.f32 %v3650, %v1628
      %v3660 = vmul.f32 %v3654, %v1632
      %v3661 = vmul.f32 %v3651, %v1628
      %v3662 = vmul.f32 %v3655, %v1632
      %v3663 = vmul.f32 %v3652, %v1628
      %v3664 = vmul.f32 %v3656, %v1632
      %v3665 = vpack.c.bf16 %v3659, %v3657
      %v3666 = vpack.c.bf16 %v3660, %v3658
      %v3667 = vpack.c.bf16 %v3663, %v3661
      %v3668 = vpack.c.bf16 %v3664, %v3662
      %v3669 = vld [vmem:[%s49] sm:$0xff]
      %v3670 = vld [vmem:[%s49 + $0x8] sm:$0xf]
      %v3671 = vld [vmem:[%s49 + $0xc] sm:$0xff]
      %v3672 = vld [vmem:[%s49 + $0x14] sm:$0xf]
      %v3673 = vld [vmem:[%s49 + $0x18] sm:$0xff]
      %v3674 = vld [vmem:[%s49 + $0x20] sm:$0xf]
      %v3675 = vld [vmem:[%s49 + $0x24] sm:$0xff]
      %v3676 = vld [vmem:[%s49 + $0x2c] sm:$0xf]
      %v3677 = vld [vmem:[%s51] sm:$0xff]
      %v3678 = vld [vmem:[%s51 + $0x8] sm:$0xff]
      %v3679 = vld [vmem:[%s51 + $0x10] sm:$0xff]
      %v3680 = vld [vmem:[%s51 + $0x18] sm:$0xff]
      %3682 = vset.pattern.permute.xlu0 0
      %3683 = vperm.xlu0 %3682, %v3677
      %v3684 = vpop.permute.xlu0 %3683
      %3687 = vset.pattern.permute.xlu0 0
      %3688 = vperm.xlu0 %3687, %v3678
      %v3689 = vpop.permute.xlu0 %3688
      %3692 = vset.pattern.permute.xlu0 0
      %3693 = vperm.xlu0 %3692, %v3679
      %v3694 = vpop.permute.xlu0 %3693
      %3697 = vset.pattern.permute.xlu0 0
      %3698 = vperm.xlu0 %3697, %v3680
      %v3699 = vpop.permute.xlu0 %3698
      %v3709 = vunpack.c.l.b16 %v3669
      %v3710 = vunpack.c.h.b16 %v3669
      %v3711 = vunpack.c.l.b16 %v3670
      %v3712 = vunpack.c.l.b16 %v3671
      %v3713 = vunpack.c.h.b16 %v3671
      %v3714 = vunpack.c.l.b16 %v3672
      %v3715 = vunpack.c.l.b16 %v3673
      %v3716 = vunpack.c.h.b16 %v3673
      %v3717 = vunpack.c.l.b16 %v3674
      %v3718 = vunpack.c.l.b16 %v3675
      %v3719 = vunpack.c.h.b16 %v3675
      %v3720 = vunpack.c.l.b16 %v3676
      %v3721 = vpack.c.b16 %v3712, %v3709
      %v3722 = vpack.c.b16 %v3713, %v3710
      %v3723 = vpack.c.b16 %v3714, %v3711
      %v3724 = vpack.c.b16 %v3718, %v3715
      %v3725 = vpack.c.b16 %v3719, %v3716
      %v3726 = vpack.c.b16 %v3720, %v3717
      %v3732 = vsel %vm1683, %v3723, 0
      %v3735 = vsel %vm1683, %v3726, 0
      %3737 = vmatprep.subr.bf16.mxu0 %v3410
      %3738 = vmatpush1.bf16.msra.mxu0 %v3409
      %3739 = vmatprep.subr.bf16.mxu0 %v3412
      %3740 = vmatpush1.bf16.msra.mxu0 %v3411
      %3741 = vmatprep.subr.bf16.mxu0 %v3446
      %3742 = vmatpush1.bf16.msra.mxu0 %v3445
      %3743 = vmatprep.subr.bf16.mxu0 %v3448
      %3744 = vmatpush1.bf16.msra.mxu0 %v3447
      %3745 = vmatprep.subr.bf16.mxu0 %v3482
      %3746 = vmatpush1.bf16.msra.mxu0 %v3481
      %3747 = vmatprep.subr.bf16.mxu0 %v3484
      %3748 = vmatpush1.bf16.msra.mxu0 %v3483
      %3749 = vmatprep.subr.bf16.mxu0 %v3518
      %3750 = vmatpush1.bf16.msra.mxu0 %v3517
      %3751 = vmatprep.subr.bf16.mxu0 %v3520
      %3752 = vmatpush1.bf16.msra.mxu0 %v3519
      %3753 = vmatprep.subr.bf16.mxu0 %v3522
      %3754 = vmatpush1.bf16.msra.mxu0 %v3521
      %3755 = vmatprep.subr.bf16.mxu0 %v3524
      %3756 = vmatpush1.bf16.msra.mxu0 %v3523
      %3757 = vmatprep.subr.bf16.mxu0 %v3558
      %3758 = vmatpush1.bf16.msra.mxu0 %v3557
      %3759 = vmatprep.subr.bf16.mxu0 %v3560
      %3760 = vmatpush1.bf16.msra.mxu0 %v3559
      %3761 = vmatprep.subr.bf16.mxu0 %v3594
      %3762 = vmatpush1.bf16.msra.mxu0 %v3593
      %3763 = vmatprep.subr.bf16.mxu0 %v3596
      %3764 = vmatpush1.bf16.msra.mxu0 %v3595
      %3765 = vmatprep.subr.bf16.mxu0 %v3630
      %3766 = vmatpush1.bf16.msra.mxu0 %v3629
      %3767 = vmatprep.subr.bf16.mxu0 %v3632
      %3768 = vmatpush1.bf16.msra.mxu0 %v3631
      %3769 = vmatprep.mubr.bf16.mxu0 %v3722
      %3770 = vmatmul.mubr.bf16.gmra.mrb[0].mxu0 %v3721
      %v3771 = vpop.f32.mrb[0].mxu0
      %v3772 = vadd.f32 %v3684, %v3771
      %v3773 = vpop.f32.mrb[0].mxu0
      %v3774 = vadd.f32 %v3684, %v3773
      %v3775 = vpop.f32.mrb[0].mxu0
      %v3776 = vadd.f32 %v3689, %v3775
      %v3777 = vpop.f32.mrb[0].mxu0
      %v3778 = vadd.f32 %v3689, %v3777
      %3779 = vmatprep.mubr.bf16.mxu0 %v3725
      %3780 = vmatmul.mubr.bf16.gmra.mrb[0].mxu0 %v3724
      %v3781 = vpop.f32.mrb[0].mxu0
      %v3782 = vadd.f32 %v3694, %v3781
      %v3783 = vpop.f32.mrb[0].mxu0
      %v3784 = vadd.f32 %v3694, %v3783
      %v3785 = vpop.f32.mrb[0].mxu0
      %v3786 = vadd.f32 %v3699, %v3785
      %v3787 = vpop.f32.mrb[0].mxu0
      %v3788 = vadd.f32 %v3699, %v3787
      %3789 = vdwg.mxu0
      %3790 = vmatprep.subr.bf16.mxu0 %v3666
      %3791 = vmatpush1.bf16.msra.mxu0 %v3665
      %3792 = vmatprep.subr.bf16.mxu0 %v3668
      %3793 = vmatpush1.bf16.msra.mxu0 %v3667
      %3794 = vmatprep.subr.bf16.mxu0 0
      %3795 = vmatpush1.bf16.msra.mxu0 0
      %3796 = vmatprep.subr.bf16.mxu0 0
      %3797 = vmatpush1.bf16.msra.mxu0 0
      %3798 = vmatprep.subr.bf16.mxu0 0
      %3799 = vmatpush1.bf16.msra.mxu0 0
      %3800 = vmatprep.subr.bf16.mxu0 0
      %3801 = vmatpush1.bf16.msra.mxu0 0
      %3802 = vmatprep.subr.bf16.mxu0 0
      %3803 = vmatpush1.bf16.msra.mxu0 0
      %3804 = vmatprep.subr.bf16.mxu0 0
      %3805 = vmatpush1.bf16.msra.mxu0 0
      %3806 = vmatprep.subr.bf16.mxu0 0
      %3807 = vmatpush1.bf16.msra.mxu0 0
      %3808 = vmatprep.subr.bf16.mxu0 0
      %3809 = vmatpush1.bf16.msra.mxu0 0
      %3810 = vmatprep.subr.bf16.mxu0 0
      %3811 = vmatpush1.bf16.msra.mxu0 0
      %3812 = vmatprep.subr.bf16.mxu0 0
      %3813 = vmatpush1.bf16.msra.mxu0 0
      %3814 = vmatprep.subr.bf16.mxu0 0
      %3815 = vmatpush1.bf16.msra.mxu0 0
      %3816 = vmatprep.subr.bf16.mxu0 0
      %3817 = vmatpush1.bf16.msra.mxu0 0
      %3818 = vmatprep.subr.bf16.mxu0 0
      %3819 = vmatpush1.bf16.msra.mxu0 0
      %3820 = vmatprep.subr.bf16.mxu0 0
      %3821 = vmatpush1.bf16.msra.mxu0 0
      %3822 = vmatprep.mubr.bf16.mxu0 0
      %3823 = vmatmul.mubr.bf16.gmra.mrb[0].mxu0 %v3732
      %v3824 = vpop.f32.mrb[0].mxu0
      %v3825 = vadd.f32 %v3772, %v3824
      %v3826 = vpop.f32.mrb[0].mxu0
      %v3827 = vadd.f32 %v3774, %v3826
      %v3828 = vpop.f32.mrb[0].mxu0
      %v3829 = vadd.f32 %v3776, %v3828
      %v3830 = vpop.f32.mrb[0].mxu0
      %v3831 = vadd.f32 %v3778, %v3830
      %3832 = vmatprep.mubr.bf16.mxu0 0
      %3833 = vmatmul.mubr.bf16.gmra.mrb[0].mxu0 %v3735
      %v3834 = vpop.f32.mrb[0].mxu0
      %v3835 = vadd.f32 %v3782, %v3834
      %v3836 = vpop.f32.mrb[0].mxu0
      %v3837 = vadd.f32 %v3784, %v3836
      %v3838 = vpop.f32.mrb[0].mxu0
      %v3839 = vadd.f32 %v3786, %v3838
      %v3840 = vpop.f32.mrb[0].mxu0
      %v3841 = vadd.f32 %v3788, %v3840
      %3842 = vdwg.mxu0
      %v3843 = vadd.f32 %v2845, %v3825
      %v3844 = vadd.f32 %v2847, %v3827
      %v3845 = vadd.f32 %v2849, %v3829
      %v3846 = vadd.f32 %v2851, %v3831
      %v3847 = vadd.f32 %v2855, %v3835
      %v3848 = vadd.f32 %v2857, %v3837
      %v3849 = vadd.f32 %v2859, %v3839
      %v3850 = vadd.f32 %v2861, %v3841
      %v3851 = vmax.f32 %v3843, 0.0
      %v3852 = vmax.f32 %v3844, 0.0
      %v3853 = vmax.f32 %v3845, 0.0
      %v3854 = vmax.f32 %v3846, 0.0
      %v3855 = vmax.f32 %v3847, 0.0
      %v3856 = vmax.f32 %v3848, 0.0
      %v3857 = vmax.f32 %v3849, 0.0
      %v3858 = vmax.f32 %v3850, 0.0
      %v3859 = vld [vmem:[%s53] sm:$0x3]
      %v3860 = vpack.c.bf16 %v3853, %v3851
      %v3861 = vpack.c.bf16 %v3854, %v3852
      %v3862 = vpack.c.bf16 %v3857, %v3855
      %v3863 = vpack.c.bf16 %v3858, %v3856
      %v3864 = vld [vmem:[%s55] sm:$0x7]
      %3866 = vset.pattern.permute.xlu0 0
      %3867 = vperm.xlu0 %3866, %v3864
      %v3868 = vpop.permute.xlu0 %3867
      %v3871 = vsel %vm1683, %v3859, 0
      %3873 = vmatprep.subr.bf16.mxu0 %v3861
      %3874 = vmatpush1.bf16.msra.mxu0 %v3860
      %3875 = vmatprep.subr.bf16.mxu0 %v3863
      %3876 = vmatpush1.bf16.msra.mxu0 %v3862
      %3877 = vmatprep.subr.bf16.mxu0 0
      %3878 = vmatpush1.bf16.msra.mxu0 0
      %3879 = vmatprep.subr.bf16.mxu0 0
      %3880 = vmatpush1.bf16.msra.mxu0 0
      %3881 = vmatprep.subr.bf16.mxu0 0
      %3882 = vmatpush1.bf16.msra.mxu0 0
      %3883 = vmatprep.subr.bf16.mxu0 0
      %3884 = vmatpush1.bf16.msra.mxu0 0
      %3885 = vmatprep.subr.bf16.mxu0 0
      %3886 = vmatpush1.bf16.msra.mxu0 0
      %3887 = vmatprep.subr.bf16.mxu0 0
      %3888 = vmatpush1.bf16.msra.mxu0 0
      %3889 = vmatprep.subr.bf16.mxu0 0
      %3890 = vmatpush1.bf16.msra.mxu0 0
      %3891 = vmatprep.subr.bf16.mxu0 0
      %3892 = vmatpush1.bf16.msra.mxu0 0
      %3893 = vmatprep.subr.bf16.mxu0 0
      %3894 = vmatpush1.bf16.msra.mxu0 0
      %3895 = vmatprep.subr.bf16.mxu0 0
      %3896 = vmatpush1.bf16.msra.mxu0 0
      %3897 = vmatprep.subr.bf16.mxu0 0
      %3898 = vmatpush1.bf16.msra.mxu0 0
      %3899 = vmatprep.subr.bf16.mxu0 0
      %3900 = vmatpush1.bf16.msra.mxu0 0
      %3901 = vmatprep.subr.bf16.mxu0 0
      %3902 = vmatpush1.bf16.msra.mxu0 0
      %3903 = vmatprep.subr.bf16.mxu0 0
      %3904 = vmatpush1.bf16.msra.mxu0 0
      %3905 = vmatprep.mubr.bf16.mxu0 0
      %3906 = vmatmul.mubr.bf16.gmra.mrb[0].mxu0 %v3871
      %v3907 = vpop.f32.mrb[0].mxu0
      %v3908 = vadd.f32 %v3868, %v3907
      %v3909 = vpop.f32.mrb[0].mxu0
      %v3910 = vadd.f32 %v3868, %v3909
      %v3911 = vpop.f32.mrb[0].mxu0
      %v3912 = vpop.f32.mrb[0].mxu0
      %3913 = vdwg.mxu0
      %3914 = vst [vmem:[%s993] sm:$0xff] %v3851
      %3915 = vst [vmem:[%s993 + $0x8] sm:$0xff] %v3852
      %3916 = vst [vmem:[%s993 + $0x10] sm:$0xff] %v3853
      %3917 = vst [vmem:[%s993 + $0x18] sm:$0xff] %v3854
      %3918 = vst [vmem:[%s993 + $0x20] sm:$0xff] %v3855
      %3919 = vst [vmem:[%s993 + $0x28] sm:$0xff] %v3856
      %3920 = vst [vmem:[%s993 + $0x30] sm:$0xff] %v3857
      %3921 = vst [vmem:[%s993 + $0x38] sm:$0xff] %v3858
      %v3924 = vcombine.low %v3908, %v3910
      %v3926 = vunpack.c.l.s4 1966171168
      %v3927 = vunpack.c.0.s8 %v3926
      %v3928 = vlaneseq
      %v3929 = vshrl.u32 %v3928, 7
      %v3930 = vsub.s32 %v3927, %v3929
      %v3931 = vrot.slane %v3924, %v3930
      %v3933 = vunpack.c.l.s4 1966171168
      %v3934 = vunpack.c.0.s8 %v3933
      %v3935 = vlaneseq
      %v3936 = vshrl.u32 %v3935, 7
      %v3937 = vsub.s32 %v3934, %v3936
      %v3938 = vrot.slane %v3931, %v3937
      %v3940 = vlaneseq
      %vm3941 = vcmp.ge.s32.totalorder %v3940, 0
      %vm3942 = vcmp.lt.s32.totalorder %v3940, 256
      %vm3943 = vmand %vm3941, %vm3942
      %3944 = vst.msk [vmem:[%s988] sm:$0x3] %vm3943, %v3938
      %v3946 = vunpack.c.l.s4 1983009808
      %v3947 = vunpack.c.0.s8 %v3946
      %v3948 = vlaneseq
      %v3949 = vshrl.u32 %v3948, 7
      %v3950 = vsub.s32 %v3947, %v3949
      %v3951 = vrot.slane %v3924, %v3950
      %v3952 = vcombine.high %v3951, %v3951
      %vm3953 = vcmask 1040384
      %vm3954 = vcmask 1042434
      %vm3955 = vmor %vm3953, %vm3954
      %vm3956 = vcmask 1044484
      %vm3957 = vmor %vm3955, %vm3956
      %vm3958 = vcmask 1046534
      %vm3959 = vmor %vm3957, %vm3958
      %v3960 = vrot.slane %v3951, 7
      %v3961 = vrot.slane %v3960, 2
      %v3962 = vrot.slane %v3952, 7
      %v3963 = vsel %vm3959, %v3961, %v3962
      %3965 = vst [vmem:[%s984] sm:$0xf] %v3963
      %p3966 = scmp.lt.s32.totalorder %s73, 1
      %s3967 = scalar_select %p3966, %s73, 1
      %s3968 = smul.addr %s3967, 2
      %s3969 = smul.addr %s3968, 2
      %s3970 = scalar_lea.vmem %s57, %s3969
      %p3971 = scmp.lt.s32.totalorder %s73, 1
      %s3972 = scalar_select %p3971, %s73, 1
      %s3973 = smul.addr %s3972, 2
      %s3974 = scalar_lea.vmem %s59, %s3973
      %p3975 = scmp.lt.s32.totalorder %s73, 1
      %s3976 = scalar_select %p3975, %s73, 1
      %s3977 = smul.addr %s3976, 8
      %s3978 = smul.addr %s3977, 8
      %s3979 = scalar_lea.vmem %s61, %s3978
      // Predicated region
      $region133: #{dfn_forward.1} parent=131 // pred_check
        %p3980 = pneg %p694
      $region134: #{dfn_forward.1} parent=131 // pred_check_branch
        %3982 = sbr.rel (%p3980) target = $region136
      $region135: #{dfn_forward.1} parent=131 // pred_region
        _
      $region136: #{dfn_forward.1} parent=131 // pred_fallthru
        _
      // Predicated region
      $region137: #{dfn_forward.1} parent=131 // pred_check
        %p3983 = pneg %p720
      $region138: #{dfn_forward.1} parent=131 // pred_check_branch
        %3985 = sbr.rel (%p3983) target = $region140
      $region139: #{dfn_forward.1} parent=131 // pred_region
        _
      $region140: #{dfn_forward.1} parent=131 // pred_fallthru
        _
      // Predicated region
      $region141: #{dfn_forward.1} parent=131 // pred_check
        %p3986 = pneg %p746
      $region142: #{dfn_forward.1} parent=131 // pred_check_branch
        %3988 = sbr.rel (%p3986) target = $region144
      $region143: #{dfn_forward.1} parent=131 // pred_region
        _
      $region144: #{dfn_forward.1} parent=131 // pred_fallthru
        _
    $region132: #{dfn_forward.1} parent=5 // pred_fallthru
      _
    %p3989 = scmp.le.s32.totalorder 2, %s68
    // Predicated region
    $region145: #{dfn_forward.1} parent=5 // pred_check
      %p3990 = pneg %p3989
    $region146: #{dfn_forward.1} parent=5 // pred_check_branch
      %3992 = sbr.rel (%p3990) target = $region148
    $region147: #{dfn_forward.1} parent=5 // pred_region
      %s3993 = ssub.s32 %s68, 2
      // Predicated region
      $region149: #{dfn_forward.1} parent=147 // pred_check
        %p3994 = pneg %p700
      $region150: #{dfn_forward.1} parent=147 // pred_check_branch
        %3996 = sbr.rel (%p3994) target = $region152
      $region151: #{dfn_forward.1} parent=147 // pred_region
        %p3997 = scmp.lt.s32.totalorder %s74, 1
        %s3998 = scalar_select %p3997, %s74, 1
        %s3999 = smul.addr %s3998, 2
        %s4000 = smul.addr %s3999, 2
        %s4001 = scalar_lea.vmem %s57, %s4000
      $region152: #{dfn_forward.1} parent=147 // pred_fallthru
        _
      // Predicated region
      $region153: #{dfn_forward.1} parent=147 // pred_check
        %p4002 = pneg %p726
      $region154: #{dfn_forward.1} parent=147 // pred_check_branch
        %4004 = sbr.rel (%p4002) target = $region156
      $region155: #{dfn_forward.1} parent=147 // pred_region
        %p4005 = scmp.lt.s32.totalorder %s74, 1
        %s4006 = scalar_select %p4005, %s74, 1
        %s4007 = smul.addr %s4006, 2
        %s4008 = scalar_lea.vmem %s59, %s4007
      $region156: #{dfn_forward.1} parent=147 // pred_fallthru
        _
      // Predicated region
      $region157: #{dfn_forward.1} parent=147 // pred_check
        %p4009 = pneg %p752
      $region158: #{dfn_forward.1} parent=147 // pred_check_branch
        %4011 = sbr.rel (%p4009) target = $region160
      $region159: #{dfn_forward.1} parent=147 // pred_region
        %p4012 = scmp.lt.s32.totalorder %s74, 1
        %s4013 = scalar_select %p4012, %s74, 1
        %s4014 = smul.addr %s4013, 8
        %s4015 = smul.addr %s4014, 8
        %s4016 = scalar_lea.vmem %s61, %s4015
      $region160: #{dfn_forward.1} parent=147 // pred_fallthru
        _
    $region148: #{dfn_forward.1} parent=5 // pred_fallthru
      _
  $region6: #{dfn_forward.1} parent=0 // loop_footer
    %s72 = sadd.s32 1, %s68
  $region7: #{dfn_forward.1} parent=0 // loop_footer_branch
    %67 = sbr.rel target = $region3
  $region8: #{dfn_forward.1} parent=0 // loop_exit
    _

</llo_original>
